<compile_context>
chip_gen: v7x
topology: tpu7x:2x2x1
jax: 0.10.0
libtpu: 0.0.40
codegen_flags: <defaults>
</compile_context>

<pallas_src>
import functools

import jax
import jax.numpy as jnp
from jax import lax
from jax.experimental import pallas as pl
from jax.experimental.pallas import tpu as pltpu


def _round_up(v, m):
    return (v + m - 1) // m * m


def _gate_kernel(x_ref, w1_ref, b1_ref, w2_ref, b2_ref, expand_ref, mask_ref,
                 o_ref, xpad_ref, mid_ref, p1_ref, p2_ref,
                 *, H, W, Cin, Cin_p, Cmid_p, num_conds, Wp, O, L):
    # Re-zero the two small zero-framed staging buffers (see header comment).
    xpad_ref[...] = jnp.zeros_like(xpad_ref)
    mid_ref[...] = jnp.zeros_like(mid_ref)

    # ---- stage x: (Cin, H*W), row stride W -> zero-framed, row stride Wp ----
    x = x_ref[0]                                            # (Cin, H*W)
    for h in range(H):
        dst = O + (h + 3) * Wp + 3
        xpad_ref[0:Cin, dst:dst + W] = x[:, h * W:(h + 1) * W]

    # ---- conv1: 3x3, pad 1  ==  ONE matmul over an im2col patch matrix -----
    # Patch row block t = kh*3 + kw holds the tap shifted by (kh-1, kw-1).
    for kh in range(3):
        for kw in range(3):
            t = kh * 3 + kw
            s = O + (kh + 2) * Wp + (kw - 1)
            p1_ref[t * Cin_p:(t + 1) * Cin_p, :] = xpad_ref[:, s:s + L]
    acc1 = jnp.dot(w1_ref[...], p1_ref[...],
                   preferred_element_type=jnp.float32) + b1_ref[...]
    mid = acc1 * jax.nn.sigmoid(acc1)                       # SiLU, (Cmid_p, L)
    # Zero the 3-wide halo columns so conv2 sees proper zero padding, then
    # store the whole stride-Wp band with one contiguous store.
    mid_ref[:, O + 3 * Wp:O + 3 * Wp + L] = mid * mask_ref[...]

    # ---- conv2: 7x7, pad 3  ==  ONE matmul over an im2col patch matrix -----
    for kh in range(7):
        for kw in range(7):
            t = kh * 7 + kw
            s = O + kh * Wp + (kw - 3)
            p2_ref[t * Cmid_p:(t + 1) * Cmid_p, :] = mid_ref[:, s:s + L]
    acc2 = jnp.dot(w2_ref[...], p2_ref[...],
                   preferred_element_type=jnp.float32) + b2_ref[...]
    gate = jax.nn.sigmoid(acc2)                             # (nc_p, L)

    # ---- gating: expand the per-cond gate to all channels with exact 0/1
    # outer-product broadcasts, then ONE full-width VPU multiply. -------------
    gate_full = expand_ref[:, 0:1] * gate[0:1, :]           # (Cin_p, L)
    for n in range(1, num_conds):
        gate_full = gate_full + expand_ref[:, n:n + 1] * gate[n:n + 1, :]
    x_int = xpad_ref[:, O + 3 * Wp:O + 3 * Wp + L]          # (Cin_p, L)
    gated = x_int * gate_full

    # ---- un-pad the row stride (Wp -> W) while writing the dense output ----
    for h in range(H):
        src = h * Wp + 3
        o_ref[0, :, h * W:(h + 1) * W] = gated[0:Cin, src:src + W]


def gate_module_forward(x_nchw, params, *, channels, num_conds):
    """GateModule forward.  x_nchw: (B, channels*num_conds, H, W) float32."""
    B, C, H, W = x_nchw.shape
    assert C == channels * num_conds
    Cmid = channels // 2
    w1, b1, w2, b2 = params        # HWIO: (3,3,C,Cmid), (7,7,Cmid,num_conds)

    f32 = jnp.float32
    Cin_p = _round_up(C, 8)
    Cmid_p = _round_up(Cmid, 8)
    nc_p = _round_up(num_conds, 8)
    Wp = W + 6                      # padded row stride (3-halo on both sides)
    O = 8                           # flat slack at each end of the scratch
    NBUF = (H + 6) * Wp + 2 * O
    L = H * Wp                      # lane count of every per-pixel matrix

    # Weights as (out_p, kh*kw*in_p) matmul matrices; zero-pad channel dims so
    # every matmul dimension is a multiple of 8 sublanes.
    w1p = jnp.pad(w1.astype(f32),
                  ((0, 0), (0, 0), (0, Cin_p - C), (0, Cmid_p - Cmid)))
    w1m = jnp.transpose(w1p, (3, 0, 1, 2)).reshape(Cmid_p, 9 * Cin_p)
    b1m = jnp.pad(b1.astype(f32), (0, Cmid_p - Cmid)).reshape(Cmid_p, 1)
    w2p = jnp.pad(w2.astype(f32),
                  ((0, 0), (0, 0), (0, Cmid_p - Cmid), (0, nc_p - num_conds)))
    w2m = jnp.transpose(w2p, (3, 0, 1, 2)).reshape(nc_p, 49 * Cmid_p)
    b2m = jnp.pad(b2.astype(f32), (0, nc_p - num_conds)).reshape(nc_p, 1)

    # expand[c, n] = 1 iff channel c belongs to condition n (c // channels == n).
    expand = (jnp.arange(C)[:, None] // channels ==
              jnp.arange(nc_p)[None, :]).astype(f32)
    expand = jnp.pad(expand, ((0, Cin_p - C), (0, 0)))       # (Cin_p, nc_p)

    # 1 on true image columns of a stride-Wp row, 0 on the 3-wide halo columns.
    col = jnp.arange(L) % Wp
    mask = ((col >= 3) & (col < 3 + W)).astype(f32).reshape(1, L)

    x_flat = x_nchw.reshape(B, C, H * W).astype(f32)         # free reshape

    kernel = functools.partial(
        _gate_kernel, H=H, W=W, Cin=C, Cin_p=Cin_p, Cmid_p=Cmid_p,
        num_conds=num_conds, Wp=Wp, O=O, L=L)

    # TODO(synk): for large H*W / C the whole-image-per-step schedule should be
    # tiled into H row-bands with a 3-row halo (second "parallel" grid axis) to
    # stay inside v7x's 64 MiB VMEM and use both TensorCores when B == 1.
    out_flat = pl.pallas_call(
        kernel,
        out_shape=jax.ShapeDtypeStruct((B, C, H * W), f32),
        grid_spec=pltpu.PrefetchScalarGridSpec(
            num_scalar_prefetch=0,
            grid=(B,),
            in_specs=[
                pl.BlockSpec((1, C, H * W), lambda b: (b, 0, 0)),
                pl.BlockSpec((Cmid_p, 9 * Cin_p), lambda b: (0, 0)),
                pl.BlockSpec((Cmid_p, 1), lambda b: (0, 0)),
                pl.BlockSpec((nc_p, 49 * Cmid_p), lambda b: (0, 0)),
                pl.BlockSpec((nc_p, 1), lambda b: (0, 0)),
                pl.BlockSpec((Cin_p, nc_p), lambda b: (0, 0)),
                pl.BlockSpec((1, L), lambda b: (0, 0)),
            ],
            out_specs=pl.BlockSpec((1, C, H * W), lambda b: (b, 0, 0)),
            scratch_shapes=[
                pltpu.VMEM((Cin_p, NBUF), f32),       # zero-framed input
                pltpu.VMEM((Cmid_p, NBUF), f32),      # zero-framed SiLU(conv1)
                pltpu.VMEM((9 * Cin_p, L), f32),      # im2col patches, conv1
                pltpu.VMEM((49 * Cmid_p, L), f32),    # im2col patches, conv2
            ],
        ),
        compiler_params=pltpu.CompilerParams(
            dimension_semantics=("parallel",),
            vmem_limit_bytes=64 * 1024 * 1024,
        ),
    )(x_flat, w1m, b1m, w2m, b2m, expand, mask)

    return out_flat.reshape(B, C, H, W)


def _reference_forward(x_nchw, params, *, channels, num_conds):
    """Pure-JAX reference matching the PyTorch module (NCHW in/out)."""
    w1, b1, w2, b2 = params
    x = jnp.transpose(x_nchw, (0, 2, 3, 1))
    h = lax.conv_general_dilated(
        x, w1, (1, 1), 'SAME',
        dimension_numbers=('NHWC', 'HWIO', 'NHWC')) + b1
    h = h * jax.nn.sigmoid(h)                                  # SiLU
    g = lax.conv_general_dilated(
        h, w2, (1, 1), 'SAME',
        dimension_numbers=('NHWC', 'HWIO', 'NHWC')) + b2
    g = jax.nn.sigmoid(g)                                      # (B,H,W,num_conds)
    B, H, W, C = x.shape
    xr = x.reshape(B, H, W, num_conds, channels)
    out = (xr * g[..., :, None]).reshape(B, H, W, C)
    return jnp.transpose(out, (0, 3, 1, 2))


if __name__ == "__main__":
    # Small shapes consistent with GateModule(channels=8, num_conds=2):
    # input channels = channels * num_conds = 16.
    channels, num_conds = 8, 2
    B, H, W = 2, 16, 16
    C = channels * num_conds
    Cmid = channels // 2

    key = jax.random.PRNGKey(0)
    kx, kw1, kb1, kw2, kb2 = jax.random.split(key, 5)

    x = jax.random.normal(kx, (B, C, H, W), jnp.float32)
    # Deterministic synthetic parameters (HWIO layout).
    w1 = 0.1 * jax.random.normal(kw1, (3, 3, C, Cmid), jnp.float32)
    b1 = 0.1 * jax.random.normal(kb1, (Cmid,), jnp.float32)
    w2 = 0.05 * jax.random.normal(kw2, (7, 7, Cmid, num_conds), jnp.float32)
    b2 = 0.1 * jax.random.normal(kb2, (num_conds,), jnp.float32)
    params = (w1, b1, w2, b2)

    out = gate_module_forward(x, params, channels=channels,
                              num_conds=num_conds)
    out = jax.block_until_ready(out)

    ref = _reference_forward(x, params, channels=channels,
                             num_conds=num_conds)
    assert out.shape == (B, C, H, W)
    assert jnp.allclose(out, ref, atol=2e-4, rtol=2e-4), "mismatch vs reference"

    print("KERNEL_OK")
</pallas_src>

<mosaic_0001>
module attributes {stable_mosaic.version = 11 : i64} {
  func.func @_gate_kernel(%arg0: i32, %arg1: memref<1x16x256xf32, #tpu.memory_space<vmem>>, %arg2: memref<8x144xf32, #tpu.memory_space<vmem>>, %arg3: memref<8x1xf32, #tpu.memory_space<vmem>>, %arg4: memref<8x392xf32, #tpu.memory_space<vmem>>, %arg5: memref<8x1xf32, #tpu.memory_space<vmem>>, %arg6: memref<16x8xf32, #tpu.memory_space<vmem>>, %arg7: memref<1x352xf32, #tpu.memory_space<vmem>>, %arg8: memref<1x16x256xf32, #tpu.memory_space<vmem>>, %arg9: memref<16x500xf32, #tpu.memory_space<vmem>>, %arg10: memref<8x500xf32, #tpu.memory_space<vmem>>, %arg11: memref<144x352xf32, #tpu.memory_space<vmem>>, %arg12: memref<392x352xf32, #tpu.memory_space<vmem>>) attributes {dimension_semantics = [#tpu.dimension_semantics<parallel>], iteration_bounds = array<i64: 2>, scalar_prefetch = 0 : i64, scratch_operands = 4 : i64, tpu.core_type = #tpu.core_type<tc>, window_params = [{transform_indices = @transform_0, window_bounds = array<i64: 1, 16, 256>}, {pipeline_mode = #tpu.pipeline_mode<synchronous>, transform_indices = @transform_1, window_bounds = array<i64: 8, 144>}, {pipeline_mode = #tpu.pipeline_mode<synchronous>, transform_indices = @transform_2, window_bounds = array<i64: 8, 1>}, {pipeline_mode = #tpu.pipeline_mode<synchronous>, transform_indices = @transform_3, window_bounds = array<i64: 8, 392>}, {pipeline_mode = #tpu.pipeline_mode<synchronous>, transform_indices = @transform_4, window_bounds = array<i64: 8, 1>}, {pipeline_mode = #tpu.pipeline_mode<synchronous>, transform_indices = @transform_5, window_bounds = array<i64: 16, 8>}, {pipeline_mode = #tpu.pipeline_mode<synchronous>, transform_indices = @transform_6, window_bounds = array<i64: 1, 352>}, {transform_indices = @transform_7, window_bounds = array<i64: 1, 16, 256>}]} {
    %cst = arith.constant 0.000000e+00 : f32
    %0 = vector.broadcast %cst : f32 to vector<16x500xf32>
    %c0 = arith.constant 0 : index
    %c0_0 = arith.constant 0 : index
    %1 = vector.load %arg9[%c0, %c0_0] : memref<16x500xf32, #tpu.memory_space<vmem>>, vector<16x500xf32>
    tpu.vector_store %arg9[%c0, %c0_0], %0 {strides = array<i32>} : memref<16x500xf32, #tpu.memory_space<vmem>>, vector<16x500xf32>,
    %cst_1 = arith.constant 0.000000e+00 : f32
    %2 = vector.broadcast %cst_1 : f32 to vector<8x500xf32>
    %c0_2 = arith.constant 0 : index
    %c0_3 = arith.constant 0 : index
    %3 = vector.load %arg10[%c0_2, %c0_3] : memref<8x500xf32, #tpu.memory_space<vmem>>, vector<8x500xf32>
    tpu.vector_store %arg10[%c0_2, %c0_3], %2 {strides = array<i32>} : memref<8x500xf32, #tpu.memory_space<vmem>>, vector<8x500xf32>,
    %c0_4 = arith.constant 0 : index
    %c0_5 = arith.constant 0 : index
    %c0_6 = arith.constant 0 : index
    %4 = vector.load %arg1[%c0_4, %c0_5, %c0_6] : memref<1x16x256xf32, #tpu.memory_space<vmem>>, vector<1x16x256xf32>
    %5 = vector.shape_cast %4 : vector<1x16x256xf32> to vector<16x256xf32>
    %6 = vector.extract_strided_slice %5 {offsets = [0, 0], sizes = [16, 16], strides = [1, 1]} : vector<16x256xf32> to vector<16x16xf32>
    %c0_7 = arith.constant 0 : index
    %c77 = arith.constant 77 : index
    %7 = vector.load %arg9[%c0_7, %c77] : memref<16x500xf32, #tpu.memory_space<vmem>>, vector<16x16xf32>
    tpu.vector_store %arg9[%c0_7, %c77], %6 {strides = array<i32>} : memref<16x500xf32, #tpu.memory_space<vmem>>, vector<16x16xf32>,
    %8 = vector.extract_strided_slice %5 {offsets = [0, 16], sizes = [16, 16], strides = [1, 1]} : vector<16x256xf32> to vector<16x16xf32>
    %c0_8 = arith.constant 0 : index
    %c99 = arith.constant 99 : index
    %9 = vector.load %arg9[%c0_8, %c99] : memref<16x500xf32, #tpu.memory_space<vmem>>, vector<16x16xf32>
    tpu.vector_store %arg9[%c0_8, %c99], %8 {strides = array<i32>} : memref<16x500xf32, #tpu.memory_space<vmem>>, vector<16x16xf32>,
    %10 = vector.extract_strided_slice %5 {offsets = [0, 32], sizes = [16, 16], strides = [1, 1]} : vector<16x256xf32> to vector<16x16xf32>
    %c0_9 = arith.constant 0 : index
    %c121 = arith.constant 121 : index
    %11 = vector.load %arg9[%c0_9, %c121] : memref<16x500xf32, #tpu.memory_space<vmem>>, vector<16x16xf32>
    tpu.vector_store %arg9[%c0_9, %c121], %10 {strides = array<i32>} : memref<16x500xf32, #tpu.memory_space<vmem>>, vector<16x16xf32>,
    %12 = vector.extract_strided_slice %5 {offsets = [0, 48], sizes = [16, 16], strides = [1, 1]} : vector<16x256xf32> to vector<16x16xf32>
    %c0_10 = arith.constant 0 : index
    %c143 = arith.constant 143 : index
    %13 = vector.load %arg9[%c0_10, %c143] : memref<16x500xf32, #tpu.memory_space<vmem>>, vector<16x16xf32>
    tpu.vector_store %arg9[%c0_10, %c143], %12 {strides = array<i32>} : memref<16x500xf32, #tpu.memory_space<vmem>>, vector<16x16xf32>,
    %14 = vector.extract_strided_slice %5 {offsets = [0, 64], sizes = [16, 16], strides = [1, 1]} : vector<16x256xf32> to vector<16x16xf32>
    %c0_11 = arith.constant 0 : index
    %c165 = arith.constant 165 : index
    %15 = vector.load %arg9[%c0_11, %c165] : memref<16x500xf32, #tpu.memory_space<vmem>>, vector<16x16xf32>
    tpu.vector_store %arg9[%c0_11, %c165], %14 {strides = array<i32>} : memref<16x500xf32, #tpu.memory_space<vmem>>, vector<16x16xf32>,
    %16 = vector.extract_strided_slice %5 {offsets = [0, 80], sizes = [16, 16], strides = [1, 1]} : vector<16x256xf32> to vector<16x16xf32>
    %c0_12 = arith.constant 0 : index
    %c187 = arith.constant 187 : index
    %17 = vector.load %arg9[%c0_12, %c187] : memref<16x500xf32, #tpu.memory_space<vmem>>, vector<16x16xf32>
    tpu.vector_store %arg9[%c0_12, %c187], %16 {strides = array<i32>} : memref<16x500xf32, #tpu.memory_space<vmem>>, vector<16x16xf32>,
    %18 = vector.extract_strided_slice %5 {offsets = [0, 96], sizes = [16, 16], strides = [1, 1]} : vector<16x256xf32> to vector<16x16xf32>
    %c0_13 = arith.constant 0 : index
    %c209 = arith.constant 209 : index
    %19 = vector.load %arg9[%c0_13, %c209] : memref<16x500xf32, #tpu.memory_space<vmem>>, vector<16x16xf32>
    tpu.vector_store %arg9[%c0_13, %c209], %18 {strides = array<i32>} : memref<16x500xf32, #tpu.memory_space<vmem>>, vector<16x16xf32>,
    %20 = vector.extract_strided_slice %5 {offsets = [0, 112], sizes = [16, 16], strides = [1, 1]} : vector<16x256xf32> to vector<16x16xf32>
    %c0_14 = arith.constant 0 : index
    %c231 = arith.constant 231 : index
    %21 = vector.load %arg9[%c0_14, %c231] : memref<16x500xf32, #tpu.memory_space<vmem>>, vector<16x16xf32>
    tpu.vector_store %arg9[%c0_14, %c231], %20 {strides = array<i32>} : memref<16x500xf32, #tpu.memory_space<vmem>>, vector<16x16xf32>,
    %22 = vector.extract_strided_slice %5 {offsets = [0, 128], sizes = [16, 16], strides = [1, 1]} : vector<16x256xf32> to vector<16x16xf32>
    %c0_15 = arith.constant 0 : index
    %c253 = arith.constant 253 : index
    %23 = vector.load %arg9[%c0_15, %c253] : memref<16x500xf32, #tpu.memory_space<vmem>>, vector<16x16xf32>
    tpu.vector_store %arg9[%c0_15, %c253], %22 {strides = array<i32>} : memref<16x500xf32, #tpu.memory_space<vmem>>, vector<16x16xf32>,
    %24 = vector.extract_strided_slice %5 {offsets = [0, 144], sizes = [16, 16], strides = [1, 1]} : vector<16x256xf32> to vector<16x16xf32>
    %c0_16 = arith.constant 0 : index
    %c275 = arith.constant 275 : index
    %25 = vector.load %arg9[%c0_16, %c275] : memref<16x500xf32, #tpu.memory_space<vmem>>, vector<16x16xf32>
    tpu.vector_store %arg9[%c0_16, %c275], %24 {strides = array<i32>} : memref<16x500xf32, #tpu.memory_space<vmem>>, vector<16x16xf32>,
    %26 = vector.extract_strided_slice %5 {offsets = [0, 160], sizes = [16, 16], strides = [1, 1]} : vector<16x256xf32> to vector<16x16xf32>
    %c0_17 = arith.constant 0 : index
    %c297 = arith.constant 297 : index
    %27 = vector.load %arg9[%c0_17, %c297] : memref<16x500xf32, #tpu.memory_space<vmem>>, vector<16x16xf32>
    tpu.vector_store %arg9[%c0_17, %c297], %26 {strides = array<i32>} : memref<16x500xf32, #tpu.memory_space<vmem>>, vector<16x16xf32>,
    %28 = vector.extract_strided_slice %5 {offsets = [0, 176], sizes = [16, 16], strides = [1, 1]} : vector<16x256xf32> to vector<16x16xf32>
    %c0_18 = arith.constant 0 : index
    %c319 = arith.constant 319 : index
    %29 = vector.load %arg9[%c0_18, %c319] : memref<16x500xf32, #tpu.memory_space<vmem>>, vector<16x16xf32>
    tpu.vector_store %arg9[%c0_18, %c319], %28 {strides = array<i32>} : memref<16x500xf32, #tpu.memory_space<vmem>>, vector<16x16xf32>,
    %30 = vector.extract_strided_slice %5 {offsets = [0, 192], sizes = [16, 16], strides = [1, 1]} : vector<16x256xf32> to vector<16x16xf32>
    %c0_19 = arith.constant 0 : index
    %c341 = arith.constant 341 : index
    %31 = vector.load %arg9[%c0_19, %c341] : memref<16x500xf32, #tpu.memory_space<vmem>>, vector<16x16xf32>
    tpu.vector_store %arg9[%c0_19, %c341], %30 {strides = array<i32>} : memref<16x500xf32, #tpu.memory_space<vmem>>, vector<16x16xf32>,
    %32 = vector.extract_strided_slice %5 {offsets = [0, 208], sizes = [16, 16], strides = [1, 1]} : vector<16x256xf32> to vector<16x16xf32>
    %c0_20 = arith.constant 0 : index
    %c363 = arith.constant 363 : index
    %33 = vector.load %arg9[%c0_20, %c363] : memref<16x500xf32, #tpu.memory_space<vmem>>, vector<16x16xf32>
    tpu.vector_store %arg9[%c0_20, %c363], %32 {strides = array<i32>} : memref<16x500xf32, #tpu.memory_space<vmem>>, vector<16x16xf32>,
    %34 = vector.extract_strided_slice %5 {offsets = [0, 224], sizes = [16, 16], strides = [1, 1]} : vector<16x256xf32> to vector<16x16xf32>
    %c0_21 = arith.constant 0 : index
    %c385 = arith.constant 385 : index
    %35 = vector.load %arg9[%c0_21, %c385] : memref<16x500xf32, #tpu.memory_space<vmem>>, vector<16x16xf32>
    tpu.vector_store %arg9[%c0_21, %c385], %34 {strides = array<i32>} : memref<16x500xf32, #tpu.memory_space<vmem>>, vector<16x16xf32>,
    %36 = vector.extract_strided_slice %5 {offsets = [0, 240], sizes = [16, 16], strides = [1, 1]} : vector<16x256xf32> to vector<16x16xf32>
    %c0_22 = arith.constant 0 : index
    %c407 = arith.constant 407 : index
    %37 = vector.load %arg9[%c0_22, %c407] : memref<16x500xf32, #tpu.memory_space<vmem>>, vector<16x16xf32>
    tpu.vector_store %arg9[%c0_22, %c407], %36 {strides = array<i32>} : memref<16x500xf32, #tpu.memory_space<vmem>>, vector<16x16xf32>,
    %c0_23 = arith.constant 0 : index
    %c51 = arith.constant 51 : index
    %38 = vector.load %arg9[%c0_23, %c51] : memref<16x500xf32, #tpu.memory_space<vmem>>, vector<16x352xf32>
    %c0_24 = arith.constant 0 : index
    %c0_25 = arith.constant 0 : index
    %39 = vector.load %arg11[%c0_24, %c0_25] : memref<144x352xf32, #tpu.memory_space<vmem>>, vector<16x352xf32>
    tpu.vector_store %arg11[%c0_24, %c0_25], %38 {strides = array<i32>} : memref<144x352xf32, #tpu.memory_space<vmem>>, vector<16x352xf32>,
    %c0_26 = arith.constant 0 : index
    %c52 = arith.constant 52 : index
    %40 = vector.load %arg9[%c0_26, %c52] : memref<16x500xf32, #tpu.memory_space<vmem>>, vector<16x352xf32>
    %c16 = arith.constant 16 : index
    %c0_27 = arith.constant 0 : index
    %41 = vector.load %arg11[%c16, %c0_27] : memref<144x352xf32, #tpu.memory_space<vmem>>, vector<16x352xf32>
    tpu.vector_store %arg11[%c16, %c0_27], %40 {strides = array<i32>} : memref<144x352xf32, #tpu.memory_space<vmem>>, vector<16x352xf32>,
    %c0_28 = arith.constant 0 : index
    %c53 = arith.constant 53 : index
    %42 = vector.load %arg9[%c0_28, %c53] : memref<16x500xf32, #tpu.memory_space<vmem>>, vector<16x352xf32>
    %c32 = arith.constant 32 : index
    %c0_29 = arith.constant 0 : index
    %43 = vector.load %arg11[%c32, %c0_29] : memref<144x352xf32, #tpu.memory_space<vmem>>, vector<16x352xf32>
    tpu.vector_store %arg11[%c32, %c0_29], %42 {strides = array<i32>} : memref<144x352xf32, #tpu.memory_space<vmem>>, vector<16x352xf32>,
    %c0_30 = arith.constant 0 : index
    %c73 = arith.constant 73 : index
    %44 = vector.load %arg9[%c0_30, %c73] : memref<16x500xf32, #tpu.memory_space<vmem>>, vector<16x352xf32>
    %c48 = arith.constant 48 : index
    %c0_31 = arith.constant 0 : index
    %45 = vector.load %arg11[%c48, %c0_31] : memref<144x352xf32, #tpu.memory_space<vmem>>, vector<16x352xf32>
    tpu.vector_store %arg11[%c48, %c0_31], %44 {strides = array<i32>} : memref<144x352xf32, #tpu.memory_space<vmem>>, vector<16x352xf32>,
    %c0_32 = arith.constant 0 : index
    %c74 = arith.constant 74 : index
    %46 = vector.load %arg9[%c0_32, %c74] : memref<16x500xf32, #tpu.memory_space<vmem>>, vector<16x352xf32>
    %c64 = arith.constant 64 : index
    %c0_33 = arith.constant 0 : index
    %47 = vector.load %arg11[%c64, %c0_33] : memref<144x352xf32, #tpu.memory_space<vmem>>, vector<16x352xf32>
    tpu.vector_store %arg11[%c64, %c0_33], %46 {strides = array<i32>} : memref<144x352xf32, #tpu.memory_space<vmem>>, vector<16x352xf32>,
    %c0_34 = arith.constant 0 : index
    %c75 = arith.constant 75 : index
    %48 = vector.load %arg9[%c0_34, %c75] : memref<16x500xf32, #tpu.memory_space<vmem>>, vector<16x352xf32>
    %c80 = arith.constant 80 : index
    %c0_35 = arith.constant 0 : index
    %49 = vector.load %arg11[%c80, %c0_35] : memref<144x352xf32, #tpu.memory_space<vmem>>, vector<16x352xf32>
    tpu.vector_store %arg11[%c80, %c0_35], %48 {strides = array<i32>} : memref<144x352xf32, #tpu.memory_space<vmem>>, vector<16x352xf32>,
    %c0_36 = arith.constant 0 : index
    %c95 = arith.constant 95 : index
    %50 = vector.load %arg9[%c0_36, %c95] : memref<16x500xf32, #tpu.memory_space<vmem>>, vector<16x352xf32>
    %c96 = arith.constant 96 : index
    %c0_37 = arith.constant 0 : index
    %51 = vector.load %arg11[%c96, %c0_37] : memref<144x352xf32, #tpu.memory_space<vmem>>, vector<16x352xf32>
    tpu.vector_store %arg11[%c96, %c0_37], %50 {strides = array<i32>} : memref<144x352xf32, #tpu.memory_space<vmem>>, vector<16x352xf32>,
    %c0_38 = arith.constant 0 : index
    %c96_39 = arith.constant 96 : index
    %52 = vector.load %arg9[%c0_38, %c96_39] : memref<16x500xf32, #tpu.memory_space<vmem>>, vector<16x352xf32>
    %c112 = arith.constant 112 : index
    %c0_40 = arith.constant 0 : index
    %53 = vector.load %arg11[%c112, %c0_40] : memref<144x352xf32, #tpu.memory_space<vmem>>, vector<16x352xf32>
    tpu.vector_store %arg11[%c112, %c0_40], %52 {strides = array<i32>} : memref<144x352xf32, #tpu.memory_space<vmem>>, vector<16x352xf32>,
    %c0_41 = arith.constant 0 : index
    %c97 = arith.constant 97 : index
    %54 = vector.load %arg9[%c0_41, %c97] : memref<16x500xf32, #tpu.memory_space<vmem>>, vector<16x352xf32>
    %c128 = arith.constant 128 : index
    %c0_42 = arith.constant 0 : index
    %55 = vector.load %arg11[%c128, %c0_42] : memref<144x352xf32, #tpu.memory_space<vmem>>, vector<16x352xf32>
    tpu.vector_store %arg11[%c128, %c0_42], %54 {strides = array<i32>} : memref<144x352xf32, #tpu.memory_space<vmem>>, vector<16x352xf32>,
    %c0_43 = arith.constant 0 : index
    %c0_44 = arith.constant 0 : index
    %56 = vector.load %arg2[%c0_43, %c0_44] : memref<8x144xf32, #tpu.memory_space<vmem>>, vector<8x144xf32>
    %c0_45 = arith.constant 0 : index
    %c0_46 = arith.constant 0 : index
    %57 = vector.load %arg11[%c0_45, %c0_46] : memref<144x352xf32, #tpu.memory_space<vmem>>, vector<144x352xf32>
    %cst_47 = arith.constant dense<0.000000e+00> : vector<8x352xf32>
    %58 = tpu.matmul %56, %57, %cst_47 {dimension_numbers = #tpu.dot_dimension_numbers<[1], [0], [0], [1], [0, 0, 1, 1], [], []>} : vector<8x144xf32>, vector<144x352xf32>, vector<8x352xf32> -> vector<8x352xf32>
    %c0_48 = arith.constant 0 : index
    %c0_49 = arith.constant 0 : index
    %59 = vector.load %arg3[%c0_48, %c0_49] : memref<8x1xf32, #tpu.memory_space<vmem>>, vector<8x1xf32>
    %60 = vector.broadcast %59 : vector<8x1xf32> to vector<8x352xf32>
    %61 = arith.addf %58, %60 : vector<8x352xf32>
    %62 = arith.negf %61 : vector<8x352xf32>
    %63 = math.exp %62 : vector<8x352xf32>
    %cst_50 = arith.constant 1.000000e+00 : f32
    %64 = vector.broadcast %cst_50 : f32 to vector<8x352xf32>
    %65 = arith.addf %64, %63 : vector<8x352xf32>
    %66 = arith.divf %64, %65 : vector<8x352xf32>
    %67 = arith.mulf %61, %66 : vector<8x352xf32>
    %c0_51 = arith.constant 0 : index
    %c0_52 = arith.constant 0 : index
    %68 = vector.load %arg7[%c0_51, %c0_52] : memref<1x352xf32, #tpu.memory_space<vmem>>, vector<1x352xf32>
    %69 = vector.broadcast %68 : vector<1x352xf32> to vector<8x352xf32>
    %70 = arith.mulf %67, %69 : vector<8x352xf32>
    %c0_53 = arith.constant 0 : index
    %c74_54 = arith.constant 74 : index
    %71 = vector.load %arg10[%c0_53, %c74_54] : memref<8x500xf32, #tpu.memory_space<vmem>>, vector<8x352xf32>
    tpu.vector_store %arg10[%c0_53, %c74_54], %70 {strides = array<i32>} : memref<8x500xf32, #tpu.memory_space<vmem>>, vector<8x352xf32>,
    %c0_55 = arith.constant 0 : index
    %c5 = arith.constant 5 : index
    %72 = vector.load %arg10[%c0_55, %c5] : memref<8x500xf32, #tpu.memory_space<vmem>>, vector<8x352xf32>
    %c0_56 = arith.constant 0 : index
    %c0_57 = arith.constant 0 : index
    %73 = vector.load %arg12[%c0_56, %c0_57] : memref<392x352xf32, #tpu.memory_space<vmem>>, vector<8x352xf32>
    tpu.vector_store %arg12[%c0_56, %c0_57], %72 {strides = array<i32>} : memref<392x352xf32, #tpu.memory_space<vmem>>, vector<8x352xf32>,
    %c0_58 = arith.constant 0 : index
    %c6 = arith.constant 6 : index
    %74 = vector.load %arg10[%c0_58, %c6] : memref<8x500xf32, #tpu.memory_space<vmem>>, vector<8x352xf32>
    %c8 = arith.constant 8 : index
    %c0_59 = arith.constant 0 : index
    %75 = vector.load %arg12[%c8, %c0_59] : memref<392x352xf32, #tpu.memory_space<vmem>>, vector<8x352xf32>
    tpu.vector_store %arg12[%c8, %c0_59], %74 {strides = array<i32>} : memref<392x352xf32, #tpu.memory_space<vmem>>, vector<8x352xf32>,
    %c0_60 = arith.constant 0 : index
    %c7 = arith.constant 7 : index
    %76 = vector.load %arg10[%c0_60, %c7] : memref<8x500xf32, #tpu.memory_space<vmem>>, vector<8x352xf32>
    %c16_61 = arith.constant 16 : index
    %c0_62 = arith.constant 0 : index
    %77 = vector.load %arg12[%c16_61, %c0_62] : memref<392x352xf32, #tpu.memory_space<vmem>>, vector<8x352xf32>
    tpu.vector_store %arg12[%c16_61, %c0_62], %76 {strides = array<i32>} : memref<392x352xf32, #tpu.memory_space<vmem>>, vector<8x352xf32>,
    %c0_63 = arith.constant 0 : index
    %c8_64 = arith.constant 8 : index
    %78 = vector.load %arg10[%c0_63, %c8_64] : memref<8x500xf32, #tpu.memory_space<vmem>>, vector<8x352xf32>
    %c24 = arith.constant 24 : index
    %c0_65 = arith.constant 0 : index
    %79 = vector.load %arg12[%c24, %c0_65] : memref<392x352xf32, #tpu.memory_space<vmem>>, vector<8x352xf32>
    tpu.vector_store %arg12[%c24, %c0_65], %78 {strides = array<i32>} : memref<392x352xf32, #tpu.memory_space<vmem>>, vector<8x352xf32>,
    %c0_66 = arith.constant 0 : index
    %c9 = arith.constant 9 : index
    %80 = vector.load %arg10[%c0_66, %c9] : memref<8x500xf32, #tpu.memory_space<vmem>>, vector<8x352xf32>
    %c32_67 = arith.constant 32 : index
    %c0_68 = arith.constant 0 : index
    %81 = vector.load %arg12[%c32_67, %c0_68] : memref<392x352xf32, #tpu.memory_space<vmem>>, vector<8x352xf32>
    tpu.vector_store %arg12[%c32_67, %c0_68], %80 {strides = array<i32>} : memref<392x352xf32, #tpu.memory_space<vmem>>, vector<8x352xf32>,
    %c0_69 = arith.constant 0 : index
    %c10 = arith.constant 10 : index
    %82 = vector.load %arg10[%c0_69, %c10] : memref<8x500xf32, #tpu.memory_space<vmem>>, vector<8x352xf32>
    %c40 = arith.constant 40 : index
    %c0_70 = arith.constant 0 : index
    %83 = vector.load %arg12[%c40, %c0_70] : memref<392x352xf32, #tpu.memory_space<vmem>>, vector<8x352xf32>
    tpu.vector_store %arg12[%c40, %c0_70], %82 {strides = array<i32>} : memref<392x352xf32, #tpu.memory_space<vmem>>, vector<8x352xf32>,
    %c0_71 = arith.constant 0 : index
    %c11 = arith.constant 11 : index
    %84 = vector.load %arg10[%c0_71, %c11] : memref<8x500xf32, #tpu.memory_space<vmem>>, vector<8x352xf32>
    %c48_72 = arith.constant 48 : index
    %c0_73 = arith.constant 0 : index
    %85 = vector.load %arg12[%c48_72, %c0_73] : memref<392x352xf32, #tpu.memory_space<vmem>>, vector<8x352xf32>
    tpu.vector_store %arg12[%c48_72, %c0_73], %84 {strides = array<i32>} : memref<392x352xf32, #tpu.memory_space<vmem>>, vector<8x352xf32>,
    %c0_74 = arith.constant 0 : index
    %c27 = arith.constant 27 : index
    %86 = vector.load %arg10[%c0_74, %c27] : memref<8x500xf32, #tpu.memory_space<vmem>>, vector<8x352xf32>
    %c56 = arith.constant 56 : index
    %c0_75 = arith.constant 0 : index
    %87 = vector.load %arg12[%c56, %c0_75] : memref<392x352xf32, #tpu.memory_space<vmem>>, vector<8x352xf32>
    tpu.vector_store %arg12[%c56, %c0_75], %86 {strides = array<i32>} : memref<392x352xf32, #tpu.memory_space<vmem>>, vector<8x352xf32>,
    %c0_76 = arith.constant 0 : index
    %c28 = arith.constant 28 : index
    %88 = vector.load %arg10[%c0_76, %c28] : memref<8x500xf32, #tpu.memory_space<vmem>>, vector<8x352xf32>
    %c64_77 = arith.constant 64 : index
    %c0_78 = arith.constant 0 : index
    %89 = vector.load %arg12[%c64_77, %c0_78] : memref<392x352xf32, #tpu.memory_space<vmem>>, vector<8x352xf32>
    tpu.vector_store %arg12[%c64_77, %c0_78], %88 {strides = array<i32>} : memref<392x352xf32, #tpu.memory_space<vmem>>, vector<8x352xf32>,
    %c0_79 = arith.constant 0 : index
    %c29 = arith.constant 29 : index
    %90 = vector.load %arg10[%c0_79, %c29] : memref<8x500xf32, #tpu.memory_space<vmem>>, vector<8x352xf32>
    %c72 = arith.constant 72 : index
    %c0_80 = arith.constant 0 : index
    %91 = vector.load %arg12[%c72, %c0_80] : memref<392x352xf32, #tpu.memory_space<vmem>>, vector<8x352xf32>
    tpu.vector_store %arg12[%c72, %c0_80], %90 {strides = array<i32>} : memref<392x352xf32, #tpu.memory_space<vmem>>, vector<8x352xf32>,
    %c0_81 = arith.constant 0 : index
    %c30 = arith.constant 30 : index
    %92 = vector.load %arg10[%c0_81, %c30] : memref<8x500xf32, #tpu.memory_space<vmem>>, vector<8x352xf32>
    %c80_82 = arith.constant 80 : index
    %c0_83 = arith.constant 0 : index
    %93 = vector.load %arg12[%c80_82, %c0_83] : memref<392x352xf32, #tpu.memory_space<vmem>>, vector<8x352xf32>
    tpu.vector_store %arg12[%c80_82, %c0_83], %92 {strides = array<i32>} : memref<392x352xf32, #tpu.memory_space<vmem>>, vector<8x352xf32>,
    %c0_84 = arith.constant 0 : index
    %c31 = arith.constant 31 : index
    %94 = vector.load %arg10[%c0_84, %c31] : memref<8x500xf32, #tpu.memory_space<vmem>>, vector<8x352xf32>
    %c88 = arith.constant 88 : index
    %c0_85 = arith.constant 0 : index
    %95 = vector.load %arg12[%c88, %c0_85] : memref<392x352xf32, #tpu.memory_space<vmem>>, vector<8x352xf32>
    tpu.vector_store %arg12[%c88, %c0_85], %94 {strides = array<i32>} : memref<392x352xf32, #tpu.memory_space<vmem>>, vector<8x352xf32>,
    %c0_86 = arith.constant 0 : index
    %c32_87 = arith.constant 32 : index
    %96 = vector.load %arg10[%c0_86, %c32_87] : memref<8x500xf32, #tpu.memory_space<vmem>>, vector<8x352xf32>
    %c96_88 = arith.constant 96 : index
    %c0_89 = arith.constant 0 : index
    %97 = vector.load %arg12[%c96_88, %c0_89] : memref<392x352xf32, #tpu.memory_space<vmem>>, vector<8x352xf32>
    tpu.vector_store %arg12[%c96_88, %c0_89], %96 {strides = array<i32>} : memref<392x352xf32, #tpu.memory_space<vmem>>, vector<8x352xf32>,
    %c0_90 = arith.constant 0 : index
    %c33 = arith.constant 33 : index
    %98 = vector.load %arg10[%c0_90, %c33] : memref<8x500xf32, #tpu.memory_space<vmem>>, vector<8x352xf32>
    %c104 = arith.constant 104 : index
    %c0_91 = arith.constant 0 : index
    %99 = vector.load %arg12[%c104, %c0_91] : memref<392x352xf32, #tpu.memory_space<vmem>>, vector<8x352xf32>
    tpu.vector_store %arg12[%c104, %c0_91], %98 {strides = array<i32>} : memref<392x352xf32, #tpu.memory_space<vmem>>, vector<8x352xf32>,
    %c0_92 = arith.constant 0 : index
    %c49 = arith.constant 49 : index
    %100 = vector.load %arg10[%c0_92, %c49] : memref<8x500xf32, #tpu.memory_space<vmem>>, vector<8x352xf32>
    %c112_93 = arith.constant 112 : index
    %c0_94 = arith.constant 0 : index
    %101 = vector.load %arg12[%c112_93, %c0_94] : memref<392x352xf32, #tpu.memory_space<vmem>>, vector<8x352xf32>
    tpu.vector_store %arg12[%c112_93, %c0_94], %100 {strides = array<i32>} : memref<392x352xf32, #tpu.memory_space<vmem>>, vector<8x352xf32>,
    %c0_95 = arith.constant 0 : index
    %c50 = arith.constant 50 : index
    %102 = vector.load %arg10[%c0_95, %c50] : memref<8x500xf32, #tpu.memory_space<vmem>>, vector<8x352xf32>
    %c120 = arith.constant 120 : index
    %c0_96 = arith.constant 0 : index
    %103 = vector.load %arg12[%c120, %c0_96] : memref<392x352xf32, #tpu.memory_space<vmem>>, vector<8x352xf32>
    tpu.vector_store %arg12[%c120, %c0_96], %102 {strides = array<i32>} : memref<392x352xf32, #tpu.memory_space<vmem>>, vector<8x352xf32>,
    %c0_97 = arith.constant 0 : index
    %c51_98 = arith.constant 51 : index
    %104 = vector.load %arg10[%c0_97, %c51_98] : memref<8x500xf32, #tpu.memory_space<vmem>>, vector<8x352xf32>
    %c128_99 = arith.constant 128 : index
    %c0_100 = arith.constant 0 : index
    %105 = vector.load %arg12[%c128_99, %c0_100] : memref<392x352xf32, #tpu.memory_space<vmem>>, vector<8x352xf32>
    tpu.vector_store %arg12[%c128_99, %c0_100], %104 {strides = array<i32>} : memref<392x352xf32, #tpu.memory_space<vmem>>, vector<8x352xf32>,
    %c0_101 = arith.constant 0 : index
    %c52_102 = arith.constant 52 : index
    %106 = vector.load %arg10[%c0_101, %c52_102] : memref<8x500xf32, #tpu.memory_space<vmem>>, vector<8x352xf32>
    %c136 = arith.constant 136 : index
    %c0_103 = arith.constant 0 : index
    %107 = vector.load %arg12[%c136, %c0_103] : memref<392x352xf32, #tpu.memory_space<vmem>>, vector<8x352xf32>
    tpu.vector_store %arg12[%c136, %c0_103], %106 {strides = array<i32>} : memref<392x352xf32, #tpu.memory_space<vmem>>, vector<8x352xf32>,
    %c0_104 = arith.constant 0 : index
    %c53_105 = arith.constant 53 : index
    %108 = vector.load %arg10[%c0_104, %c53_105] : memref<8x500xf32, #tpu.memory_space<vmem>>, vector<8x352xf32>
    %c144 = arith.constant 144 : index
    %c0_106 = arith.constant 0 : index
    %109 = vector.load %arg12[%c144, %c0_106] : memref<392x352xf32, #tpu.memory_space<vmem>>, vector<8x352xf32>
    tpu.vector_store %arg12[%c144, %c0_106], %108 {strides = array<i32>} : memref<392x352xf32, #tpu.memory_space<vmem>>, vector<8x352xf32>,
    %c0_107 = arith.constant 0 : index
    %c54 = arith.constant 54 : index
    %110 = vector.load %arg10[%c0_107, %c54] : memref<8x500xf32, #tpu.memory_space<vmem>>, vector<8x352xf32>
    %c152 = arith.constant 152 : index
    %c0_108 = arith.constant 0 : index
    %111 = vector.load %arg12[%c152, %c0_108] : memref<392x352xf32, #tpu.memory_space<vmem>>, vector<8x352xf32>
    tpu.vector_store %arg12[%c152, %c0_108], %110 {strides = array<i32>} : memref<392x352xf32, #tpu.memory_space<vmem>>, vector<8x352xf32>,
    %c0_109 = arith.constant 0 : index
    %c55 = arith.constant 55 : index
    %112 = vector.load %arg10[%c0_109, %c55] : memref<8x500xf32, #tpu.memory_space<vmem>>, vector<8x352xf32>
    %c160 = arith.constant 160 : index
    %c0_110 = arith.constant 0 : index
    %113 = vector.load %arg12[%c160, %c0_110] : memref<392x352xf32, #tpu.memory_space<vmem>>, vector<8x352xf32>
    tpu.vector_store %arg12[%c160, %c0_110], %112 {strides = array<i32>} : memref<392x352xf32, #tpu.memory_space<vmem>>, vector<8x352xf32>,
    %c0_111 = arith.constant 0 : index
    %c71 = arith.constant 71 : index
    %114 = vector.load %arg10[%c0_111, %c71] : memref<8x500xf32, #tpu.memory_space<vmem>>, vector<8x352xf32>
    %c168 = arith.constant 168 : index
    %c0_112 = arith.constant 0 : index
    %115 = vector.load %arg12[%c168, %c0_112] : memref<392x352xf32, #tpu.memory_space<vmem>>, vector<8x352xf32>
    tpu.vector_store %arg12[%c168, %c0_112], %114 {strides = array<i32>} : memref<392x352xf32, #tpu.memory_space<vmem>>, vector<8x352xf32>,
    %c0_113 = arith.constant 0 : index
    %c72_114 = arith.constant 72 : index
    %116 = vector.load %arg10[%c0_113, %c72_114] : memref<8x500xf32, #tpu.memory_space<vmem>>, vector<8x352xf32>
    %c176 = arith.constant 176 : index
    %c0_115 = arith.constant 0 : index
    %117 = vector.load %arg12[%c176, %c0_115] : memref<392x352xf32, #tpu.memory_space<vmem>>, vector<8x352xf32>
    tpu.vector_store %arg12[%c176, %c0_115], %116 {strides = array<i32>} : memref<392x352xf32, #tpu.memory_space<vmem>>, vector<8x352xf32>,
    %c0_116 = arith.constant 0 : index
    %c73_117 = arith.constant 73 : index
    %118 = vector.load %arg10[%c0_116, %c73_117] : memref<8x500xf32, #tpu.memory_space<vmem>>, vector<8x352xf32>
    %c184 = arith.constant 184 : index
    %c0_118 = arith.constant 0 : index
    %119 = vector.load %arg12[%c184, %c0_118] : memref<392x352xf32, #tpu.memory_space<vmem>>, vector<8x352xf32>
    tpu.vector_store %arg12[%c184, %c0_118], %118 {strides = array<i32>} : memref<392x352xf32, #tpu.memory_space<vmem>>, vector<8x352xf32>,
    %c0_119 = arith.constant 0 : index
    %c74_120 = arith.constant 74 : index
    %120 = vector.load %arg10[%c0_119, %c74_120] : memref<8x500xf32, #tpu.memory_space<vmem>>, vector<8x352xf32>
    %c192 = arith.constant 192 : index
    %c0_121 = arith.constant 0 : index
    %121 = vector.load %arg12[%c192, %c0_121] : memref<392x352xf32, #tpu.memory_space<vmem>>, vector<8x352xf32>
    tpu.vector_store %arg12[%c192, %c0_121], %120 {strides = array<i32>} : memref<392x352xf32, #tpu.memory_space<vmem>>, vector<8x352xf32>,
    %c0_122 = arith.constant 0 : index
    %c75_123 = arith.constant 75 : index
    %122 = vector.load %arg10[%c0_122, %c75_123] : memref<8x500xf32, #tpu.memory_space<vmem>>, vector<8x352xf32>
    %c200 = arith.constant 200 : index
    %c0_124 = arith.constant 0 : index
    %123 = vector.load %arg12[%c200, %c0_124] : memref<392x352xf32, #tpu.memory_space<vmem>>, vector<8x352xf32>
    tpu.vector_store %arg12[%c200, %c0_124], %122 {strides = array<i32>} : memref<392x352xf32, #tpu.memory_space<vmem>>, vector<8x352xf32>,
    %c0_125 = arith.constant 0 : index
    %c76 = arith.constant 76 : index
    %124 = vector.load %arg10[%c0_125, %c76] : memref<8x500xf32, #tpu.memory_space<vmem>>, vector<8x352xf32>
    %c208 = arith.constant 208 : index
    %c0_126 = arith.constant 0 : index
    %125 = vector.load %arg12[%c208, %c0_126] : memref<392x352xf32, #tpu.memory_space<vmem>>, vector<8x352xf32>
    tpu.vector_store %arg12[%c208, %c0_126], %124 {strides = array<i32>} : memref<392x352xf32, #tpu.memory_space<vmem>>, vector<8x352xf32>,
    %c0_127 = arith.constant 0 : index
    %c77_128 = arith.constant 77 : index
    %126 = vector.load %arg10[%c0_127, %c77_128] : memref<8x500xf32, #tpu.memory_space<vmem>>, vector<8x352xf32>
    %c216 = arith.constant 216 : index
    %c0_129 = arith.constant 0 : index
    %127 = vector.load %arg12[%c216, %c0_129] : memref<392x352xf32, #tpu.memory_space<vmem>>, vector<8x352xf32>
    tpu.vector_store %arg12[%c216, %c0_129], %126 {strides = array<i32>} : memref<392x352xf32, #tpu.memory_space<vmem>>, vector<8x352xf32>,
    %c0_130 = arith.constant 0 : index
    %c93 = arith.constant 93 : index
    %128 = vector.load %arg10[%c0_130, %c93] : memref<8x500xf32, #tpu.memory_space<vmem>>, vector<8x352xf32>
    %c224 = arith.constant 224 : index
    %c0_131 = arith.constant 0 : index
    %129 = vector.load %arg12[%c224, %c0_131] : memref<392x352xf32, #tpu.memory_space<vmem>>, vector<8x352xf32>
    tpu.vector_store %arg12[%c224, %c0_131], %128 {strides = array<i32>} : memref<392x352xf32, #tpu.memory_space<vmem>>, vector<8x352xf32>,
    %c0_132 = arith.constant 0 : index
    %c94 = arith.constant 94 : index
    %130 = vector.load %arg10[%c0_132, %c94] : memref<8x500xf32, #tpu.memory_space<vmem>>, vector<8x352xf32>
    %c232 = arith.constant 232 : index
    %c0_133 = arith.constant 0 : index
    %131 = vector.load %arg12[%c232, %c0_133] : memref<392x352xf32, #tpu.memory_space<vmem>>, vector<8x352xf32>
    tpu.vector_store %arg12[%c232, %c0_133], %130 {strides = array<i32>} : memref<392x352xf32, #tpu.memory_space<vmem>>, vector<8x352xf32>,
    %c0_134 = arith.constant 0 : index
    %c95_135 = arith.constant 95 : index
    %132 = vector.load %arg10[%c0_134, %c95_135] : memref<8x500xf32, #tpu.memory_space<vmem>>, vector<8x352xf32>
    %c240 = arith.constant 240 : index
    %c0_136 = arith.constant 0 : index
    %133 = vector.load %arg12[%c240, %c0_136] : memref<392x352xf32, #tpu.memory_space<vmem>>, vector<8x352xf32>
    tpu.vector_store %arg12[%c240, %c0_136], %132 {strides = array<i32>} : memref<392x352xf32, #tpu.memory_space<vmem>>, vector<8x352xf32>,
    %c0_137 = arith.constant 0 : index
    %c96_138 = arith.constant 96 : index
    %134 = vector.load %arg10[%c0_137, %c96_138] : memref<8x500xf32, #tpu.memory_space<vmem>>, vector<8x352xf32>
    %c248 = arith.constant 248 : index
    %c0_139 = arith.constant 0 : index
    %135 = vector.load %arg12[%c248, %c0_139] : memref<392x352xf32, #tpu.memory_space<vmem>>, vector<8x352xf32>
    tpu.vector_store %arg12[%c248, %c0_139], %134 {strides = array<i32>} : memref<392x352xf32, #tpu.memory_space<vmem>>, vector<8x352xf32>,
    %c0_140 = arith.constant 0 : index
    %c97_141 = arith.constant 97 : index
    %136 = vector.load %arg10[%c0_140, %c97_141] : memref<8x500xf32, #tpu.memory_space<vmem>>, vector<8x352xf32>
    %c256 = arith.constant 256 : index
    %c0_142 = arith.constant 0 : index
    %137 = vector.load %arg12[%c256, %c0_142] : memref<392x352xf32, #tpu.memory_space<vmem>>, vector<8x352xf32>
    tpu.vector_store %arg12[%c256, %c0_142], %136 {strides = array<i32>} : memref<392x352xf32, #tpu.memory_space<vmem>>, vector<8x352xf32>,
    %c0_143 = arith.constant 0 : index
    %c98 = arith.constant 98 : index
    %138 = vector.load %arg10[%c0_143, %c98] : memref<8x500xf32, #tpu.memory_space<vmem>>, vector<8x352xf32>
    %c264 = arith.constant 264 : index
    %c0_144 = arith.constant 0 : index
    %139 = vector.load %arg12[%c264, %c0_144] : memref<392x352xf32, #tpu.memory_space<vmem>>, vector<8x352xf32>
    tpu.vector_store %arg12[%c264, %c0_144], %138 {strides = array<i32>} : memref<392x352xf32, #tpu.memory_space<vmem>>, vector<8x352xf32>,
    %c0_145 = arith.constant 0 : index
    %c99_146 = arith.constant 99 : index
    %140 = vector.load %arg10[%c0_145, %c99_146] : memref<8x500xf32, #tpu.memory_space<vmem>>, vector<8x352xf32>
    %c272 = arith.constant 272 : index
    %c0_147 = arith.constant 0 : index
    %141 = vector.load %arg12[%c272, %c0_147] : memref<392x352xf32, #tpu.memory_space<vmem>>, vector<8x352xf32>
    tpu.vector_store %arg12[%c272, %c0_147], %140 {strides = array<i32>} : memref<392x352xf32, #tpu.memory_space<vmem>>, vector<8x352xf32>,
    %c0_148 = arith.constant 0 : index
    %c115 = arith.constant 115 : index
    %142 = vector.load %arg10[%c0_148, %c115] : memref<8x500xf32, #tpu.memory_space<vmem>>, vector<8x352xf32>
    %c280 = arith.constant 280 : index
    %c0_149 = arith.constant 0 : index
    %143 = vector.load %arg12[%c280, %c0_149] : memref<392x352xf32, #tpu.memory_space<vmem>>, vector<8x352xf32>
    tpu.vector_store %arg12[%c280, %c0_149], %142 {strides = array<i32>} : memref<392x352xf32, #tpu.memory_space<vmem>>, vector<8x352xf32>,
    %c0_150 = arith.constant 0 : index
    %c116 = arith.constant 116 : index
    %144 = vector.load %arg10[%c0_150, %c116] : memref<8x500xf32, #tpu.memory_space<vmem>>, vector<8x352xf32>
    %c288 = arith.constant 288 : index
    %c0_151 = arith.constant 0 : index
    %145 = vector.load %arg12[%c288, %c0_151] : memref<392x352xf32, #tpu.memory_space<vmem>>, vector<8x352xf32>
    tpu.vector_store %arg12[%c288, %c0_151], %144 {strides = array<i32>} : memref<392x352xf32, #tpu.memory_space<vmem>>, vector<8x352xf32>,
    %c0_152 = arith.constant 0 : index
    %c117 = arith.constant 117 : index
    %146 = vector.load %arg10[%c0_152, %c117] : memref<8x500xf32, #tpu.memory_space<vmem>>, vector<8x352xf32>
    %c296 = arith.constant 296 : index
    %c0_153 = arith.constant 0 : index
    %147 = vector.load %arg12[%c296, %c0_153] : memref<392x352xf32, #tpu.memory_space<vmem>>, vector<8x352xf32>
    tpu.vector_store %arg12[%c296, %c0_153], %146 {strides = array<i32>} : memref<392x352xf32, #tpu.memory_space<vmem>>, vector<8x352xf32>,
    %c0_154 = arith.constant 0 : index
    %c118 = arith.constant 118 : index
    %148 = vector.load %arg10[%c0_154, %c118] : memref<8x500xf32, #tpu.memory_space<vmem>>, vector<8x352xf32>
    %c304 = arith.constant 304 : index
    %c0_155 = arith.constant 0 : index
    %149 = vector.load %arg12[%c304, %c0_155] : memref<392x352xf32, #tpu.memory_space<vmem>>, vector<8x352xf32>
    tpu.vector_store %arg12[%c304, %c0_155], %148 {strides = array<i32>} : memref<392x352xf32, #tpu.memory_space<vmem>>, vector<8x352xf32>,
    %c0_156 = arith.constant 0 : index
    %c119 = arith.constant 119 : index
    %150 = vector.load %arg10[%c0_156, %c119] : memref<8x500xf32, #tpu.memory_space<vmem>>, vector<8x352xf32>
    %c312 = arith.constant 312 : index
    %c0_157 = arith.constant 0 : index
    %151 = vector.load %arg12[%c312, %c0_157] : memref<392x352xf32, #tpu.memory_space<vmem>>, vector<8x352xf32>
    tpu.vector_store %arg12[%c312, %c0_157], %150 {strides = array<i32>} : memref<392x352xf32, #tpu.memory_space<vmem>>, vector<8x352xf32>,
    %c0_158 = arith.constant 0 : index
    %c120_159 = arith.constant 120 : index
    %152 = vector.load %arg10[%c0_158, %c120_159] : memref<8x500xf32, #tpu.memory_space<vmem>>, vector<8x352xf32>
    %c320 = arith.constant 320 : index
    %c0_160 = arith.constant 0 : index
    %153 = vector.load %arg12[%c320, %c0_160] : memref<392x352xf32, #tpu.memory_space<vmem>>, vector<8x352xf32>
    tpu.vector_store %arg12[%c320, %c0_160], %152 {strides = array<i32>} : memref<392x352xf32, #tpu.memory_space<vmem>>, vector<8x352xf32>,
    %c0_161 = arith.constant 0 : index
    %c121_162 = arith.constant 121 : index
    %154 = vector.load %arg10[%c0_161, %c121_162] : memref<8x500xf32, #tpu.memory_space<vmem>>, vector<8x352xf32>
    %c328 = arith.constant 328 : index
    %c0_163 = arith.constant 0 : index
    %155 = vector.load %arg12[%c328, %c0_163] : memref<392x352xf32, #tpu.memory_space<vmem>>, vector<8x352xf32>
    tpu.vector_store %arg12[%c328, %c0_163], %154 {strides = array<i32>} : memref<392x352xf32, #tpu.memory_space<vmem>>, vector<8x352xf32>,
    %c0_164 = arith.constant 0 : index
    %c137 = arith.constant 137 : index
    %156 = vector.load %arg10[%c0_164, %c137] : memref<8x500xf32, #tpu.memory_space<vmem>>, vector<8x352xf32>
    %c336 = arith.constant 336 : index
    %c0_165 = arith.constant 0 : index
    %157 = vector.load %arg12[%c336, %c0_165] : memref<392x352xf32, #tpu.memory_space<vmem>>, vector<8x352xf32>
    tpu.vector_store %arg12[%c336, %c0_165], %156 {strides = array<i32>} : memref<392x352xf32, #tpu.memory_space<vmem>>, vector<8x352xf32>,
    %c0_166 = arith.constant 0 : index
    %c138 = arith.constant 138 : index
    %158 = vector.load %arg10[%c0_166, %c138] : memref<8x500xf32, #tpu.memory_space<vmem>>, vector<8x352xf32>
    %c344 = arith.constant 344 : index
    %c0_167 = arith.constant 0 : index
    %159 = vector.load %arg12[%c344, %c0_167] : memref<392x352xf32, #tpu.memory_space<vmem>>, vector<8x352xf32>
    tpu.vector_store %arg12[%c344, %c0_167], %158 {strides = array<i32>} : memref<392x352xf32, #tpu.memory_space<vmem>>, vector<8x352xf32>,
    %c0_168 = arith.constant 0 : index
    %c139 = arith.constant 139 : index
    %160 = vector.load %arg10[%c0_168, %c139] : memref<8x500xf32, #tpu.memory_space<vmem>>, vector<8x352xf32>
    %c352 = arith.constant 352 : index
    %c0_169 = arith.constant 0 : index
    %161 = vector.load %arg12[%c352, %c0_169] : memref<392x352xf32, #tpu.memory_space<vmem>>, vector<8x352xf32>
    tpu.vector_store %arg12[%c352, %c0_169], %160 {strides = array<i32>} : memref<392x352xf32, #tpu.memory_space<vmem>>, vector<8x352xf32>,
    %c0_170 = arith.constant 0 : index
    %c140 = arith.constant 140 : index
    %162 = vector.load %arg10[%c0_170, %c140] : memref<8x500xf32, #tpu.memory_space<vmem>>, vector<8x352xf32>
    %c360 = arith.constant 360 : index
    %c0_171 = arith.constant 0 : index
    %163 = vector.load %arg12[%c360, %c0_171] : memref<392x352xf32, #tpu.memory_space<vmem>>, vector<8x352xf32>
    tpu.vector_store %arg12[%c360, %c0_171], %162 {strides = array<i32>} : memref<392x352xf32, #tpu.memory_space<vmem>>, vector<8x352xf32>,
    %c0_172 = arith.constant 0 : index
    %c141 = arith.constant 141 : index
    %164 = vector.load %arg10[%c0_172, %c141] : memref<8x500xf32, #tpu.memory_space<vmem>>, vector<8x352xf32>
    %c368 = arith.constant 368 : index
    %c0_173 = arith.constant 0 : index
    %165 = vector.load %arg12[%c368, %c0_173] : memref<392x352xf32, #tpu.memory_space<vmem>>, vector<8x352xf32>
    tpu.vector_store %arg12[%c368, %c0_173], %164 {strides = array<i32>} : memref<392x352xf32, #tpu.memory_space<vmem>>, vector<8x352xf32>,
    %c0_174 = arith.constant 0 : index
    %c142 = arith.constant 142 : index
    %166 = vector.load %arg10[%c0_174, %c142] : memref<8x500xf32, #tpu.memory_space<vmem>>, vector<8x352xf32>
    %c376 = arith.constant 376 : index
    %c0_175 = arith.constant 0 : index
    %167 = vector.load %arg12[%c376, %c0_175] : memref<392x352xf32, #tpu.memory_space<vmem>>, vector<8x352xf32>
    tpu.vector_store %arg12[%c376, %c0_175], %166 {strides = array<i32>} : memref<392x352xf32, #tpu.memory_space<vmem>>, vector<8x352xf32>,
    %c0_176 = arith.constant 0 : index
    %c143_177 = arith.constant 143 : index
    %168 = vector.load %arg10[%c0_176, %c143_177] : memref<8x500xf32, #tpu.memory_space<vmem>>, vector<8x352xf32>
    %c384 = arith.constant 384 : index
    %c0_178 = arith.constant 0 : index
    %169 = vector.load %arg12[%c384, %c0_178] : memref<392x352xf32, #tpu.memory_space<vmem>>, vector<8x352xf32>
    tpu.vector_store %arg12[%c384, %c0_178], %168 {strides = array<i32>} : memref<392x352xf32, #tpu.memory_space<vmem>>, vector<8x352xf32>,
    %c0_179 = arith.constant 0 : index
    %c0_180 = arith.constant 0 : index
    %170 = vector.load %arg4[%c0_179, %c0_180] : memref<8x392xf32, #tpu.memory_space<vmem>>, vector<8x392xf32>
    %c0_181 = arith.constant 0 : index
    %c0_182 = arith.constant 0 : index
    %171 = vector.load %arg12[%c0_181, %c0_182] : memref<392x352xf32, #tpu.memory_space<vmem>>, vector<392x352xf32>
    %cst_183 = arith.constant dense<0.000000e+00> : vector<8x352xf32>
    %172 = tpu.matmul %170, %171, %cst_183 {dimension_numbers = #tpu.dot_dimension_numbers<[1], [0], [0], [1], [0, 0, 1, 1], [], []>} : vector<8x392xf32>, vector<392x352xf32>, vector<8x352xf32> -> vector<8x352xf32>
    %c0_184 = arith.constant 0 : index
    %c0_185 = arith.constant 0 : index
    %173 = vector.load %arg5[%c0_184, %c0_185] : memref<8x1xf32, #tpu.memory_space<vmem>>, vector<8x1xf32>
    %174 = vector.broadcast %173 : vector<8x1xf32> to vector<8x352xf32>
    %175 = arith.addf %172, %174 : vector<8x352xf32>
    %176 = arith.negf %175 : vector<8x352xf32>
    %177 = math.exp %176 : vector<8x352xf32>
    %cst_186 = arith.constant 1.000000e+00 : f32
    %178 = vector.broadcast %cst_186 : f32 to vector<8x352xf32>
    %179 = arith.addf %178, %177 : vector<8x352xf32>
    %180 = arith.divf %178, %179 : vector<8x352xf32>
    %c0_187 = arith.constant 0 : index
    %c0_188 = arith.constant 0 : index
    %181 = vector.load %arg6[%c0_187, %c0_188] : memref<16x8xf32, #tpu.memory_space<vmem>>, vector<16x1xf32>
    %182 = vector.extract_strided_slice %180 {offsets = [0, 0], sizes = [1, 352], strides = [1, 1]} : vector<8x352xf32> to vector<1x352xf32>
    %183 = vector.broadcast %181 : vector<16x1xf32> to vector<16x352xf32>
    %184 = vector.broadcast %182 : vector<1x352xf32> to vector<16x352xf32>
    %185 = arith.mulf %183, %184 : vector<16x352xf32>
    %c0_189 = arith.constant 0 : index
    %c1 = arith.constant 1 : index
    %186 = vector.load %arg6[%c0_189, %c1] : memref<16x8xf32, #tpu.memory_space<vmem>>, vector<16x1xf32>
    %187 = vector.extract_strided_slice %180 {offsets = [1, 0], sizes = [1, 352], strides = [1, 1]} : vector<8x352xf32> to vector<1x352xf32>
    %188 = vector.broadcast %186 : vector<16x1xf32> to vector<16x352xf32>
    %189 = vector.broadcast %187 : vector<1x352xf32> to vector<16x352xf32>
    %190 = arith.mulf %188, %189 : vector<16x352xf32>
    %191 = arith.addf %185, %190 : vector<16x352xf32>
    %c0_190 = arith.constant 0 : index
    %c74_191 = arith.constant 74 : index
    %192 = vector.load %arg9[%c0_190, %c74_191] : memref<16x500xf32, #tpu.memory_space<vmem>>, vector<16x352xf32>
    %193 = arith.mulf %192, %191 : vector<16x352xf32>
    %194 = vector.extract_strided_slice %193 {offsets = [0, 3], sizes = [16, 16], strides = [1, 1]} : vector<16x352xf32> to vector<16x16xf32>
    %c0_192 = arith.constant 0 : index
    %c0_193 = arith.constant 0 : index
    %c0_194 = arith.constant 0 : index
    %195 = vector.load %arg8[%c0_192, %c0_193, %c0_194] : memref<1x16x256xf32, #tpu.memory_space<vmem>>, vector<1x16x16xf32>
    %196 = vector.shape_cast %195 : vector<1x16x16xf32> to vector<16x16xf32>
    %197 = vector.shape_cast %194 : vector<16x16xf32> to vector<1x16x16xf32>
    tpu.vector_store %arg8[%c0_192, %c0_193, %c0_194], %197 {strides = array<i32>} : memref<1x16x256xf32, #tpu.memory_space<vmem>>, vector<1x16x16xf32>,
    %198 = vector.extract_strided_slice %193 {offsets = [0, 25], sizes = [16, 16], strides = [1, 1]} : vector<16x352xf32> to vector<16x16xf32>
    %c0_195 = arith.constant 0 : index
    %c0_196 = arith.constant 0 : index
    %c16_197 = arith.constant 16 : index
    %199 = vector.load %arg8[%c0_195, %c0_196, %c16_197] : memref<1x16x256xf32, #tpu.memory_space<vmem>>, vector<1x16x16xf32>
    %200 = vector.shape_cast %199 : vector<1x16x16xf32> to vector<16x16xf32>
    %201 = vector.shape_cast %198 : vector<16x16xf32> to vector<1x16x16xf32>
    tpu.vector_store %arg8[%c0_195, %c0_196, %c16_197], %201 {strides = array<i32>} : memref<1x16x256xf32, #tpu.memory_space<vmem>>, vector<1x16x16xf32>,
    %202 = vector.extract_strided_slice %193 {offsets = [0, 47], sizes = [16, 16], strides = [1, 1]} : vector<16x352xf32> to vector<16x16xf32>
    %c0_198 = arith.constant 0 : index
    %c0_199 = arith.constant 0 : index
    %c32_200 = arith.constant 32 : index
    %203 = vector.load %arg8[%c0_198, %c0_199, %c32_200] : memref<1x16x256xf32, #tpu.memory_space<vmem>>, vector<1x16x16xf32>
    %204 = vector.shape_cast %203 : vector<1x16x16xf32> to vector<16x16xf32>
    %205 = vector.shape_cast %202 : vector<16x16xf32> to vector<1x16x16xf32>
    tpu.vector_store %arg8[%c0_198, %c0_199, %c32_200], %205 {strides = array<i32>} : memref<1x16x256xf32, #tpu.memory_space<vmem>>, vector<1x16x16xf32>,
    %206 = vector.extract_strided_slice %193 {offsets = [0, 69], sizes = [16, 16], strides = [1, 1]} : vector<16x352xf32> to vector<16x16xf32>
    %c0_201 = arith.constant 0 : index
    %c0_202 = arith.constant 0 : index
    %c48_203 = arith.constant 48 : index
    %207 = vector.load %arg8[%c0_201, %c0_202, %c48_203] : memref<1x16x256xf32, #tpu.memory_space<vmem>>, vector<1x16x16xf32>
    %208 = vector.shape_cast %207 : vector<1x16x16xf32> to vector<16x16xf32>
    %209 = vector.shape_cast %206 : vector<16x16xf32> to vector<1x16x16xf32>
    tpu.vector_store %arg8[%c0_201, %c0_202, %c48_203], %209 {strides = array<i32>} : memref<1x16x256xf32, #tpu.memory_space<vmem>>, vector<1x16x16xf32>,
    %210 = vector.extract_strided_slice %193 {offsets = [0, 91], sizes = [16, 16], strides = [1, 1]} : vector<16x352xf32> to vector<16x16xf32>
    %c0_204 = arith.constant 0 : index
    %c0_205 = arith.constant 0 : index
    %c64_206 = arith.constant 64 : index
    %211 = vector.load %arg8[%c0_204, %c0_205, %c64_206] : memref<1x16x256xf32, #tpu.memory_space<vmem>>, vector<1x16x16xf32>
    %212 = vector.shape_cast %211 : vector<1x16x16xf32> to vector<16x16xf32>
    %213 = vector.shape_cast %210 : vector<16x16xf32> to vector<1x16x16xf32>
    tpu.vector_store %arg8[%c0_204, %c0_205, %c64_206], %213 {strides = array<i32>} : memref<1x16x256xf32, #tpu.memory_space<vmem>>, vector<1x16x16xf32>,
    %214 = vector.extract_strided_slice %193 {offsets = [0, 113], sizes = [16, 16], strides = [1, 1]} : vector<16x352xf32> to vector<16x16xf32>
    %c0_207 = arith.constant 0 : index
    %c0_208 = arith.constant 0 : index
    %c80_209 = arith.constant 80 : index
    %215 = vector.load %arg8[%c0_207, %c0_208, %c80_209] : memref<1x16x256xf32, #tpu.memory_space<vmem>>, vector<1x16x16xf32>
    %216 = vector.shape_cast %215 : vector<1x16x16xf32> to vector<16x16xf32>
    %217 = vector.shape_cast %214 : vector<16x16xf32> to vector<1x16x16xf32>
    tpu.vector_store %arg8[%c0_207, %c0_208, %c80_209], %217 {strides = array<i32>} : memref<1x16x256xf32, #tpu.memory_space<vmem>>, vector<1x16x16xf32>,
    %218 = vector.extract_strided_slice %193 {offsets = [0, 135], sizes = [16, 16], strides = [1, 1]} : vector<16x352xf32> to vector<16x16xf32>
    %c0_210 = arith.constant 0 : index
    %c0_211 = arith.constant 0 : index
    %c96_212 = arith.constant 96 : index
    %219 = vector.load %arg8[%c0_210, %c0_211, %c96_212] : memref<1x16x256xf32, #tpu.memory_space<vmem>>, vector<1x16x16xf32>
    %220 = vector.shape_cast %219 : vector<1x16x16xf32> to vector<16x16xf32>
    %221 = vector.shape_cast %218 : vector<16x16xf32> to vector<1x16x16xf32>
    tpu.vector_store %arg8[%c0_210, %c0_211, %c96_212], %221 {strides = array<i32>} : memref<1x16x256xf32, #tpu.memory_space<vmem>>, vector<1x16x16xf32>,
    %222 = vector.extract_strided_slice %193 {offsets = [0, 157], sizes = [16, 16], strides = [1, 1]} : vector<16x352xf32> to vector<16x16xf32>
    %c0_213 = arith.constant 0 : index
    %c0_214 = arith.constant 0 : index
    %c112_215 = arith.constant 112 : index
    %223 = vector.load %arg8[%c0_213, %c0_214, %c112_215] : memref<1x16x256xf32, #tpu.memory_space<vmem>>, vector<1x16x16xf32>
    %224 = vector.shape_cast %223 : vector<1x16x16xf32> to vector<16x16xf32>
    %225 = vector.shape_cast %222 : vector<16x16xf32> to vector<1x16x16xf32>
    tpu.vector_store %arg8[%c0_213, %c0_214, %c112_215], %225 {strides = array<i32>} : memref<1x16x256xf32, #tpu.memory_space<vmem>>, vector<1x16x16xf32>,
    %226 = vector.extract_strided_slice %193 {offsets = [0, 179], sizes = [16, 16], strides = [1, 1]} : vector<16x352xf32> to vector<16x16xf32>
    %c0_216 = arith.constant 0 : index
    %c0_217 = arith.constant 0 : index
    %c128_218 = arith.constant 128 : index
    %227 = vector.load %arg8[%c0_216, %c0_217, %c128_218] : memref<1x16x256xf32, #tpu.memory_space<vmem>>, vector<1x16x16xf32>
    %228 = vector.shape_cast %227 : vector<1x16x16xf32> to vector<16x16xf32>
    %229 = vector.shape_cast %226 : vector<16x16xf32> to vector<1x16x16xf32>
    tpu.vector_store %arg8[%c0_216, %c0_217, %c128_218], %229 {strides = array<i32>} : memref<1x16x256xf32, #tpu.memory_space<vmem>>, vector<1x16x16xf32>,
    %230 = vector.extract_strided_slice %193 {offsets = [0, 201], sizes = [16, 16], strides = [1, 1]} : vector<16x352xf32> to vector<16x16xf32>
    %c0_219 = arith.constant 0 : index
    %c0_220 = arith.constant 0 : index
    %c144_221 = arith.constant 144 : index
    %231 = vector.load %arg8[%c0_219, %c0_220, %c144_221] : memref<1x16x256xf32, #tpu.memory_space<vmem>>, vector<1x16x16xf32>
    %232 = vector.shape_cast %231 : vector<1x16x16xf32> to vector<16x16xf32>
    %233 = vector.shape_cast %230 : vector<16x16xf32> to vector<1x16x16xf32>
    tpu.vector_store %arg8[%c0_219, %c0_220, %c144_221], %233 {strides = array<i32>} : memref<1x16x256xf32, #tpu.memory_space<vmem>>, vector<1x16x16xf32>,
    %234 = vector.extract_strided_slice %193 {offsets = [0, 223], sizes = [16, 16], strides = [1, 1]} : vector<16x352xf32> to vector<16x16xf32>
    %c0_222 = arith.constant 0 : index
    %c0_223 = arith.constant 0 : index
    %c160_224 = arith.constant 160 : index
    %235 = vector.load %arg8[%c0_222, %c0_223, %c160_224] : memref<1x16x256xf32, #tpu.memory_space<vmem>>, vector<1x16x16xf32>
    %236 = vector.shape_cast %235 : vector<1x16x16xf32> to vector<16x16xf32>
    %237 = vector.shape_cast %234 : vector<16x16xf32> to vector<1x16x16xf32>
    tpu.vector_store %arg8[%c0_222, %c0_223, %c160_224], %237 {strides = array<i32>} : memref<1x16x256xf32, #tpu.memory_space<vmem>>, vector<1x16x16xf32>,
    %238 = vector.extract_strided_slice %193 {offsets = [0, 245], sizes = [16, 16], strides = [1, 1]} : vector<16x352xf32> to vector<16x16xf32>
    %c0_225 = arith.constant 0 : index
    %c0_226 = arith.constant 0 : index
    %c176_227 = arith.constant 176 : index
    %239 = vector.load %arg8[%c0_225, %c0_226, %c176_227] : memref<1x16x256xf32, #tpu.memory_space<vmem>>, vector<1x16x16xf32>
    %240 = vector.shape_cast %239 : vector<1x16x16xf32> to vector<16x16xf32>
    %241 = vector.shape_cast %238 : vector<16x16xf32> to vector<1x16x16xf32>
    tpu.vector_store %arg8[%c0_225, %c0_226, %c176_227], %241 {strides = array<i32>} : memref<1x16x256xf32, #tpu.memory_space<vmem>>, vector<1x16x16xf32>,
    %242 = vector.extract_strided_slice %193 {offsets = [0, 267], sizes = [16, 16], strides = [1, 1]} : vector<16x352xf32> to vector<16x16xf32>
    %c0_228 = arith.constant 0 : index
    %c0_229 = arith.constant 0 : index
    %c192_230 = arith.constant 192 : index
    %243 = vector.load %arg8[%c0_228, %c0_229, %c192_230] : memref<1x16x256xf32, #tpu.memory_space<vmem>>, vector<1x16x16xf32>
    %244 = vector.shape_cast %243 : vector<1x16x16xf32> to vector<16x16xf32>
    %245 = vector.shape_cast %242 : vector<16x16xf32> to vector<1x16x16xf32>
    tpu.vector_store %arg8[%c0_228, %c0_229, %c192_230], %245 {strides = array<i32>} : memref<1x16x256xf32, #tpu.memory_space<vmem>>, vector<1x16x16xf32>,
    %246 = vector.extract_strided_slice %193 {offsets = [0, 289], sizes = [16, 16], strides = [1, 1]} : vector<16x352xf32> to vector<16x16xf32>
    %c0_231 = arith.constant 0 : index
    %c0_232 = arith.constant 0 : index
    %c208_233 = arith.constant 208 : index
    %247 = vector.load %arg8[%c0_231, %c0_232, %c208_233] : memref<1x16x256xf32, #tpu.memory_space<vmem>>, vector<1x16x16xf32>
    %248 = vector.shape_cast %247 : vector<1x16x16xf32> to vector<16x16xf32>
    %249 = vector.shape_cast %246 : vector<16x16xf32> to vector<1x16x16xf32>
    tpu.vector_store %arg8[%c0_231, %c0_232, %c208_233], %249 {strides = array<i32>} : memref<1x16x256xf32, #tpu.memory_space<vmem>>, vector<1x16x16xf32>,
    %250 = vector.extract_strided_slice %193 {offsets = [0, 311], sizes = [16, 16], strides = [1, 1]} : vector<16x352xf32> to vector<16x16xf32>
    %c0_234 = arith.constant 0 : index
    %c0_235 = arith.constant 0 : index
    %c224_236 = arith.constant 224 : index
    %251 = vector.load %arg8[%c0_234, %c0_235, %c224_236] : memref<1x16x256xf32, #tpu.memory_space<vmem>>, vector<1x16x16xf32>
    %252 = vector.shape_cast %251 : vector<1x16x16xf32> to vector<16x16xf32>
    %253 = vector.shape_cast %250 : vector<16x16xf32> to vector<1x16x16xf32>
    tpu.vector_store %arg8[%c0_234, %c0_235, %c224_236], %253 {strides = array<i32>} : memref<1x16x256xf32, #tpu.memory_space<vmem>>, vector<1x16x16xf32>,
    %254 = vector.extract_strided_slice %193 {offsets = [0, 333], sizes = [16, 16], strides = [1, 1]} : vector<16x352xf32> to vector<16x16xf32>
    %c0_237 = arith.constant 0 : index
    %c0_238 = arith.constant 0 : index
    %c240_239 = arith.constant 240 : index
    %255 = vector.load %arg8[%c0_237, %c0_238, %c240_239] : memref<1x16x256xf32, #tpu.memory_space<vmem>>, vector<1x16x16xf32>
    %256 = vector.shape_cast %255 : vector<1x16x16xf32> to vector<16x16xf32>
    %257 = vector.shape_cast %254 : vector<16x16xf32> to vector<1x16x16xf32>
    tpu.vector_store %arg8[%c0_237, %c0_238, %c240_239], %257 {strides = array<i32>} : memref<1x16x256xf32, #tpu.memory_space<vmem>>, vector<1x16x16xf32>,
    return
  }
  func.func @transform_0(%arg0: i32) -> (i32, i32, i32) {
    %c0_i32 = arith.constant 0 : i32
    %c0_i32_0 = arith.constant 0 : i32
    %c0_i32_1 = arith.constant 0 : i32
    return %arg0, %c0_i32, %c0_i32_0 : i32, i32, i32
  }
  func.func @transform_1(%arg0: i32) -> (i32, i32) {
    %c0_i32 = arith.constant 0 : i32
    %c0_i32_0 = arith.constant 0 : i32
    %c0_i32_1 = arith.constant 0 : i32
    return %c0_i32, %c0_i32_0 : i32, i32
  }
  func.func @transform_2(%arg0: i32) -> (i32, i32) {
    %c0_i32 = arith.constant 0 : i32
    %c0_i32_0 = arith.constant 0 : i32
    %c0_i32_1 = arith.constant 0 : i32
    return %c0_i32, %c0_i32_0 : i32, i32
  }
  func.func @transform_3(%arg0: i32) -> (i32, i32) {
    %c0_i32 = arith.constant 0 : i32
    %c0_i32_0 = arith.constant 0 : i32
    %c0_i32_1 = arith.constant 0 : i32
    return %c0_i32, %c0_i32_0 : i32, i32
  }
  func.func @transform_4(%arg0: i32) -> (i32, i32) {
    %c0_i32 = arith.constant 0 : i32
    %c0_i32_0 = arith.constant 0 : i32
    %c0_i32_1 = arith.constant 0 : i32
    return %c0_i32, %c0_i32_0 : i32, i32
  }
  func.func @transform_5(%arg0: i32) -> (i32, i32) {
    %c0_i32 = arith.constant 0 : i32
    %c0_i32_0 = arith.constant 0 : i32
    %c0_i32_1 = arith.constant 0 : i32
    return %c0_i32, %c0_i32_0 : i32, i32
  }
  func.func @transform_6(%arg0: i32) -> (i32, i32) {
    %c0_i32 = arith.constant 0 : i32
    %c0_i32_0 = arith.constant 0 : i32
    %c0_i32_1 = arith.constant 0 : i32
    return %c0_i32, %c0_i32_0 : i32, i32
  }
  func.func @transform_7(%arg0: i32) -> (i32, i32, i32) {
    %c0_i32 = arith.constant 0 : i32
    %c0_i32_0 = arith.constant 0 : i32
    %c0_i32_1 = arith.constant 0 : i32
    return %arg0, %c0_i32, %c0_i32_0 : i32, i32, i32
  }
}

</mosaic_0001>

<llo_original>
// kernel: tpu_custom_call.1
$region0: #{tpu_custom_call.1}
  #allocation0 [shape = 'u32[]', space=smem, size = 0x4, offset = 0x4, fixed_abs, tag = 'smem constant byte address 0x4 - core index']
  #allocation1 [shape = 'u32[144,128]{1,0:T(1,128)}', space=vmem, size = 0x12000, scoped, tag = 'internal scratch']
  #allocation2 [shape = 'f32[16,500]{1,0:T(8,128)}', space=vmem, size = 0x8000, scoped, tag = 'scratch operand']
  #allocation3 [shape = 'f32[8,500]{1,0:T(8,128)}', space=vmem, size = 0x4000, scoped, tag = 'scratch operand']
  #allocation4 [shape = 'f32[144,352]{1,0:T(8,128)}', space=vmem, size = 0x36000, scoped, tag = 'scratch operand']
  #allocation5 [shape = 'f32[392,352]{1,0:T(8,128)}', space=vmem, size = 0x93000, scoped, tag = 'scratch operand']
  %s0 = inlined_call_operand.hbm [shape: f32[2,16,256], index: 0, kind: input, shape index: {}]
  %s1 = inlined_call_operand.hbm [shape: f32[8,144], index: 1, kind: input, shape index: {}]
  %s2 = inlined_call_operand.hbm [shape: f32[8,1], index: 2, kind: input, shape index: {}]
  %s3 = inlined_call_operand.hbm [shape: f32[8,392], index: 3, kind: input, shape index: {}]
  %s4 = inlined_call_operand.hbm [shape: f32[8,1], index: 4, kind: input, shape index: {}]
  %s5 = inlined_call_operand.hbm [shape: f32[16,8], index: 5, kind: input, shape index: {}]
  %s6 = inlined_call_operand.hbm [shape: f32[1,352], index: 6, kind: input, shape index: {}]
  %s7 = inlined_call_operand.hbm [shape: f32[2,16,256], index: 7, kind: output, shape index: {}]
  %s8 = sld [smem:[#allocation0]]
  $region89: #{tpu_custom_call.1} parent=0
    _
  %s10 = ssub.s32 1, %s8
  %s11 = scalar_select 0, %s10, %s8
  $region1: #{tpu_custom_call.1} parent=0
    #allocation6 [shape = 'u8[32768]{0}', space=vmem, size = 0x8000, scoped, tag = 'input window, operand 0']
    #allocation7 [shape = 's32[2]{0}', space=sflag, size = 0x8, scoped, tag = 'scoped memory for tpu_custom_call.1']
    #allocation8 [shape = 's32[2]{0}', space=sflag, size = 0x8, scoped, tag = 'scoped memory for tpu_custom_call.1']
    #allocation9 [shape = 'u8[8192]{0}', space=vmem, size = 0x2000, scoped, tag = 'input window, operand 1, single buffered']
    #allocation10 [shape = 's32[1]{0}', space=sflag, size = 0x4, scoped, tag = 'scoped memory for tpu_custom_call.1']
    #allocation11 [shape = 'u8[4096]{0}', space=vmem, size = 0x1000, scoped, tag = 'input window, operand 2, single buffered']
    #allocation12 [shape = 'u8[16384]{0}', space=vmem, size = 0x4000, scoped, tag = 'input window, operand 3, single buffered']
    #allocation13 [shape = 's32[1]{0}', space=sflag, size = 0x4, scoped, tag = 'scoped memory for tpu_custom_call.1']
    #allocation14 [shape = 'u8[4096]{0}', space=vmem, size = 0x1000, scoped, tag = 'input window, operand 4, single buffered']
    #allocation15 [shape = 'u8[8192]{0}', space=vmem, size = 0x2000, scoped, tag = 'input window, operand 5, single buffered']
    #allocation16 [shape = 's32[1]{0}', space=sflag, size = 0x4, scoped, tag = 'scoped memory for tpu_custom_call.1']
    #allocation17 [shape = 'u8[1536]{0}', space=vmem, size = 0x800, scoped, tag = 'input window, operand 6, single buffered']
    #allocation18 [shape = 'u8[32768]{0}', space=vmem, size = 0x8000, scoped, tag = 'output window, operand 0']
    %12 = vsyncpa [#allocation7], 0
    %s13 = scalar_lea.sflag [#allocation7], 1
    %14 = vsyncpa %s13, 0
    %15 = vsyncpa [#allocation10], 0
    %16 = vsyncpa [#allocation13], 0
    %17 = vsyncpa [#allocation16], 0
    %18 = vsyncpa [#allocation8], 0
    %s19 = scalar_lea.sflag [#allocation8], 1
    %20 = vsyncpa %s19, 0
    loop: start=0, step=1, limit=4
    $region2: #{tpu_custom_call.1} parent=1 // loop_pre_header
      _
    $region3: #{tpu_custom_call.1} parent=1 // loop_header
      %s22 = sphi 0, %s26
      %p23 = scmp.ge.s32.totalorder %s22, 4
      %s32 = sphi 0, %s34
      %s35 = sphi 0, %s32
      %s36 = sphi 0, %s35
      %s52 = sphi 0, %s36
      %s56 = sphi 0, %s56
      %s58 = sphi 0, %s56
      %s59 = sphi 0, %s58
      %s73 = sphi 0, %s59
      %s77 = sphi 0, %s77
      %s79 = sphi 0, %s77
      %s80 = sphi 0, %s79
      %s94 = sphi 0, %s80
      %s98 = sphi 0, %s98
      %s100 = sphi 0, %s98
      %s101 = sphi 0, %s100
      %s115 = sphi 0, %s101
      %s119 = sphi 0, %s119
      %s121 = sphi 0, %s119
      %s122 = sphi 0, %s121
      %s136 = sphi 0, %s122
      %s140 = sphi 0, %s140
      %s142 = sphi 0, %s140
      %s143 = sphi 0, %s142
      %s157 = sphi 0, %s143
      %s161 = sphi 0, %s161
      %s163 = sphi 0, %s161
      %s164 = sphi 0, %s163
      %s178 = sphi 0, %s164
      %s184 = sphi 0, %s186
      %s187 = sphi 0, %s184
      %s188 = sphi 0, %s187
      %s204 = sphi 0, %s188
    $region4: #{tpu_custom_call.1} parent=1 // loop_header_branch
      %25 = sbr.rel (%p23) target = $region8
    $region5: #{tpu_custom_call.1} parent=1 // loop_body
      %s27 = ssub.s32 %s22, 1
      %s28 = ssub.s32 %s22, 2
      %s29 = sadd.s32 %s22, 1
      %s30 = ssub.s32 %s22, %s29
      %p31 = scmp.eq.s32.totalorder %s30, 0
      %s33 = sadd.s32 %s32, 1
      %s34 = scalar_select %p31, %s32, %s33
      %p37 = pneg %p31
      %p38 = scmp.eq.s32.totalorder %s22, 1
      %p39 = por %p37, %p38
      %p40 = scmp.ne.s32.totalorder %s32, %s35
      %p41 = scmp.eq.s32.totalorder %s22, 0
      %p42 = por %p40, %p41
      %p43 = scmp.ne.s32.totalorder %s32, %s35
      %p44 = scmp.eq.s32.totalorder %s27, 1
      %p45 = por %p43, %p44
      %p46 = scmp.ne.s32.totalorder %s35, %s36
      %p47 = scmp.eq.s32.totalorder %s27, 0
      %p48 = por %p46, %p47
      %p49 = scmp.ne.s32.totalorder %s35, %s36
      %p50 = scmp.eq.s32.totalorder %s28, 1
      %p51 = por %p49, %p50
      %p53 = scmp.ne.s32.totalorder %s36, %s52
      %p54 = scmp.eq.s32.totalorder %s28, 0
      %p55 = por %p53, %p54
      %s57 = sadd.s32 %s56, 1
      %p60 = scmp.eq.s32.totalorder %s22, 1
      %p61 = scmp.ne.s32.totalorder %s56, %s58
      %p62 = scmp.eq.s32.totalorder %s22, 0
      %p63 = por %p61, %p62
      %p64 = scmp.ne.s32.totalorder %s56, %s58
      %p65 = scmp.eq.s32.totalorder %s27, 1
      %p66 = por %p64, %p65
      %p67 = scmp.ne.s32.totalorder %s58, %s59
      %p68 = scmp.eq.s32.totalorder %s27, 0
      %p69 = por %p67, %p68
      %p70 = scmp.ne.s32.totalorder %s58, %s59
      %p71 = scmp.eq.s32.totalorder %s28, 1
      %p72 = por %p70, %p71
      %p74 = scmp.ne.s32.totalorder %s59, %s73
      %p75 = scmp.eq.s32.totalorder %s28, 0
      %p76 = por %p74, %p75
      %s78 = sadd.s32 %s77, 1
      %p81 = scmp.eq.s32.totalorder %s22, 1
      %p82 = scmp.ne.s32.totalorder %s77, %s79
      %p83 = scmp.eq.s32.totalorder %s22, 0
      %p84 = por %p82, %p83
      %p85 = scmp.ne.s32.totalorder %s77, %s79
      %p86 = scmp.eq.s32.totalorder %s27, 1
      %p87 = por %p85, %p86
      %p88 = scmp.ne.s32.totalorder %s79, %s80
      %p89 = scmp.eq.s32.totalorder %s27, 0
      %p90 = por %p88, %p89
      %p91 = scmp.ne.s32.totalorder %s79, %s80
      %p92 = scmp.eq.s32.totalorder %s28, 1
      %p93 = por %p91, %p92
      %p95 = scmp.ne.s32.totalorder %s80, %s94
      %p96 = scmp.eq.s32.totalorder %s28, 0
      %p97 = por %p95, %p96
      %s99 = sadd.s32 %s98, 1
      %p102 = scmp.eq.s32.totalorder %s22, 1
      %p103 = scmp.ne.s32.totalorder %s98, %s100
      %p104 = scmp.eq.s32.totalorder %s22, 0
      %p105 = por %p103, %p104
      %p106 = scmp.ne.s32.totalorder %s98, %s100
      %p107 = scmp.eq.s32.totalorder %s27, 1
      %p108 = por %p106, %p107
      %p109 = scmp.ne.s32.totalorder %s100, %s101
      %p110 = scmp.eq.s32.totalorder %s27, 0
      %p111 = por %p109, %p110
      %p112 = scmp.ne.s32.totalorder %s100, %s101
      %p113 = scmp.eq.s32.totalorder %s28, 1
      %p114 = por %p112, %p113
      %p116 = scmp.ne.s32.totalorder %s101, %s115
      %p117 = scmp.eq.s32.totalorder %s28, 0
      %p118 = por %p116, %p117
      %s120 = sadd.s32 %s119, 1
      %p123 = scmp.eq.s32.totalorder %s22, 1
      %p124 = scmp.ne.s32.totalorder %s119, %s121
      %p125 = scmp.eq.s32.totalorder %s22, 0
      %p126 = por %p124, %p125
      %p127 = scmp.ne.s32.totalorder %s119, %s121
      %p128 = scmp.eq.s32.totalorder %s27, 1
      %p129 = por %p127, %p128
      %p130 = scmp.ne.s32.totalorder %s121, %s122
      %p131 = scmp.eq.s32.totalorder %s27, 0
      %p132 = por %p130, %p131
      %p133 = scmp.ne.s32.totalorder %s121, %s122
      %p134 = scmp.eq.s32.totalorder %s28, 1
      %p135 = por %p133, %p134
      %p137 = scmp.ne.s32.totalorder %s122, %s136
      %p138 = scmp.eq.s32.totalorder %s28, 0
      %p139 = por %p137, %p138
      %s141 = sadd.s32 %s140, 1
      %p144 = scmp.eq.s32.totalorder %s22, 1
      %p145 = scmp.ne.s32.totalorder %s140, %s142
      %p146 = scmp.eq.s32.totalorder %s22, 0
      %p147 = por %p145, %p146
      %p148 = scmp.ne.s32.totalorder %s140, %s142
      %p149 = scmp.eq.s32.totalorder %s27, 1
      %p150 = por %p148, %p149
      %p151 = scmp.ne.s32.totalorder %s142, %s143
      %p152 = scmp.eq.s32.totalorder %s27, 0
      %p153 = por %p151, %p152
      %p154 = scmp.ne.s32.totalorder %s142, %s143
      %p155 = scmp.eq.s32.totalorder %s28, 1
      %p156 = por %p154, %p155
      %p158 = scmp.ne.s32.totalorder %s143, %s157
      %p159 = scmp.eq.s32.totalorder %s28, 0
      %p160 = por %p158, %p159
      %s162 = sadd.s32 %s161, 1
      %p165 = scmp.eq.s32.totalorder %s22, 1
      %p166 = scmp.ne.s32.totalorder %s161, %s163
      %p167 = scmp.eq.s32.totalorder %s22, 0
      %p168 = por %p166, %p167
      %p169 = scmp.ne.s32.totalorder %s161, %s163
      %p170 = scmp.eq.s32.totalorder %s27, 1
      %p171 = por %p169, %p170
      %p172 = scmp.ne.s32.totalorder %s163, %s164
      %p173 = scmp.eq.s32.totalorder %s27, 0
      %p174 = por %p172, %p173
      %p175 = scmp.ne.s32.totalorder %s163, %s164
      %p176 = scmp.eq.s32.totalorder %s28, 1
      %p177 = por %p175, %p176
      %p179 = scmp.ne.s32.totalorder %s164, %s178
      %p180 = scmp.eq.s32.totalorder %s28, 0
      %p181 = por %p179, %p180
      %s182 = ssub.s32 %s22, %s29
      %p183 = scmp.eq.s32.totalorder %s182, 0
      %s185 = sadd.s32 %s184, 1
      %s186 = scalar_select %p183, %s184, %s185
      %p189 = pneg %p183
      %p190 = scmp.eq.s32.totalorder %s22, 1
      %p191 = por %p189, %p190
      %p192 = scmp.ne.s32.totalorder %s184, %s187
      %p193 = scmp.eq.s32.totalorder %s22, 0
      %p194 = por %p192, %p193
      %p195 = scmp.ne.s32.totalorder %s184, %s187
      %p196 = scmp.eq.s32.totalorder %s27, 1
      %p197 = por %p195, %p196
      %p198 = scmp.ne.s32.totalorder %s187, %s188
      %p199 = scmp.eq.s32.totalorder %s27, 0
      %p200 = por %p198, %p199
      %p201 = scmp.ne.s32.totalorder %s187, %s188
      %p202 = scmp.eq.s32.totalorder %s28, 1
      %p203 = por %p201, %p202
      %p205 = scmp.ne.s32.totalorder %s188, %s204
      %p206 = scmp.eq.s32.totalorder %s28, 0
      %p207 = por %p205, %p206
      %p208 = scmp.le.s32.totalorder 1, %s22
      %p209 = scmp.lt.s32.totalorder %s22, 3
      %p210 = pnand %p208, %p209
      %p211 = pneg %p210
      // Predicated region
      $region9: #{tpu_custom_call.1} parent=5 // pred_check
        _
      $region10: #{tpu_custom_call.1} parent=5 // pred_check_branch
        %213 = sbr.rel (%p210) target = $region12
      $region11: #{tpu_custom_call.1} parent=5 // pred_region
        %s214 = ssub.s32 %s22, 1
        // Predicated region
        $region13: #{tpu_custom_call.1} parent=11 // pred_check
          %p215 = pneg %p69
        $region14: #{tpu_custom_call.1} parent=11 // pred_check_branch
          %217 = sbr.rel (%p215) target = $region16
        $region15: #{tpu_custom_call.1} parent=11 // pred_region
          %s219 = ssub.s32 256, 256
          %220 = vsyncadd [#allocation10], %s219
          %s222 = sshll.u32 [#allocation9], 4
          %s223 = int_to_ptr.vmem [resolvable:$true] %s222
          %225 = dma.hbm_to_vmem [thread:$0]  %s1, 256, %s223, [#allocation10]
        $region16: #{tpu_custom_call.1} parent=11 // pred_fallthru
          _
        // Predicated region
        $region17: #{tpu_custom_call.1} parent=11 // pred_check
          %p226 = pneg %p90
        $region18: #{tpu_custom_call.1} parent=11 // pred_check_branch
          %228 = sbr.rel (%p226) target = $region20
        $region19: #{tpu_custom_call.1} parent=11 // pred_region
          %s230 = ssub.s32 128, 128
          %231 = vsyncadd [#allocation10], %s230
          %s233 = sshll.u32 [#allocation11], 4
          %s234 = int_to_ptr.vmem [resolvable:$true] %s233
          %236 = dma.hbm_to_vmem [thread:$0]  %s2, 128, %s234, [#allocation10]
        $region20: #{tpu_custom_call.1} parent=11 // pred_fallthru
          _
        // Predicated region
        $region21: #{tpu_custom_call.1} parent=11 // pred_check
          %p237 = pneg %p111
        $region22: #{tpu_custom_call.1} parent=11 // pred_check_branch
          %239 = sbr.rel (%p237) target = $region24
        $region23: #{tpu_custom_call.1} parent=11 // pred_region
          %s241 = ssub.s32 512, 512
          %242 = vsyncadd [#allocation13], %s241
          %s244 = sshll.u32 [#allocation12], 4
          %s245 = int_to_ptr.vmem [resolvable:$true] %s244
          %247 = dma.hbm_to_vmem [thread:$0]  %s3, 512, %s245, [#allocation13]
        $region24: #{tpu_custom_call.1} parent=11 // pred_fallthru
          _
        // Predicated region
        $region25: #{tpu_custom_call.1} parent=11 // pred_check
          %p248 = pneg %p132
        $region26: #{tpu_custom_call.1} parent=11 // pred_check_branch
          %250 = sbr.rel (%p248) target = $region28
        $region27: #{tpu_custom_call.1} parent=11 // pred_region
          %s252 = ssub.s32 128, 128
          %253 = vsyncadd [#allocation13], %s252
          %s255 = sshll.u32 [#allocation14], 4
          %s256 = int_to_ptr.vmem [resolvable:$true] %s255
          %258 = dma.hbm_to_vmem [thread:$0]  %s4, 128, %s256, [#allocation13]
        $region28: #{tpu_custom_call.1} parent=11 // pred_fallthru
          _
        // Predicated region
        $region29: #{tpu_custom_call.1} parent=11 // pred_check
          %p259 = pneg %p153
        $region30: #{tpu_custom_call.1} parent=11 // pred_check_branch
          %261 = sbr.rel (%p259) target = $region32
        $region31: #{tpu_custom_call.1} parent=11 // pred_region
          %s263 = ssub.s32 256, 256
          %264 = vsyncadd [#allocation16], %s263
          %s265 = sshll.u32 [#allocation15], 4
          %s266 = int_to_ptr.vmem [resolvable:$true] %s265
          %271 = dma.hbm_to_vmem [thread:$0]  %s5, 256, %s266, [#allocation16], 128, 128, 8
        $region32: #{tpu_custom_call.1} parent=11 // pred_fallthru
          _
        // Predicated region
        $region33: #{tpu_custom_call.1} parent=11 // pred_check
          %p272 = pneg %p174
        $region34: #{tpu_custom_call.1} parent=11 // pred_check_branch
          %274 = sbr.rel (%p272) target = $region36
        $region35: #{tpu_custom_call.1} parent=11 // pred_region
          %s276 = ssub.s32 48, 48
          %277 = vsyncadd [#allocation16], %s276
          %s279 = sshll.u32 [#allocation17], 4
          %s280 = int_to_ptr.vmem [resolvable:$true] %s279
          %282 = dma.hbm_to_vmem [thread:$0]  %s6, 48, %s280, [#allocation16]
        $region36: #{tpu_custom_call.1} parent=11 // pred_fallthru
          _
      $region12: #{tpu_custom_call.1} parent=5 // pred_fallthru
        _
      %p283 = scmp.lt.s32.totalorder %s22, 2
      // Predicated region
      $region37: #{tpu_custom_call.1} parent=5 // pred_check
        %p284 = pneg %p283
      $region38: #{tpu_custom_call.1} parent=5 // pred_check_branch
        %286 = sbr.rel (%p284) target = $region40
      $region39: #{tpu_custom_call.1} parent=5 // pred_region
        // Predicated region
        $region41: #{tpu_custom_call.1} parent=39 // pred_check
          %p287 = pneg %p42
        $region42: #{tpu_custom_call.1} parent=39 // pred_check_branch
          %289 = sbr.rel (%p287) target = $region44
        $region43: #{tpu_custom_call.1} parent=39 // pred_region
          %s290 = sand.u32 %s32, 1
          %s291 = scalar_lea.sflag [#allocation7], %s290
          %s292 = sand.u32 %s32, 1
          %s293 = smul.addr %s292, 32
          %s294 = scalar_lea.vmem [#allocation6], %s293
          %s296 = ssub.s32 512, 512
          %297 = vsyncadd %s291, %s296
          %s298 = smul.addr %s22, 4
          %s299 = smul.addr %s298, 128
          %s300 = scalar_lea.hbm %s0, %s299
          %s301 = sshll.u32 %s294, 4
          %s302 = int_to_ptr.vmem [resolvable:$true] %s301
          %307 = dma.hbm_to_vmem [thread:$0]  %s300, 512, %s302, %s291, 256, 256, 16
        $region44: #{tpu_custom_call.1} parent=39 // pred_fallthru
          _
      $region40: #{tpu_custom_call.1} parent=5 // pred_fallthru
        _
      %p308 = scmp.le.s32.totalorder 1, %s22
      %p309 = scmp.lt.s32.totalorder %s22, 3
      %p310 = pnand %p308, %p309
      %p311 = pneg %p310
      // Predicated region
      $region45: #{tpu_custom_call.1} parent=5 // pred_check
        _
      $region46: #{tpu_custom_call.1} parent=5 // pred_check_branch
        %313 = sbr.rel (%p310) target = $region48
      $region47: #{tpu_custom_call.1} parent=5 // pred_region
        %s314 = ssub.s32 %s22, 1
        %s315 = sand.u32 %s35, 1
        %s316 = scalar_lea.sflag [#allocation7], %s315
        %s317 = sand.u32 %s35, 1
        %s318 = smul.addr %s317, 32
        %s319 = scalar_lea.vmem [#allocation6], %s318
        // Predicated region
        $region49: #{tpu_custom_call.1} parent=47 // pred_check
          %p320 = pneg %p48
        $region50: #{tpu_custom_call.1} parent=47 // pred_check_branch
          %322 = sbr.rel (%p320) target = $region52
        $region51: #{tpu_custom_call.1} parent=47 // pred_region
          %323 = dma.done %s316, 512
        $region52: #{tpu_custom_call.1} parent=47 // pred_fallthru
          _
        // Predicated region
        $region53: #{tpu_custom_call.1} parent=47 // pred_check
          %p324 = pneg %p69
        $region54: #{tpu_custom_call.1} parent=47 // pred_check_branch
          %326 = sbr.rel (%p324) target = $region56
        $region55: #{tpu_custom_call.1} parent=47 // pred_region
          %327 = dma.done [#allocation10], 256
        $region56: #{tpu_custom_call.1} parent=47 // pred_fallthru
          _
        // Predicated region
        $region57: #{tpu_custom_call.1} parent=47 // pred_check
          %p328 = pneg %p90
        $region58: #{tpu_custom_call.1} parent=47 // pred_check_branch
          %330 = sbr.rel (%p328) target = $region60
        $region59: #{tpu_custom_call.1} parent=47 // pred_region
          %331 = dma.done [#allocation10], 128
        $region60: #{tpu_custom_call.1} parent=47 // pred_fallthru
          _
        // Predicated region
        $region61: #{tpu_custom_call.1} parent=47 // pred_check
          %p332 = pneg %p111
        $region62: #{tpu_custom_call.1} parent=47 // pred_check_branch
          %334 = sbr.rel (%p332) target = $region64
        $region63: #{tpu_custom_call.1} parent=47 // pred_region
          %335 = dma.done [#allocation13], 512
        $region64: #{tpu_custom_call.1} parent=47 // pred_fallthru
          _
        // Predicated region
        $region65: #{tpu_custom_call.1} parent=47 // pred_check
          %p336 = pneg %p132
        $region66: #{tpu_custom_call.1} parent=47 // pred_check_branch
          %338 = sbr.rel (%p336) target = $region68
        $region67: #{tpu_custom_call.1} parent=47 // pred_region
          %339 = dma.done [#allocation13], 128
        $region68: #{tpu_custom_call.1} parent=47 // pred_fallthru
          _
        // Predicated region
        $region69: #{tpu_custom_call.1} parent=47 // pred_check
          %p340 = pneg %p153
        $region70: #{tpu_custom_call.1} parent=47 // pred_check_branch
          %342 = sbr.rel (%p340) target = $region72
        $region71: #{tpu_custom_call.1} parent=47 // pred_region
          %343 = dma.done [#allocation16], 256
        $region72: #{tpu_custom_call.1} parent=47 // pred_fallthru
          _
        // Predicated region
        $region73: #{tpu_custom_call.1} parent=47 // pred_check
          %p344 = pneg %p174
        $region74: #{tpu_custom_call.1} parent=47 // pred_check_branch
          %346 = sbr.rel (%p344) target = $region76
        $region75: #{tpu_custom_call.1} parent=47 // pred_region
          %347 = dma.done [#allocation16], 48
        $region76: #{tpu_custom_call.1} parent=47 // pred_fallthru
          _
        %s348 = sand.u32 %s35, 1
        %s349 = scalar_lea.sflag [#allocation7], %s348
        %s350 = sand.u32 %s35, 1
        %s351 = smul.addr %s350, 32
        %s352 = scalar_lea.vmem [#allocation6], %s351
        %p353 = pneg %p48
        %p354 = pneg %p45
        %p355 = pneg %p69
        %p356 = pneg %p66
        %p357 = pneg %p90
        %p358 = pneg %p87
        %p359 = pneg %p111
        %p360 = pneg %p108
        %p361 = pneg %p132
        %p362 = pneg %p129
        %p363 = pneg %p153
        %p364 = pneg %p150
        %p365 = pneg %p174
        %p366 = pneg %p171
        %p367 = pneg %p200
        %p368 = pneg %p197
        %s369 = sand.u32 %s187, 1
        %s370 = scalar_lea.sflag [#allocation8], %s369
        %s371 = sand.u32 %s187, 1
        %s372 = smul.addr %s371, 32
        %s373 = scalar_lea.vmem [#allocation18], %s372
        %374 = vst [vmem:[#allocation2] sm:$0xff] 0.0
        %375 = vst [vmem:[#allocation2 + $0x8] sm:$0xff] 0.0
        %376 = vst [vmem:[#allocation2 + $0x10] sm:$0xff] 0.0
        %vm377 = vcmask 949248
        %378 = vst.msk [vmem:[#allocation2 + $0x18] sm:$0xff] %vm377, 0.0
        %379 = vst [vmem:[#allocation2 + $0x20] sm:$0xff] 0.0
        %380 = vst [vmem:[#allocation2 + $0x28] sm:$0xff] 0.0
        %381 = vst [vmem:[#allocation2 + $0x30] sm:$0xff] 0.0
        %382 = vst.msk [vmem:[#allocation2 + $0x38] sm:$0xff] %vm377, 0.0
        %383 = vst [vmem:[#allocation3] sm:$0xff] 0.0
        %384 = vst [vmem:[#allocation3 + $0x8] sm:$0xff] 0.0
        %385 = vst [vmem:[#allocation3 + $0x10] sm:$0xff] 0.0
        %386 = vst.msk [vmem:[#allocation3 + $0x18] sm:$0xff] %vm377, 0.0
        %v387 = vld [vmem:[%s319] sm:$0xff]
        %v388 = vld [vmem:[%s319 + $0x8] sm:$0xff]
        %v389 = vld [vmem:[%s319 + $0x10] sm:$0xff]
        %v390 = vld [vmem:[%s319 + $0x18] sm:$0xff]
        %393 = vrot.lane.b32.xlu0 %v387, 77
        %v394 = vpop.permute.xlu0 %393
        %395 = vrot.lane.b32.xlu0 %v389, 77
        %v396 = vpop.permute.xlu0 %395
        %vm399 = vcmask 761448
        %400 = vst.msk [vmem:[#allocation2] sm:$0xff] %vm399, %v394
        %401 = vst.msk [vmem:[#allocation2 + $0x20] sm:$0xff] %vm399, %v396
        %402 = vrot.lane.b32.xlu0 %v387, 83
        %v403 = vpop.permute.xlu0 %402
        %404 = vrot.lane.b32.xlu0 %v389, 83
        %v405 = vpop.permute.xlu0 %404
        %vm408 = vcmask 941848
        %409 = vst.msk [vmem:[#allocation2] sm:$0xff] %vm408, %v403
        %410 = vst.msk [vmem:[#allocation2 + $0x20] sm:$0xff] %vm408, %v405
        %411 = vrot.lane.b32.xlu0 %v387, 89
        %v412 = vpop.permute.xlu0 %411
        %413 = vrot.lane.b32.xlu0 %v389, 89
        %v414 = vpop.permute.xlu0 %413
        %vm417 = vcmask 1048520
        %418 = vst.msk [vmem:[#allocation2] sm:$0xff] %vm417, %v412
        %vm419 = vcmask 72704
        %420 = vst.msk [vmem:[#allocation2 + $0x8] sm:$0xff] %vm419, %v412
        %421 = vst.msk [vmem:[#allocation2 + $0x20] sm:$0xff] %vm417, %v414
        %422 = vst.msk [vmem:[#allocation2 + $0x28] sm:$0xff] %vm419, %v414
        %423 = vrot.lane.b32.xlu0 %v387, 95
        %v424 = vpop.permute.xlu0 %423
        %425 = vrot.lane.b32.xlu0 %v389, 95
        %v426 = vpop.permute.xlu0 %425
        %vm429 = vcmask 253048
        %430 = vst.msk [vmem:[#allocation2 + $0x8] sm:$0xff] %vm429, %v424
        %431 = vst.msk [vmem:[#allocation2 + $0x28] sm:$0xff] %vm429, %v426
        %432 = vrot.lane.b32.xlu0 %v387, 101
        %v433 = vpop.permute.xlu0 %432
        %434 = vrot.lane.b32.xlu0 %v389, 101
        %v435 = vpop.permute.xlu0 %434
        %vm438 = vcmask 433448
        %439 = vst.msk [vmem:[#allocation2 + $0x8] sm:$0xff] %vm438, %v433
        %440 = vst.msk [vmem:[#allocation2 + $0x28] sm:$0xff] %vm438, %v435
        %441 = vrot.lane.b32.xlu0 %v387, 107
        %v442 = vpop.permute.xlu0 %441
        %443 = vrot.lane.b32.xlu0 %v389, 107
        %v444 = vpop.permute.xlu0 %443
        %vm447 = vcmask 613848
        %448 = vst.msk [vmem:[#allocation2 + $0x8] sm:$0xff] %vm447, %v442
        %449 = vst.msk [vmem:[#allocation2 + $0x28] sm:$0xff] %vm447, %v444
        %450 = vrot.lane.b32.xlu0 %v387, 113
        %v451 = vpop.permute.xlu0 %450
        %452 = vrot.lane.b32.xlu0 %v389, 113
        %v453 = vpop.permute.xlu0 %452
        %vm456 = vcmask 794248
        %457 = vst.msk [vmem:[#allocation2 + $0x8] sm:$0xff] %vm456, %v451
        %458 = vst.msk [vmem:[#allocation2 + $0x28] sm:$0xff] %vm456, %v453
        %459 = vrot.lane.b32.xlu0 %v387, 119
        %v460 = vpop.permute.xlu0 %459
        %461 = vrot.lane.b32.xlu0 %v389, 119
        %v462 = vpop.permute.xlu0 %461
        %vm465 = vcmask 974648
        %466 = vst.msk [vmem:[#allocation2 + $0x8] sm:$0xff] %vm465, %v460
        %467 = vst.msk [vmem:[#allocation2 + $0x28] sm:$0xff] %vm465, %v462
        %470 = vrot.lane.b32.xlu0 %v388, 125
        %v471 = vpop.permute.xlu0 %470
        %472 = vrot.lane.b32.xlu0 %v390, 125
        %v473 = vpop.permute.xlu0 %472
        %vm476 = vcmask 1048552
        %477 = vst.msk [vmem:[#allocation2 + $0x8] sm:$0xff] %vm476, %v471
        %vm478 = vcmask 105472
        %479 = vst.msk [vmem:[#allocation2 + $0x10] sm:$0xff] %vm478, %v471
        %480 = vst.msk [vmem:[#allocation2 + $0x28] sm:$0xff] %vm476, %v473
        %481 = vst.msk [vmem:[#allocation2 + $0x30] sm:$0xff] %vm478, %v473
        %482 = vrot.lane.b32.xlu0 %v388, 3
        %v483 = vpop.permute.xlu0 %482
        %484 = vrot.lane.b32.xlu0 %v390, 3
        %v485 = vpop.permute.xlu0 %484
        %vm488 = vcmask 285848
        %489 = vst.msk [vmem:[#allocation2 + $0x10] sm:$0xff] %vm488, %v483
        %490 = vst.msk [vmem:[#allocation2 + $0x30] sm:$0xff] %vm488, %v485
        %491 = vrot.lane.b32.xlu0 %v388, 9
        %v492 = vpop.permute.xlu0 %491
        %493 = vrot.lane.b32.xlu0 %v390, 9
        %v494 = vpop.permute.xlu0 %493
        %vm497 = vcmask 466248
        %498 = vst.msk [vmem:[#allocation2 + $0x10] sm:$0xff] %vm497, %v492
        %499 = vst.msk [vmem:[#allocation2 + $0x30] sm:$0xff] %vm497, %v494
        %500 = vrot.lane.b32.xlu0 %v388, 15
        %v501 = vpop.permute.xlu0 %500
        %502 = vrot.lane.b32.xlu0 %v390, 15
        %v503 = vpop.permute.xlu0 %502
        %vm506 = vcmask 646648
        %507 = vst.msk [vmem:[#allocation2 + $0x10] sm:$0xff] %vm506, %v501
        %508 = vst.msk [vmem:[#allocation2 + $0x30] sm:$0xff] %vm506, %v503
        %509 = vrot.lane.b32.xlu0 %v388, 21
        %v510 = vpop.permute.xlu0 %509
        %511 = vrot.lane.b32.xlu0 %v390, 21
        %v512 = vpop.permute.xlu0 %511
        %vm515 = vcmask 827048
        %516 = vst.msk [vmem:[#allocation2 + $0x10] sm:$0xff] %vm515, %v510
        %517 = vst.msk [vmem:[#allocation2 + $0x30] sm:$0xff] %vm515, %v512
        %518 = vrot.lane.b32.xlu0 %v388, 27
        %v519 = vpop.permute.xlu0 %518
        %520 = vrot.lane.b32.xlu0 %v390, 27
        %v521 = vpop.permute.xlu0 %520
        %vm524 = vcmask 1007448
        %525 = vst.msk [vmem:[#allocation2 + $0x10] sm:$0xff] %vm524, %v519
        %526 = vst.msk [vmem:[#allocation2 + $0x30] sm:$0xff] %vm524, %v521
        %527 = vrot.lane.b32.xlu0 %v388, 33
        %v528 = vpop.permute.xlu0 %527
        %529 = vrot.lane.b32.xlu0 %v390, 33
        %v530 = vpop.permute.xlu0 %529
        %vm533 = vcmask 138248
        %534 = vst.msk [vmem:[#allocation2 + $0x18] sm:$0xff] %vm533, %v528
        %535 = vst.msk [vmem:[#allocation2 + $0x38] sm:$0xff] %vm533, %v530
        %536 = vrot.lane.b32.xlu0 %v388, 39
        %v537 = vpop.permute.xlu0 %536
        %538 = vrot.lane.b32.xlu0 %v390, 39
        %v539 = vpop.permute.xlu0 %538
        %vm542 = vcmask 318648
        %543 = vst.msk [vmem:[#allocation2 + $0x18] sm:$0xff] %vm542, %v537
        %544 = vst.msk [vmem:[#allocation2 + $0x38] sm:$0xff] %vm542, %v539
        %v545 = vld [vmem:[#allocation2] sm:$0xff]
        %v546 = vld [vmem:[#allocation2 + $0x8] sm:$0xff]
        %v547 = vld [vmem:[#allocation2 + $0x10] sm:$0xff]
        %v548 = vld [vmem:[#allocation2 + $0x18] sm:$0xff]
        %v549 = vld [vmem:[#allocation2 + $0x20] sm:$0xff]
        %v550 = vld [vmem:[#allocation2 + $0x28] sm:$0xff]
        %v551 = vld [vmem:[#allocation2 + $0x30] sm:$0xff]
        %v552 = vld [vmem:[#allocation2 + $0x38] sm:$0xff]
        %561 = vrot.lane.b32.xlu0 %v545, 77
        %v562 = vpop.permute.xlu0 %561
        %563 = vrot.lane.b32.xlu0 %v546, 77
        %v564 = vpop.permute.xlu0 %563
        %565 = vrot.lane.b32.xlu0 %v547, 77
        %v566 = vpop.permute.xlu0 %565
        %567 = vrot.lane.b32.xlu0 %v548, 77
        %v568 = vpop.permute.xlu0 %567
        %569 = vrot.lane.b32.xlu0 %v549, 77
        %v570 = vpop.permute.xlu0 %569
        %571 = vrot.lane.b32.xlu0 %v550, 77
        %v572 = vpop.permute.xlu0 %571
        %573 = vrot.lane.b32.xlu0 %v551, 77
        %v574 = vpop.permute.xlu0 %573
        %575 = vrot.lane.b32.xlu0 %v552, 77
        %v576 = vpop.permute.xlu0 %575
        %vm577 = vcmask 629760
        %v578 = vsel %vm577, %v562, %v564
        %v579 = vsel %vm577, %v564, %v566
        %v580 = vsel %vm577, %v566, %v568
        %v581 = vsel %vm577, %v570, %v572
        %v582 = vsel %vm577, %v572, %v574
        %v583 = vsel %vm577, %v574, %v576
        %590 = vst [vmem:[#allocation4] sm:$0xff] %v578
        %591 = vst [vmem:[#allocation4 + $0x8] sm:$0xff] %v579
        %vm592 = vcmask 785408
        %593 = vst.msk [vmem:[#allocation4 + $0x10] sm:$0xff] %vm592, %v580
        %594 = vst [vmem:[#allocation4 + $0x18] sm:$0xff] %v581
        %595 = vst [vmem:[#allocation4 + $0x20] sm:$0xff] %v582
        %596 = vst.msk [vmem:[#allocation4 + $0x28] sm:$0xff] %vm592, %v583
        %v597 = vld [vmem:[#allocation2] sm:$0xff]
        %v598 = vld [vmem:[#allocation2 + $0x8] sm:$0xff]
        %v599 = vld [vmem:[#allocation2 + $0x10] sm:$0xff]
        %v600 = vld [vmem:[#allocation2 + $0x18] sm:$0xff]
        %v601 = vld [vmem:[#allocation2 + $0x20] sm:$0xff]
        %v602 = vld [vmem:[#allocation2 + $0x28] sm:$0xff]
        %v603 = vld [vmem:[#allocation2 + $0x30] sm:$0xff]
        %v604 = vld [vmem:[#allocation2 + $0x38] sm:$0xff]
        %613 = vrot.lane.b32.xlu0 %v597, 76
        %v614 = vpop.permute.xlu0 %613
        %615 = vrot.lane.b32.xlu0 %v598, 76
        %v616 = vpop.permute.xlu0 %615
        %617 = vrot.lane.b32.xlu0 %v599, 76
        %v618 = vpop.permute.xlu0 %617
        %619 = vrot.lane.b32.xlu0 %v600, 76
        %v620 = vpop.permute.xlu0 %619
        %621 = vrot.lane.b32.xlu0 %v601, 76
        %v622 = vpop.permute.xlu0 %621
        %623 = vrot.lane.b32.xlu0 %v602, 76
        %v624 = vpop.permute.xlu0 %623
        %625 = vrot.lane.b32.xlu0 %v603, 76
        %v626 = vpop.permute.xlu0 %625
        %627 = vrot.lane.b32.xlu0 %v604, 76
        %v628 = vpop.permute.xlu0 %627
        %vm629 = vcmask 621568
        %v630 = vsel %vm629, %v614, %v616
        %v631 = vsel %vm629, %v616, %v618
        %v632 = vsel %vm629, %v618, %v620
        %v633 = vsel %vm629, %v622, %v624
        %v634 = vsel %vm629, %v624, %v626
        %v635 = vsel %vm629, %v626, %v628
        %642 = vst [vmem:[#allocation4 + $0x30] sm:$0xff] %v630
        %643 = vst [vmem:[#allocation4 + $0x38] sm:$0xff] %v631
        %644 = vst.msk [vmem:[#allocation4 + $0x40] sm:$0xff] %vm592, %v632
        %645 = vst [vmem:[#allocation4 + $0x48] sm:$0xff] %v633
        %646 = vst [vmem:[#allocation4 + $0x50] sm:$0xff] %v634
        %647 = vst.msk [vmem:[#allocation4 + $0x58] sm:$0xff] %vm592, %v635
        %v648 = vld [vmem:[#allocation2] sm:$0xff]
        %v649 = vld [vmem:[#allocation2 + $0x8] sm:$0xff]
        %v650 = vld [vmem:[#allocation2 + $0x10] sm:$0xff]
        %v651 = vld [vmem:[#allocation2 + $0x18] sm:$0xff]
        %v652 = vld [vmem:[#allocation2 + $0x20] sm:$0xff]
        %v653 = vld [vmem:[#allocation2 + $0x28] sm:$0xff]
        %v654 = vld [vmem:[#allocation2 + $0x30] sm:$0xff]
        %v655 = vld [vmem:[#allocation2 + $0x38] sm:$0xff]
        %664 = vrot.lane.b32.xlu0 %v648, 75
        %v665 = vpop.permute.xlu0 %664
        %666 = vrot.lane.b32.xlu0 %v649, 75
        %v667 = vpop.permute.xlu0 %666
        %668 = vrot.lane.b32.xlu0 %v650, 75
        %v669 = vpop.permute.xlu0 %668
        %670 = vrot.lane.b32.xlu0 %v651, 75
        %v671 = vpop.permute.xlu0 %670
        %672 = vrot.lane.b32.xlu0 %v652, 75
        %v673 = vpop.permute.xlu0 %672
        %674 = vrot.lane.b32.xlu0 %v653, 75
        %v675 = vpop.permute.xlu0 %674
        %676 = vrot.lane.b32.xlu0 %v654, 75
        %v677 = vpop.permute.xlu0 %676
        %678 = vrot.lane.b32.xlu0 %v655, 75
        %v679 = vpop.permute.xlu0 %678
        %vm680 = vcmask 613376
        %v681 = vsel %vm680, %v665, %v667
        %v682 = vsel %vm680, %v667, %v669
        %v683 = vsel %vm680, %v669, %v671
        %v684 = vsel %vm680, %v673, %v675
        %v685 = vsel %vm680, %v675, %v677
        %v686 = vsel %vm680, %v677, %v679
        %693 = vst [vmem:[#allocation4 + $0x60] sm:$0xff] %v681
        %694 = vst [vmem:[#allocation4 + $0x68] sm:$0xff] %v682
        %695 = vst.msk [vmem:[#allocation4 + $0x70] sm:$0xff] %vm592, %v683
        %696 = vst [vmem:[#allocation4 + $0x78] sm:$0xff] %v684
        %697 = vst [vmem:[#allocation4 + $0x80] sm:$0xff] %v685
        %698 = vst.msk [vmem:[#allocation4 + $0x88] sm:$0xff] %vm592, %v686
        %v699 = vld [vmem:[#allocation2] sm:$0xff]
        %v700 = vld [vmem:[#allocation2 + $0x8] sm:$0xff]
        %v701 = vld [vmem:[#allocation2 + $0x10] sm:$0xff]
        %v702 = vld [vmem:[#allocation2 + $0x18] sm:$0xff]
        %v703 = vld [vmem:[#allocation2 + $0x20] sm:$0xff]
        %v704 = vld [vmem:[#allocation2 + $0x28] sm:$0xff]
        %v705 = vld [vmem:[#allocation2 + $0x30] sm:$0xff]
        %v706 = vld [vmem:[#allocation2 + $0x38] sm:$0xff]
        %715 = vrot.lane.b32.xlu0 %v699, 55
        %v716 = vpop.permute.xlu0 %715
        %717 = vrot.lane.b32.xlu0 %v700, 55
        %v718 = vpop.permute.xlu0 %717
        %719 = vrot.lane.b32.xlu0 %v701, 55
        %v720 = vpop.permute.xlu0 %719
        %721 = vrot.lane.b32.xlu0 %v702, 55
        %v722 = vpop.permute.xlu0 %721
        %723 = vrot.lane.b32.xlu0 %v703, 55
        %v724 = vpop.permute.xlu0 %723
        %725 = vrot.lane.b32.xlu0 %v704, 55
        %v726 = vpop.permute.xlu0 %725
        %727 = vrot.lane.b32.xlu0 %v705, 55
        %v728 = vpop.permute.xlu0 %727
        %729 = vrot.lane.b32.xlu0 %v706, 55
        %v730 = vpop.permute.xlu0 %729
        %vm731 = vcmask 449536
        %v732 = vsel %vm731, %v716, %v718
        %v733 = vsel %vm731, %v718, %v720
        %v734 = vsel %vm731, %v720, %v722
        %v735 = vsel %vm731, %v724, %v726
        %v736 = vsel %vm731, %v726, %v728
        %v737 = vsel %vm731, %v728, %v730
        %744 = vst [vmem:[#allocation4 + $0x90] sm:$0xff] %v732
        %745 = vst [vmem:[#allocation4 + $0x98] sm:$0xff] %v733
        %746 = vst.msk [vmem:[#allocation4 + $0xa0] sm:$0xff] %vm592, %v734
        %747 = vst [vmem:[#allocation4 + $0xa8] sm:$0xff] %v735
        %748 = vst [vmem:[#allocation4 + $0xb0] sm:$0xff] %v736
        %749 = vst.msk [vmem:[#allocation4 + $0xb8] sm:$0xff] %vm592, %v737
        %v750 = vld [vmem:[#allocation2] sm:$0xff]
        %v751 = vld [vmem:[#allocation2 + $0x8] sm:$0xff]
        %v752 = vld [vmem:[#allocation2 + $0x10] sm:$0xff]
        %v753 = vld [vmem:[#allocation2 + $0x18] sm:$0xff]
        %v754 = vld [vmem:[#allocation2 + $0x20] sm:$0xff]
        %v755 = vld [vmem:[#allocation2 + $0x28] sm:$0xff]
        %v756 = vld [vmem:[#allocation2 + $0x30] sm:$0xff]
        %v757 = vld [vmem:[#allocation2 + $0x38] sm:$0xff]
        %766 = vrot.lane.b32.xlu0 %v750, 54
        %v767 = vpop.permute.xlu0 %766
        %768 = vrot.lane.b32.xlu0 %v751, 54
        %v769 = vpop.permute.xlu0 %768
        %770 = vrot.lane.b32.xlu0 %v752, 54
        %v771 = vpop.permute.xlu0 %770
        %772 = vrot.lane.b32.xlu0 %v753, 54
        %v773 = vpop.permute.xlu0 %772
        %774 = vrot.lane.b32.xlu0 %v754, 54
        %v775 = vpop.permute.xlu0 %774
        %776 = vrot.lane.b32.xlu0 %v755, 54
        %v777 = vpop.permute.xlu0 %776
        %778 = vrot.lane.b32.xlu0 %v756, 54
        %v779 = vpop.permute.xlu0 %778
        %780 = vrot.lane.b32.xlu0 %v757, 54
        %v781 = vpop.permute.xlu0 %780
        %vm782 = vcmask 441344
        %v783 = vsel %vm782, %v767, %v769
        %v784 = vsel %vm782, %v769, %v771
        %v785 = vsel %vm782, %v771, %v773
        %v786 = vsel %vm782, %v775, %v777
        %v787 = vsel %vm782, %v777, %v779
        %v788 = vsel %vm782, %v779, %v781
        %795 = vst [vmem:[#allocation4 + $0xc0] sm:$0xff] %v783
        %796 = vst [vmem:[#allocation4 + $0xc8] sm:$0xff] %v784
        %797 = vst.msk [vmem:[#allocation4 + $0xd0] sm:$0xff] %vm592, %v785
        %798 = vst [vmem:[#allocation4 + $0xd8] sm:$0xff] %v786
        %799 = vst [vmem:[#allocation4 + $0xe0] sm:$0xff] %v787
        %800 = vst.msk [vmem:[#allocation4 + $0xe8] sm:$0xff] %vm592, %v788
        %v801 = vld [vmem:[#allocation2] sm:$0xff]
        %v802 = vld [vmem:[#allocation2 + $0x8] sm:$0xff]
        %v803 = vld [vmem:[#allocation2 + $0x10] sm:$0xff]
        %v804 = vld [vmem:[#allocation2 + $0x18] sm:$0xff]
        %v805 = vld [vmem:[#allocation2 + $0x20] sm:$0xff]
        %v806 = vld [vmem:[#allocation2 + $0x28] sm:$0xff]
        %v807 = vld [vmem:[#allocation2 + $0x30] sm:$0xff]
        %v808 = vld [vmem:[#allocation2 + $0x38] sm:$0xff]
        %817 = vrot.lane.b32.xlu0 %v801, 53
        %v818 = vpop.permute.xlu0 %817
        %819 = vrot.lane.b32.xlu0 %v802, 53
        %v820 = vpop.permute.xlu0 %819
        %821 = vrot.lane.b32.xlu0 %v803, 53
        %v822 = vpop.permute.xlu0 %821
        %823 = vrot.lane.b32.xlu0 %v804, 53
        %v824 = vpop.permute.xlu0 %823
        %825 = vrot.lane.b32.xlu0 %v805, 53
        %v826 = vpop.permute.xlu0 %825
        %827 = vrot.lane.b32.xlu0 %v806, 53
        %v828 = vpop.permute.xlu0 %827
        %829 = vrot.lane.b32.xlu0 %v807, 53
        %v830 = vpop.permute.xlu0 %829
        %831 = vrot.lane.b32.xlu0 %v808, 53
        %v832 = vpop.permute.xlu0 %831
        %vm833 = vcmask 433152
        %v834 = vsel %vm833, %v818, %v820
        %v835 = vsel %vm833, %v820, %v822
        %v836 = vsel %vm833, %v822, %v824
        %v837 = vsel %vm833, %v826, %v828
        %v838 = vsel %vm833, %v828, %v830
        %v839 = vsel %vm833, %v830, %v832
        %846 = vst [vmem:[#allocation4 + $0xf0] sm:$0xff] %v834
        %847 = vst [vmem:[#allocation4 + $0xf8] sm:$0xff] %v835
        %848 = vst.msk [vmem:[#allocation4 + $0x100] sm:$0xff] %vm592, %v836
        %849 = vst [vmem:[#allocation4 + $0x108] sm:$0xff] %v837
        %850 = vst [vmem:[#allocation4 + $0x110] sm:$0xff] %v838
        %851 = vst.msk [vmem:[#allocation4 + $0x118] sm:$0xff] %vm592, %v839
        %v852 = vld [vmem:[#allocation2] sm:$0xff]
        %v853 = vld [vmem:[#allocation2 + $0x8] sm:$0xff]
        %v854 = vld [vmem:[#allocation2 + $0x10] sm:$0xff]
        %v855 = vld [vmem:[#allocation2 + $0x18] sm:$0xff]
        %v856 = vld [vmem:[#allocation2 + $0x20] sm:$0xff]
        %v857 = vld [vmem:[#allocation2 + $0x28] sm:$0xff]
        %v858 = vld [vmem:[#allocation2 + $0x30] sm:$0xff]
        %v859 = vld [vmem:[#allocation2 + $0x38] sm:$0xff]
        %868 = vrot.lane.b32.xlu0 %v852, 33
        %v869 = vpop.permute.xlu0 %868
        %870 = vrot.lane.b32.xlu0 %v853, 33
        %v871 = vpop.permute.xlu0 %870
        %872 = vrot.lane.b32.xlu0 %v854, 33
        %v873 = vpop.permute.xlu0 %872
        %874 = vrot.lane.b32.xlu0 %v855, 33
        %v875 = vpop.permute.xlu0 %874
        %876 = vrot.lane.b32.xlu0 %v856, 33
        %v877 = vpop.permute.xlu0 %876
        %878 = vrot.lane.b32.xlu0 %v857, 33
        %v879 = vpop.permute.xlu0 %878
        %880 = vrot.lane.b32.xlu0 %v858, 33
        %v881 = vpop.permute.xlu0 %880
        %882 = vrot.lane.b32.xlu0 %v859, 33
        %v883 = vpop.permute.xlu0 %882
        %vm884 = vcmask 269312
        %v885 = vsel %vm884, %v869, %v871
        %v886 = vsel %vm884, %v871, %v873
        %v887 = vsel %vm884, %v873, %v875
        %v888 = vsel %vm884, %v877, %v879
        %v889 = vsel %vm884, %v879, %v881
        %v890 = vsel %vm884, %v881, %v883
        %897 = vst [vmem:[#allocation4 + $0x120] sm:$0xff] %v885
        %898 = vst [vmem:[#allocation4 + $0x128] sm:$0xff] %v886
        %899 = vst.msk [vmem:[#allocation4 + $0x130] sm:$0xff] %vm592, %v887
        %900 = vst [vmem:[#allocation4 + $0x138] sm:$0xff] %v888
        %901 = vst [vmem:[#allocation4 + $0x140] sm:$0xff] %v889
        %902 = vst.msk [vmem:[#allocation4 + $0x148] sm:$0xff] %vm592, %v890
        %v903 = vld [vmem:[#allocation2] sm:$0xff]
        %v904 = vld [vmem:[#allocation2 + $0x8] sm:$0xff]
        %v905 = vld [vmem:[#allocation2 + $0x10] sm:$0xff]
        %v906 = vld [vmem:[#allocation2 + $0x18] sm:$0xff]
        %v907 = vld [vmem:[#allocation2 + $0x20] sm:$0xff]
        %v908 = vld [vmem:[#allocation2 + $0x28] sm:$0xff]
        %v909 = vld [vmem:[#allocation2 + $0x30] sm:$0xff]
        %v910 = vld [vmem:[#allocation2 + $0x38] sm:$0xff]
        %919 = vrot.lane.b32.xlu0 %v903, 32
        %v920 = vpop.permute.xlu0 %919
        %921 = vrot.lane.b32.xlu0 %v904, 32
        %v922 = vpop.permute.xlu0 %921
        %923 = vrot.lane.b32.xlu0 %v905, 32
        %v924 = vpop.permute.xlu0 %923
        %925 = vrot.lane.b32.xlu0 %v906, 32
        %v926 = vpop.permute.xlu0 %925
        %927 = vrot.lane.b32.xlu0 %v907, 32
        %v928 = vpop.permute.xlu0 %927
        %929 = vrot.lane.b32.xlu0 %v908, 32
        %v930 = vpop.permute.xlu0 %929
        %931 = vrot.lane.b32.xlu0 %v909, 32
        %v932 = vpop.permute.xlu0 %931
        %933 = vrot.lane.b32.xlu0 %v910, 32
        %v934 = vpop.permute.xlu0 %933
        %vm935 = vcmask 261120
        %v936 = vsel %vm935, %v920, %v922
        %v937 = vsel %vm935, %v922, %v924
        %v938 = vsel %vm935, %v924, %v926
        %v939 = vsel %vm935, %v928, %v930
        %v940 = vsel %vm935, %v930, %v932
        %v941 = vsel %vm935, %v932, %v934
        %948 = vst [vmem:[#allocation4 + $0x150] sm:$0xff] %v936
        %949 = vst [vmem:[#allocation4 + $0x158] sm:$0xff] %v937
        %950 = vst.msk [vmem:[#allocation4 + $0x160] sm:$0xff] %vm592, %v938
        %951 = vst [vmem:[#allocation4 + $0x168] sm:$0xff] %v939
        %952 = vst [vmem:[#allocation4 + $0x170] sm:$0xff] %v940
        %953 = vst.msk [vmem:[#allocation4 + $0x178] sm:$0xff] %vm592, %v941
        %v954 = vld [vmem:[#allocation2] sm:$0xff]
        %v955 = vld [vmem:[#allocation2 + $0x8] sm:$0xff]
        %v956 = vld [vmem:[#allocation2 + $0x10] sm:$0xff]
        %v957 = vld [vmem:[#allocation2 + $0x18] sm:$0xff]
        %v958 = vld [vmem:[#allocation2 + $0x20] sm:$0xff]
        %v959 = vld [vmem:[#allocation2 + $0x28] sm:$0xff]
        %v960 = vld [vmem:[#allocation2 + $0x30] sm:$0xff]
        %v961 = vld [vmem:[#allocation2 + $0x38] sm:$0xff]
        %970 = vrot.lane.b32.xlu0 %v954, 31
        %v971 = vpop.permute.xlu0 %970
        %972 = vrot.lane.b32.xlu0 %v955, 31
        %v973 = vpop.permute.xlu0 %972
        %974 = vrot.lane.b32.xlu0 %v956, 31
        %v975 = vpop.permute.xlu0 %974
        %976 = vrot.lane.b32.xlu0 %v957, 31
        %v977 = vpop.permute.xlu0 %976
        %978 = vrot.lane.b32.xlu0 %v958, 31
        %v979 = vpop.permute.xlu0 %978
        %980 = vrot.lane.b32.xlu0 %v959, 31
        %v981 = vpop.permute.xlu0 %980
        %982 = vrot.lane.b32.xlu0 %v960, 31
        %v983 = vpop.permute.xlu0 %982
        %984 = vrot.lane.b32.xlu0 %v961, 31
        %v985 = vpop.permute.xlu0 %984
        %vm986 = vcmask 252928
        %v987 = vsel %vm986, %v971, %v973
        %v988 = vsel %vm986, %v973, %v975
        %v989 = vsel %vm986, %v975, %v977
        %v990 = vsel %vm986, %v979, %v981
        %v991 = vsel %vm986, %v981, %v983
        %v992 = vsel %vm986, %v983, %v985
        %999 = vst [vmem:[#allocation4 + $0x180] sm:$0xff] %v987
        %1000 = vst [vmem:[#allocation4 + $0x188] sm:$0xff] %v988
        %1001 = vst.msk [vmem:[#allocation4 + $0x190] sm:$0xff] %vm592, %v989
        %1002 = vst [vmem:[#allocation4 + $0x198] sm:$0xff] %v990
        %1003 = vst [vmem:[#allocation4 + $0x1a0] sm:$0xff] %v991
        %1004 = vst.msk [vmem:[#allocation4 + $0x1a8] sm:$0xff] %vm592, %v992
        %v1005 = vld [vmem:[#allocation9] sm:$0xff]
        %v1006 = vld [vmem:[#allocation9 + $0x8] sm:$0xff]
        %v1007 = vld [vmem:[#allocation4] sm:$0xff]
        %v1008 = vld [vmem:[#allocation4 + $0x8] sm:$0xff]
        %v1009 = vld [vmem:[#allocation4 + $0x10] sm:$0xff]
        %v1010 = vld [vmem:[#allocation4 + $0x18] sm:$0xff]
        %v1011 = vld [vmem:[#allocation4 + $0x20] sm:$0xff]
        %v1012 = vld [vmem:[#allocation4 + $0x28] sm:$0xff]
        %v1013 = vld [vmem:[#allocation4 + $0x30] sm:$0xff]
        %v1014 = vld [vmem:[#allocation4 + $0x38] sm:$0xff]
        %v1015 = vld [vmem:[#allocation4 + $0x40] sm:$0xff]
        %v1016 = vld [vmem:[#allocation4 + $0x48] sm:$0xff]
        %v1017 = vld [vmem:[#allocation4 + $0x50] sm:$0xff]
        %v1018 = vld [vmem:[#allocation4 + $0x58] sm:$0xff]
        %v1019 = vld [vmem:[#allocation4 + $0x60] sm:$0xff]
        %v1020 = vld [vmem:[#allocation4 + $0x68] sm:$0xff]
        %v1021 = vld [vmem:[#allocation4 + $0x70] sm:$0xff]
        %v1022 = vld [vmem:[#allocation4 + $0x78] sm:$0xff]
        %v1023 = vld [vmem:[#allocation4 + $0x80] sm:$0xff]
        %v1024 = vld [vmem:[#allocation4 + $0x88] sm:$0xff]
        %v1025 = vld [vmem:[#allocation4 + $0x90] sm:$0xff]
        %v1026 = vld [vmem:[#allocation4 + $0x98] sm:$0xff]
        %v1027 = vld [vmem:[#allocation4 + $0xa0] sm:$0xff]
        %v1028 = vld [vmem:[#allocation4 + $0xa8] sm:$0xff]
        %v1029 = vld [vmem:[#allocation4 + $0xb0] sm:$0xff]
        %v1030 = vld [vmem:[#allocation4 + $0xb8] sm:$0xff]
        %v1031 = vld [vmem:[#allocation4 + $0xc0] sm:$0xff]
        %v1032 = vld [vmem:[#allocation4 + $0xc8] sm:$0xff]
        %v1033 = vld [vmem:[#allocation4 + $0xd0] sm:$0xff]
        %v1034 = vld [vmem:[#allocation4 + $0xd8] sm:$0xff]
        %v1035 = vld [vmem:[#allocation4 + $0xe0] sm:$0xff]
        %v1036 = vld [vmem:[#allocation4 + $0xe8] sm:$0xff]
        %v1037 = vld [vmem:[#allocation4 + $0xf0] sm:$0xff]
        %v1038 = vld [vmem:[#allocation4 + $0xf8] sm:$0xff]
        %v1039 = vld [vmem:[#allocation4 + $0x100] sm:$0xff]
        %v1040 = vld [vmem:[#allocation4 + $0x108] sm:$0xff]
        %v1041 = vld [vmem:[#allocation4 + $0x110] sm:$0xff]
        %v1042 = vld [vmem:[#allocation4 + $0x118] sm:$0xff]
        %v1043 = vld [vmem:[#allocation4 + $0x120] sm:$0xff]
        %v1044 = vld [vmem:[#allocation4 + $0x128] sm:$0xff]
        %v1045 = vld [vmem:[#allocation4 + $0x130] sm:$0xff]
        %v1046 = vld [vmem:[#allocation4 + $0x138] sm:$0xff]
        %v1047 = vld [vmem:[#allocation4 + $0x140] sm:$0xff]
        %v1048 = vld [vmem:[#allocation4 + $0x148] sm:$0xff]
        %v1049 = vld [vmem:[#allocation4 + $0x150] sm:$0xff]
        %v1050 = vld [vmem:[#allocation4 + $0x158] sm:$0xff]
        %v1051 = vld [vmem:[#allocation4 + $0x160] sm:$0xff]
        %v1052 = vld [vmem:[#allocation4 + $0x168] sm:$0xff]
        %v1053 = vld [vmem:[#allocation4 + $0x170] sm:$0xff]
        %v1054 = vld [vmem:[#allocation4 + $0x178] sm:$0xff]
        %v1055 = vld [vmem:[#allocation4 + $0x180] sm:$0xff]
        %v1056 = vld [vmem:[#allocation4 + $0x188] sm:$0xff]
        %v1057 = vld [vmem:[#allocation4 + $0x190] sm:$0xff]
        %v1058 = vld [vmem:[#allocation4 + $0x198] sm:$0xff]
        %v1059 = vld [vmem:[#allocation4 + $0x1a0] sm:$0xff]
        %v1060 = vld [vmem:[#allocation4 + $0x1a8] sm:$0xff]
        %v1061 = vld [vmem:[#allocation11] sm:$0xff]
        %1063 = vset.pattern.permute.xlu0 0
        %1064 = vperm.xlu0 %1063, %v1061
        %v1065 = vpop.permute.xlu0 %1064
        %vm1067 = vcmask 130048
        %v1069 = vsel %vm1067, %v1006, 0
        %1071 = vmatprep.subr.mxu0 %v1008
        %1072 = vmatpush1.msra.mxu0 %v1007
        %1073 = vmatprep.subr.mxu0 %v1011
        %1074 = vmatpush1.msra.mxu0 %v1010
        %1075 = vmatprep.subr.mxu0 %v1014
        %1076 = vmatpush1.msra.mxu0 %v1013
        %1077 = vmatprep.subr.mxu0 %v1017
        %1078 = vmatpush1.msra.mxu0 %v1016
        %1079 = vmatprep.subr.mxu0 %v1020
        %1080 = vmatpush1.msra.mxu0 %v1019
        %1081 = vmatprep.subr.mxu0 %v1023
        %1082 = vmatpush1.msra.mxu0 %v1022
        %1083 = vmatprep.subr.mxu0 %v1026
        %1084 = vmatpush1.msra.mxu0 %v1025
        %1085 = vmatprep.subr.mxu0 %v1029
        %1086 = vmatpush1.msra.mxu0 %v1028
        %1087 = vmatprep.subr.mxu0 %v1032
        %1088 = vmatpush1.msra.mxu0 %v1031
        %1089 = vmatprep.subr.mxu0 %v1035
        %1090 = vmatpush1.msra.mxu0 %v1034
        %1091 = vmatprep.subr.mxu0 %v1038
        %1092 = vmatpush1.msra.mxu0 %v1037
        %1093 = vmatprep.subr.mxu0 %v1041
        %1094 = vmatpush1.msra.mxu0 %v1040
        %1095 = vmatprep.subr.mxu0 %v1044
        %1096 = vmatpush1.msra.mxu0 %v1043
        %1097 = vmatprep.subr.mxu0 %v1047
        %1098 = vmatpush1.msra.mxu0 %v1046
        %1099 = vmatprep.subr.mxu0 %v1050
        %1100 = vmatpush1.msra.mxu0 %v1049
        %1101 = vmatprep.subr.mxu0 %v1053
        %1102 = vmatpush1.msra.mxu0 %v1052
        %1103 = vmatprep.subr.mxu0 %v1056
        %1104 = vmatpush1.msra.mxu0 %v1055
        %1105 = vmatprep.subr.mxu0 %v1059
        %1106 = vmatpush1.msra.mxu0 %v1058
        %1107 = vmatprep.subr.mxu0 0.0
        %1108 = vmatpush1.msra.mxu0 0.0
        %1109 = vmatprep.subr.mxu0 0.0
        %1110 = vmatpush1.msra.mxu0 0.0
        %1111 = vmatprep.subr.mxu0 0.0
        %1112 = vmatpush1.msra.mxu0 0.0
        %1113 = vmatprep.subr.mxu0 0.0
        %1114 = vmatpush1.msra.mxu0 0.0
        %1115 = vmatprep.subr.mxu0 0.0
        %1116 = vmatpush1.msra.mxu0 0.0
        %1117 = vmatprep.subr.mxu0 0.0
        %1118 = vmatpush1.msra.mxu0 0.0
        %1119 = vmatprep.subr.mxu0 0.0
        %1120 = vmatpush1.msra.mxu0 0.0
        %1121 = vmatprep.subr.mxu0 0.0
        %1122 = vmatpush1.msra.mxu0 0.0
        %1123 = vmatprep.subr.mxu0 0.0
        %1124 = vmatpush1.msra.mxu0 0.0
        %1125 = vmatprep.subr.mxu0 0.0
        %1126 = vmatpush1.msra.mxu0 0.0
        %1127 = vmatprep.subr.mxu0 0.0
        %1128 = vmatpush1.msra.mxu0 0.0
        %1129 = vmatprep.subr.mxu0 0.0
        %1130 = vmatpush1.msra.mxu0 0.0
        %1131 = vmatprep.subr.mxu0 0.0
        %1132 = vmatpush1.msra.mxu0 0.0
        %1133 = vmatprep.subr.mxu0 0.0
        %1134 = vmatpush1.msra.mxu0 0.0
        %1135 = vmatprep.mubr.f32.mxu0 %v1069
        %1136 = vmatmul.mubr.f32.gmra.mrb[0].mxu0 %v1005
        %v1137 = vpop.f32.mrb[0].mxu0
        %v1138 = vadd.f32 %v1065, %v1137
        %v1139 = vpop.f32.mrb[0].mxu0
        %v1140 = vadd.f32 %v1065, %v1139
        %1141 = vdwg.mxu0
        %1142 = vmatprep.subr.mxu0 0.0
        %1143 = vmatpush1.msra.mxu0 %v1009
        %1144 = vmatprep.subr.mxu0 0.0
        %1145 = vmatpush1.msra.mxu0 %v1012
        %1146 = vmatprep.subr.mxu0 0.0
        %1147 = vmatpush1.msra.mxu0 %v1015
        %1148 = vmatprep.subr.mxu0 0.0
        %1149 = vmatpush1.msra.mxu0 %v1018
        %1150 = vmatprep.subr.mxu0 0.0
        %1151 = vmatpush1.msra.mxu0 %v1021
        %1152 = vmatprep.subr.mxu0 0.0
        %1153 = vmatpush1.msra.mxu0 %v1024
        %1154 = vmatprep.subr.mxu0 0.0
        %1155 = vmatpush1.msra.mxu0 %v1027
        %1156 = vmatprep.subr.mxu0 0.0
        %1157 = vmatpush1.msra.mxu0 %v1030
        %1158 = vmatprep.subr.mxu0 0.0
        %1159 = vmatpush1.msra.mxu0 %v1033
        %1160 = vmatprep.subr.mxu0 0.0
        %1161 = vmatpush1.msra.mxu0 %v1036
        %1162 = vmatprep.subr.mxu0 0.0
        %1163 = vmatpush1.msra.mxu0 %v1039
        %1164 = vmatprep.subr.mxu0 0.0
        %1165 = vmatpush1.msra.mxu0 %v1042
        %1166 = vmatprep.subr.mxu0 0.0
        %1167 = vmatpush1.msra.mxu0 %v1045
        %1168 = vmatprep.subr.mxu0 0.0
        %1169 = vmatpush1.msra.mxu0 %v1048
        %1170 = vmatprep.subr.mxu0 0.0
        %1171 = vmatpush1.msra.mxu0 %v1051
        %1172 = vmatprep.subr.mxu0 0.0
        %1173 = vmatpush1.msra.mxu0 %v1054
        %1174 = vmatprep.subr.mxu0 0.0
        %1175 = vmatpush1.msra.mxu0 %v1057
        %1176 = vmatprep.subr.mxu0 0.0
        %1177 = vmatpush1.msra.mxu0 %v1060
        %1178 = vmatprep.subr.mxu0 0.0
        %1179 = vmatpush1.msra.mxu0 0.0
        %1180 = vmatprep.subr.mxu0 0.0
        %1181 = vmatpush1.msra.mxu0 0.0
        %1182 = vmatprep.subr.mxu0 0.0
        %1183 = vmatpush1.msra.mxu0 0.0
        %1184 = vmatprep.subr.mxu0 0.0
        %1185 = vmatpush1.msra.mxu0 0.0
        %1186 = vmatprep.subr.mxu0 0.0
        %1187 = vmatpush1.msra.mxu0 0.0
        %1188 = vmatprep.subr.mxu0 0.0
        %1189 = vmatpush1.msra.mxu0 0.0
        %1190 = vmatprep.subr.mxu0 0.0
        %1191 = vmatpush1.msra.mxu0 0.0
        %1192 = vmatprep.subr.mxu0 0.0
        %1193 = vmatpush1.msra.mxu0 0.0
        %1194 = vmatprep.subr.mxu0 0.0
        %1195 = vmatpush1.msra.mxu0 0.0
        %1196 = vmatprep.subr.mxu0 0.0
        %1197 = vmatpush1.msra.mxu0 0.0
        %1198 = vmatprep.subr.mxu0 0.0
        %1199 = vmatpush1.msra.mxu0 0.0
        %1200 = vmatprep.subr.mxu0 0.0
        %1201 = vmatpush1.msra.mxu0 0.0
        %1202 = vmatprep.subr.mxu0 0.0
        %1203 = vmatpush1.msra.mxu0 0.0
        %1204 = vmatprep.subr.mxu0 0.0
        %1205 = vmatpush1.msra.mxu0 0.0
        %1206 = vmatprep.mubr.f32.mxu0 %v1069
        %1207 = vmatmul.mubr.f32.gmra.mrb[0].mxu0 %v1005
        %v1208 = vpop.f32.mrb[0].mxu0
        %v1209 = vadd.f32 %v1065, %v1208
        %v1210 = vpop.f32.mrb[0].mxu0
        %1211 = vdwg.mxu0
        %v1212 = vxor.u32 %v1138, 2147483648
        %v1213 = vxor.u32 %v1140, 2147483648
        %v1214 = vxor.u32 %v1209, 2147483648
        %v1215 = vmul.f32 %v1212, 1.442695
        %v1216 = vpow.pop %v1215
        %v1217 = vmul.f32 %v1213, 1.442695
        %v1218 = vpow.pop %v1217
        %v1219 = vmul.f32 %v1214, 1.442695
        %v1220 = vpow.pop %v1219
        %v1221 = vadd.f32 %v1216, 1.0
        %v1222 = vadd.f32 %v1218, 1.0
        %v1223 = vadd.f32 %v1220, 1.0
        %v1224 = vrcp.pop %v1221
        %v1225 = vmul.f32 1.0, %v1224
        %v1226 = vrcp.pop %v1222
        %v1227 = vmul.f32 1.0, %v1226
        %v1228 = vrcp.pop %v1223
        %v1229 = vmul.f32 1.0, %v1228
        %v1230 = vmul.f32 %v1138, %v1225
        %v1231 = vmul.f32 %v1140, %v1227
        %v1232 = vmul.f32 %v1209, %v1229
        %v1233 = vld [vmem:[#allocation17] sm:$0x7]
        %v1235 = vlaneseq
        %v1236 = vshrl.u32 %v1235, 7
        %v1237 = vsub.s32 0, %v1236
        %v1238 = vrot.slane %v1233, %v1237
        %v1239 = vlaneseq
        %v1240 = vshrl.u32 %v1239, 7
        %v1241 = vsub.s32 1, %v1240
        %v1242 = vrot.slane %v1233, %v1241
        %v1243 = vlaneseq
        %v1244 = vshrl.u32 %v1243, 7
        %v1245 = vsub.s32 2, %v1244
        %v1246 = vrot.slane %v1233, %v1245
        %v1250 = vmul.f32 %v1230, %v1238
        %v1251 = vmul.f32 %v1231, %v1242
        %v1252 = vmul.f32 %v1232, %v1246
        %1256 = vrot.lane.b32.xlu0 %v1250, 74
        %v1257 = vpop.permute.xlu0 %1256
        %1258 = vrot.lane.b32.xlu0 %v1251, 74
        %v1259 = vpop.permute.xlu0 %1258
        %1260 = vrot.lane.b32.xlu0 %v1252, 74
        %v1261 = vpop.permute.xlu0 %1260
        %vm1262 = vcmask 605184
        %v1263 = vsel %vm1262, %v1257, %v1259
        %v1264 = vsel %vm1262, %v1259, %v1261
        %vm1269 = vcmask 1048144
        %1270 = vst.msk [vmem:[#allocation3] sm:$0xff] %vm1269, %v1257
        %1271 = vst [vmem:[#allocation3 + $0x8] sm:$0xff] %v1263
        %1272 = vst [vmem:[#allocation3 + $0x10] sm:$0xff] %v1264
        %vm1273 = vcmask 343040
        %1274 = vst.msk [vmem:[#allocation3 + $0x18] sm:$0xff] %vm1273, %v1261
        %v1275 = vld [vmem:[#allocation3] sm:$0xff]
        %v1276 = vld [vmem:[#allocation3 + $0x8] sm:$0xff]
        %v1277 = vld [vmem:[#allocation3 + $0x10] sm:$0xff]
        %1281 = vrot.lane.b32.xlu0 %v1275, 123
        %v1282 = vpop.permute.xlu0 %1281
        %1283 = vrot.lane.b32.xlu0 %v1276, 123
        %v1284 = vpop.permute.xlu0 %1283
        %1285 = vrot.lane.b32.xlu0 %v1277, 123
        %v1286 = vpop.permute.xlu0 %1285
        %vm1287 = vcmask 1006592
        %v1288 = vsel %vm1287, %v1282, %v1284
        %v1289 = vsel %vm1287, %v1284, %v1286
        %1293 = vst [vmem:[#allocation5] sm:$0xff] %v1288
        %1294 = vst [vmem:[#allocation5 + $0x8] sm:$0xff] %v1289
        %1295 = vst.msk [vmem:[#allocation5 + $0x10] sm:$0xff] %vm592, %v1286
        %v1296 = vld [vmem:[#allocation3] sm:$0xff]
        %v1297 = vld [vmem:[#allocation3 + $0x8] sm:$0xff]
        %v1298 = vld [vmem:[#allocation3 + $0x10] sm:$0xff]
        %1302 = vrot.lane.b32.xlu0 %v1296, 122
        %v1303 = vpop.permute.xlu0 %1302
        %1304 = vrot.lane.b32.xlu0 %v1297, 122
        %v1305 = vpop.permute.xlu0 %1304
        %1306 = vrot.lane.b32.xlu0 %v1298, 122
        %v1307 = vpop.permute.xlu0 %1306
        %vm1308 = vcmask 998400
        %v1309 = vsel %vm1308, %v1303, %v1305
        %v1310 = vsel %vm1308, %v1305, %v1307
        %1314 = vst [vmem:[#allocation5 + $0x18] sm:$0xff] %v1309
        %1315 = vst [vmem:[#allocation5 + $0x20] sm:$0xff] %v1310
        %1316 = vst.msk [vmem:[#allocation5 + $0x28] sm:$0xff] %vm592, %v1307
        %v1317 = vld [vmem:[#allocation3] sm:$0xff]
        %v1318 = vld [vmem:[#allocation3 + $0x8] sm:$0xff]
        %v1319 = vld [vmem:[#allocation3 + $0x10] sm:$0xff]
        %1323 = vrot.lane.b32.xlu0 %v1317, 121
        %v1324 = vpop.permute.xlu0 %1323
        %1325 = vrot.lane.b32.xlu0 %v1318, 121
        %v1326 = vpop.permute.xlu0 %1325
        %1327 = vrot.lane.b32.xlu0 %v1319, 121
        %v1328 = vpop.permute.xlu0 %1327
        %vm1329 = vcmask 990208
        %v1330 = vsel %vm1329, %v1324, %v1326
        %v1331 = vsel %vm1329, %v1326, %v1328
        %1335 = vst [vmem:[#allocation5 + $0x30] sm:$0xff] %v1330
        %1336 = vst [vmem:[#allocation5 + $0x38] sm:$0xff] %v1331
        %1337 = vst.msk [vmem:[#allocation5 + $0x40] sm:$0xff] %vm592, %v1328
        %v1338 = vld [vmem:[#allocation3] sm:$0xff]
        %v1339 = vld [vmem:[#allocation3 + $0x8] sm:$0xff]
        %v1340 = vld [vmem:[#allocation3 + $0x10] sm:$0xff]
        %1344 = vrot.lane.b32.xlu0 %v1338, 120
        %v1345 = vpop.permute.xlu0 %1344
        %1346 = vrot.lane.b32.xlu0 %v1339, 120
        %v1347 = vpop.permute.xlu0 %1346
        %1348 = vrot.lane.b32.xlu0 %v1340, 120
        %v1349 = vpop.permute.xlu0 %1348
        %vm1350 = vcmask 982016
        %v1351 = vsel %vm1350, %v1345, %v1347
        %v1352 = vsel %vm1350, %v1347, %v1349
        %1356 = vst [vmem:[#allocation5 + $0x48] sm:$0xff] %v1351
        %1357 = vst [vmem:[#allocation5 + $0x50] sm:$0xff] %v1352
        %1358 = vst.msk [vmem:[#allocation5 + $0x58] sm:$0xff] %vm592, %v1349
        %v1359 = vld [vmem:[#allocation3] sm:$0xff]
        %v1360 = vld [vmem:[#allocation3 + $0x8] sm:$0xff]
        %v1361 = vld [vmem:[#allocation3 + $0x10] sm:$0xff]
        %1365 = vrot.lane.b32.xlu0 %v1359, 119
        %v1366 = vpop.permute.xlu0 %1365
        %1367 = vrot.lane.b32.xlu0 %v1360, 119
        %v1368 = vpop.permute.xlu0 %1367
        %1369 = vrot.lane.b32.xlu0 %v1361, 119
        %v1370 = vpop.permute.xlu0 %1369
        %vm1371 = vcmask 973824
        %v1372 = vsel %vm1371, %v1366, %v1368
        %v1373 = vsel %vm1371, %v1368, %v1370
        %1377 = vst [vmem:[#allocation5 + $0x60] sm:$0xff] %v1372
        %1378 = vst [vmem:[#allocation5 + $0x68] sm:$0xff] %v1373
        %1379 = vst.msk [vmem:[#allocation5 + $0x70] sm:$0xff] %vm592, %v1370
        %v1380 = vld [vmem:[#allocation3] sm:$0xff]
        %v1381 = vld [vmem:[#allocation3 + $0x8] sm:$0xff]
        %v1382 = vld [vmem:[#allocation3 + $0x10] sm:$0xff]
        %1386 = vrot.lane.b32.xlu0 %v1380, 118
        %v1387 = vpop.permute.xlu0 %1386
        %1388 = vrot.lane.b32.xlu0 %v1381, 118
        %v1389 = vpop.permute.xlu0 %1388
        %1390 = vrot.lane.b32.xlu0 %v1382, 118
        %v1391 = vpop.permute.xlu0 %1390
        %vm1392 = vcmask 965632
        %v1393 = vsel %vm1392, %v1387, %v1389
        %v1394 = vsel %vm1392, %v1389, %v1391
        %1398 = vst [vmem:[#allocation5 + $0x78] sm:$0xff] %v1393
        %1399 = vst [vmem:[#allocation5 + $0x80] sm:$0xff] %v1394
        %1400 = vst.msk [vmem:[#allocation5 + $0x88] sm:$0xff] %vm592, %v1391
        %v1401 = vld [vmem:[#allocation3] sm:$0xff]
        %v1402 = vld [vmem:[#allocation3 + $0x8] sm:$0xff]
        %v1403 = vld [vmem:[#allocation3 + $0x10] sm:$0xff]
        %1407 = vrot.lane.b32.xlu0 %v1401, 117
        %v1408 = vpop.permute.xlu0 %1407
        %1409 = vrot.lane.b32.xlu0 %v1402, 117
        %v1410 = vpop.permute.xlu0 %1409
        %1411 = vrot.lane.b32.xlu0 %v1403, 117
        %v1412 = vpop.permute.xlu0 %1411
        %vm1413 = vcmask 957440
        %v1414 = vsel %vm1413, %v1408, %v1410
        %v1415 = vsel %vm1413, %v1410, %v1412
        %1419 = vst [vmem:[#allocation5 + $0x90] sm:$0xff] %v1414
        %1420 = vst [vmem:[#allocation5 + $0x98] sm:$0xff] %v1415
        %1421 = vst.msk [vmem:[#allocation5 + $0xa0] sm:$0xff] %vm592, %v1412
        %v1422 = vld [vmem:[#allocation3] sm:$0xff]
        %v1423 = vld [vmem:[#allocation3 + $0x8] sm:$0xff]
        %v1424 = vld [vmem:[#allocation3 + $0x10] sm:$0xff]
        %1428 = vrot.lane.b32.xlu0 %v1422, 101
        %v1429 = vpop.permute.xlu0 %1428
        %1430 = vrot.lane.b32.xlu0 %v1423, 101
        %v1431 = vpop.permute.xlu0 %1430
        %1432 = vrot.lane.b32.xlu0 %v1424, 101
        %v1433 = vpop.permute.xlu0 %1432
        %vm1434 = vcmask 826368
        %v1435 = vsel %vm1434, %v1429, %v1431
        %v1436 = vsel %vm1434, %v1431, %v1433
        %1440 = vst [vmem:[#allocation5 + $0xa8] sm:$0xff] %v1435
        %1441 = vst [vmem:[#allocation5 + $0xb0] sm:$0xff] %v1436
        %1442 = vst.msk [vmem:[#allocation5 + $0xb8] sm:$0xff] %vm592, %v1433
        %v1443 = vld [vmem:[#allocation3] sm:$0xff]
        %v1444 = vld [vmem:[#allocation3 + $0x8] sm:$0xff]
        %v1445 = vld [vmem:[#allocation3 + $0x10] sm:$0xff]
        %1449 = vrot.lane.b32.xlu0 %v1443, 100
        %v1450 = vpop.permute.xlu0 %1449
        %1451 = vrot.lane.b32.xlu0 %v1444, 100
        %v1452 = vpop.permute.xlu0 %1451
        %1453 = vrot.lane.b32.xlu0 %v1445, 100
        %v1454 = vpop.permute.xlu0 %1453
        %vm1455 = vcmask 818176
        %v1456 = vsel %vm1455, %v1450, %v1452
        %v1457 = vsel %vm1455, %v1452, %v1454
        %1461 = vst [vmem:[#allocation5 + $0xc0] sm:$0xff] %v1456
        %1462 = vst [vmem:[#allocation5 + $0xc8] sm:$0xff] %v1457
        %1463 = vst.msk [vmem:[#allocation5 + $0xd0] sm:$0xff] %vm592, %v1454
        %v1464 = vld [vmem:[#allocation3] sm:$0xff]
        %v1465 = vld [vmem:[#allocation3 + $0x8] sm:$0xff]
        %v1466 = vld [vmem:[#allocation3 + $0x10] sm:$0xff]
        %1470 = vrot.lane.b32.xlu0 %v1464, 99
        %v1471 = vpop.permute.xlu0 %1470
        %1472 = vrot.lane.b32.xlu0 %v1465, 99
        %v1473 = vpop.permute.xlu0 %1472
        %1474 = vrot.lane.b32.xlu0 %v1466, 99
        %v1475 = vpop.permute.xlu0 %1474
        %vm1476 = vcmask 809984
        %v1477 = vsel %vm1476, %v1471, %v1473
        %v1478 = vsel %vm1476, %v1473, %v1475
        %1482 = vst [vmem:[#allocation5 + $0xd8] sm:$0xff] %v1477
        %1483 = vst [vmem:[#allocation5 + $0xe0] sm:$0xff] %v1478
        %1484 = vst.msk [vmem:[#allocation5 + $0xe8] sm:$0xff] %vm592, %v1475
        %v1485 = vld [vmem:[#allocation3] sm:$0xff]
        %v1486 = vld [vmem:[#allocation3 + $0x8] sm:$0xff]
        %v1487 = vld [vmem:[#allocation3 + $0x10] sm:$0xff]
        %1491 = vrot.lane.b32.xlu0 %v1485, 98
        %v1492 = vpop.permute.xlu0 %1491
        %1493 = vrot.lane.b32.xlu0 %v1486, 98
        %v1494 = vpop.permute.xlu0 %1493
        %1495 = vrot.lane.b32.xlu0 %v1487, 98
        %v1496 = vpop.permute.xlu0 %1495
        %vm1497 = vcmask 801792
        %v1498 = vsel %vm1497, %v1492, %v1494
        %v1499 = vsel %vm1497, %v1494, %v1496
        %1503 = vst [vmem:[#allocation5 + $0xf0] sm:$0xff] %v1498
        %1504 = vst [vmem:[#allocation5 + $0xf8] sm:$0xff] %v1499
        %1505 = vst.msk [vmem:[#allocation5 + $0x100] sm:$0xff] %vm592, %v1496
        %v1506 = vld [vmem:[#allocation3] sm:$0xff]
        %v1507 = vld [vmem:[#allocation3 + $0x8] sm:$0xff]
        %v1508 = vld [vmem:[#allocation3 + $0x10] sm:$0xff]
        %1512 = vrot.lane.b32.xlu0 %v1506, 97
        %v1513 = vpop.permute.xlu0 %1512
        %1514 = vrot.lane.b32.xlu0 %v1507, 97
        %v1515 = vpop.permute.xlu0 %1514
        %1516 = vrot.lane.b32.xlu0 %v1508, 97
        %v1517 = vpop.permute.xlu0 %1516
        %vm1518 = vcmask 793600
        %v1519 = vsel %vm1518, %v1513, %v1515
        %v1520 = vsel %vm1518, %v1515, %v1517
        %1524 = vst [vmem:[#allocation5 + $0x108] sm:$0xff] %v1519
        %1525 = vst [vmem:[#allocation5 + $0x110] sm:$0xff] %v1520
        %1526 = vst.msk [vmem:[#allocation5 + $0x118] sm:$0xff] %vm592, %v1517
        %v1527 = vld [vmem:[#allocation3] sm:$0xff]
        %v1528 = vld [vmem:[#allocation3 + $0x8] sm:$0xff]
        %v1529 = vld [vmem:[#allocation3 + $0x10] sm:$0xff]
        %1533 = vrot.lane.b32.xlu0 %v1527, 96
        %v1534 = vpop.permute.xlu0 %1533
        %1535 = vrot.lane.b32.xlu0 %v1528, 96
        %v1536 = vpop.permute.xlu0 %1535
        %1537 = vrot.lane.b32.xlu0 %v1529, 96
        %v1538 = vpop.permute.xlu0 %1537
        %v1539 = vsel %vm592, %v1534, %v1536
        %v1540 = vsel %vm592, %v1536, %v1538
        %1544 = vst [vmem:[#allocation5 + $0x120] sm:$0xff] %v1539
        %1545 = vst [vmem:[#allocation5 + $0x128] sm:$0xff] %v1540
        %1546 = vst.msk [vmem:[#allocation5 + $0x130] sm:$0xff] %vm592, %v1538
        %v1547 = vld [vmem:[#allocation3] sm:$0xff]
        %v1548 = vld [vmem:[#allocation3 + $0x8] sm:$0xff]
        %v1549 = vld [vmem:[#allocation3 + $0x10] sm:$0xff]
        %v1550 = vld [vmem:[#allocation3 + $0x18] sm:$0xff]
        %1555 = vrot.lane.b32.xlu0 %v1547, 95
        %v1556 = vpop.permute.xlu0 %1555
        %1557 = vrot.lane.b32.xlu0 %v1548, 95
        %v1558 = vpop.permute.xlu0 %1557
        %1559 = vrot.lane.b32.xlu0 %v1549, 95
        %v1560 = vpop.permute.xlu0 %1559
        %1561 = vrot.lane.b32.xlu0 %v1550, 95
        %v1562 = vpop.permute.xlu0 %1561
        %vm1563 = vcmask 777216
        %v1564 = vsel %vm1563, %v1556, %v1558
        %v1565 = vsel %vm1563, %v1558, %v1560
        %v1566 = vsel %vm1563, %v1560, %v1562
        %1570 = vst [vmem:[#allocation5 + $0x138] sm:$0xff] %v1564
        %1571 = vst [vmem:[#allocation5 + $0x140] sm:$0xff] %v1565
        %1572 = vst.msk [vmem:[#allocation5 + $0x148] sm:$0xff] %vm592, %v1566
        %v1573 = vld [vmem:[#allocation3] sm:$0xff]
        %v1574 = vld [vmem:[#allocation3 + $0x8] sm:$0xff]
        %v1575 = vld [vmem:[#allocation3 + $0x10] sm:$0xff]
        %v1576 = vld [vmem:[#allocation3 + $0x18] sm:$0xff]
        %1581 = vrot.lane.b32.xlu0 %v1573, 79
        %v1582 = vpop.permute.xlu0 %1581
        %1583 = vrot.lane.b32.xlu0 %v1574, 79
        %v1584 = vpop.permute.xlu0 %1583
        %1585 = vrot.lane.b32.xlu0 %v1575, 79
        %v1586 = vpop.permute.xlu0 %1585
        %1587 = vrot.lane.b32.xlu0 %v1576, 79
        %v1588 = vpop.permute.xlu0 %1587
        %vm1589 = vcmask 646144
        %v1590 = vsel %vm1589, %v1582, %v1584
        %v1591 = vsel %vm1589, %v1584, %v1586
        %v1592 = vsel %vm1589, %v1586, %v1588
        %1596 = vst [vmem:[#allocation5 + $0x150] sm:$0xff] %v1590
        %1597 = vst [vmem:[#allocation5 + $0x158] sm:$0xff] %v1591
        %1598 = vst.msk [vmem:[#allocation5 + $0x160] sm:$0xff] %vm592, %v1592
        %v1599 = vld [vmem:[#allocation3] sm:$0xff]
        %v1600 = vld [vmem:[#allocation3 + $0x8] sm:$0xff]
        %v1601 = vld [vmem:[#allocation3 + $0x10] sm:$0xff]
        %v1602 = vld [vmem:[#allocation3 + $0x18] sm:$0xff]
        %1607 = vrot.lane.b32.xlu0 %v1599, 78
        %v1608 = vpop.permute.xlu0 %1607
        %1609 = vrot.lane.b32.xlu0 %v1600, 78
        %v1610 = vpop.permute.xlu0 %1609
        %1611 = vrot.lane.b32.xlu0 %v1601, 78
        %v1612 = vpop.permute.xlu0 %1611
        %1613 = vrot.lane.b32.xlu0 %v1602, 78
        %v1614 = vpop.permute.xlu0 %1613
        %vm1615 = vcmask 637952
        %v1616 = vsel %vm1615, %v1608, %v1610
        %v1617 = vsel %vm1615, %v1610, %v1612
        %v1618 = vsel %vm1615, %v1612, %v1614
        %1622 = vst [vmem:[#allocation5 + $0x168] sm:$0xff] %v1616
        %1623 = vst [vmem:[#allocation5 + $0x170] sm:$0xff] %v1617
        %1624 = vst.msk [vmem:[#allocation5 + $0x178] sm:$0xff] %vm592, %v1618
        %v1625 = vld [vmem:[#allocation3] sm:$0xff]
        %v1626 = vld [vmem:[#allocation3 + $0x8] sm:$0xff]
        %v1627 = vld [vmem:[#allocation3 + $0x10] sm:$0xff]
        %v1628 = vld [vmem:[#allocation3 + $0x18] sm:$0xff]
        %1633 = vrot.lane.b32.xlu0 %v1625, 77
        %v1634 = vpop.permute.xlu0 %1633
        %1635 = vrot.lane.b32.xlu0 %v1626, 77
        %v1636 = vpop.permute.xlu0 %1635
        %1637 = vrot.lane.b32.xlu0 %v1627, 77
        %v1638 = vpop.permute.xlu0 %1637
        %1639 = vrot.lane.b32.xlu0 %v1628, 77
        %v1640 = vpop.permute.xlu0 %1639
        %v1641 = vsel %vm577, %v1634, %v1636
        %v1642 = vsel %vm577, %v1636, %v1638
        %v1643 = vsel %vm577, %v1638, %v1640
        %1647 = vst [vmem:[#allocation5 + $0x180] sm:$0xff] %v1641
        %1648 = vst [vmem:[#allocation5 + $0x188] sm:$0xff] %v1642
        %1649 = vst.msk [vmem:[#allocation5 + $0x190] sm:$0xff] %vm592, %v1643
        %v1650 = vld [vmem:[#allocation3] sm:$0xff]
        %v1651 = vld [vmem:[#allocation3 + $0x8] sm:$0xff]
        %v1652 = vld [vmem:[#allocation3 + $0x10] sm:$0xff]
        %v1653 = vld [vmem:[#allocation3 + $0x18] sm:$0xff]
        %1658 = vrot.lane.b32.xlu0 %v1650, 76
        %v1659 = vpop.permute.xlu0 %1658
        %1660 = vrot.lane.b32.xlu0 %v1651, 76
        %v1661 = vpop.permute.xlu0 %1660
        %1662 = vrot.lane.b32.xlu0 %v1652, 76
        %v1663 = vpop.permute.xlu0 %1662
        %1664 = vrot.lane.b32.xlu0 %v1653, 76
        %v1665 = vpop.permute.xlu0 %1664
        %v1666 = vsel %vm629, %v1659, %v1661
        %v1667 = vsel %vm629, %v1661, %v1663
        %v1668 = vsel %vm629, %v1663, %v1665
        %1672 = vst [vmem:[#allocation5 + $0x198] sm:$0xff] %v1666
        %1673 = vst [vmem:[#allocation5 + $0x1a0] sm:$0xff] %v1667
        %1674 = vst.msk [vmem:[#allocation5 + $0x1a8] sm:$0xff] %vm592, %v1668
        %v1675 = vld [vmem:[#allocation3] sm:$0xff]
        %v1676 = vld [vmem:[#allocation3 + $0x8] sm:$0xff]
        %v1677 = vld [vmem:[#allocation3 + $0x10] sm:$0xff]
        %v1678 = vld [vmem:[#allocation3 + $0x18] sm:$0xff]
        %1683 = vrot.lane.b32.xlu0 %v1675, 75
        %v1684 = vpop.permute.xlu0 %1683
        %1685 = vrot.lane.b32.xlu0 %v1676, 75
        %v1686 = vpop.permute.xlu0 %1685
        %1687 = vrot.lane.b32.xlu0 %v1677, 75
        %v1688 = vpop.permute.xlu0 %1687
        %1689 = vrot.lane.b32.xlu0 %v1678, 75
        %v1690 = vpop.permute.xlu0 %1689
        %v1691 = vsel %vm680, %v1684, %v1686
        %v1692 = vsel %vm680, %v1686, %v1688
        %v1693 = vsel %vm680, %v1688, %v1690
        %1697 = vst [vmem:[#allocation5 + $0x1b0] sm:$0xff] %v1691
        %1698 = vst [vmem:[#allocation5 + $0x1b8] sm:$0xff] %v1692
        %1699 = vst.msk [vmem:[#allocation5 + $0x1c0] sm:$0xff] %vm592, %v1693
        %v1700 = vld [vmem:[#allocation3] sm:$0xff]
        %v1701 = vld [vmem:[#allocation3 + $0x8] sm:$0xff]
        %v1702 = vld [vmem:[#allocation3 + $0x10] sm:$0xff]
        %v1703 = vld [vmem:[#allocation3 + $0x18] sm:$0xff]
        %1708 = vrot.lane.b32.xlu0 %v1700, 74
        %v1709 = vpop.permute.xlu0 %1708
        %1710 = vrot.lane.b32.xlu0 %v1701, 74
        %v1711 = vpop.permute.xlu0 %1710
        %1712 = vrot.lane.b32.xlu0 %v1702, 74
        %v1713 = vpop.permute.xlu0 %1712
        %1714 = vrot.lane.b32.xlu0 %v1703, 74
        %v1715 = vpop.permute.xlu0 %1714
        %v1716 = vsel %vm1262, %v1709, %v1711
        %v1717 = vsel %vm1262, %v1711, %v1713
        %v1718 = vsel %vm1262, %v1713, %v1715
        %1722 = vst [vmem:[#allocation5 + $0x1c8] sm:$0xff] %v1716
        %1723 = vst [vmem:[#allocation5 + $0x1d0] sm:$0xff] %v1717
        %1724 = vst.msk [vmem:[#allocation5 + $0x1d8] sm:$0xff] %vm592, %v1718
        %v1725 = vld [vmem:[#allocation3] sm:$0xff]
        %v1726 = vld [vmem:[#allocation3 + $0x8] sm:$0xff]
        %v1727 = vld [vmem:[#allocation3 + $0x10] sm:$0xff]
        %v1728 = vld [vmem:[#allocation3 + $0x18] sm:$0xff]
        %1733 = vrot.lane.b32.xlu0 %v1725, 73
        %v1734 = vpop.permute.xlu0 %1733
        %1735 = vrot.lane.b32.xlu0 %v1726, 73
        %v1736 = vpop.permute.xlu0 %1735
        %1737 = vrot.lane.b32.xlu0 %v1727, 73
        %v1738 = vpop.permute.xlu0 %1737
        %1739 = vrot.lane.b32.xlu0 %v1728, 73
        %v1740 = vpop.permute.xlu0 %1739
        %vm1741 = vcmask 596992
        %v1742 = vsel %vm1741, %v1734, %v1736
        %v1743 = vsel %vm1741, %v1736, %v1738
        %v1744 = vsel %vm1741, %v1738, %v1740
        %1748 = vst [vmem:[#allocation5 + $0x1e0] sm:$0xff] %v1742
        %1749 = vst [vmem:[#allocation5 + $0x1e8] sm:$0xff] %v1743
        %1750 = vst.msk [vmem:[#allocation5 + $0x1f0] sm:$0xff] %vm592, %v1744
        %v1751 = vld [vmem:[#allocation3] sm:$0xff]
        %v1752 = vld [vmem:[#allocation3 + $0x8] sm:$0xff]
        %v1753 = vld [vmem:[#allocation3 + $0x10] sm:$0xff]
        %v1754 = vld [vmem:[#allocation3 + $0x18] sm:$0xff]
        %1759 = vrot.lane.b32.xlu0 %v1751, 57
        %v1760 = vpop.permute.xlu0 %1759
        %1761 = vrot.lane.b32.xlu0 %v1752, 57
        %v1762 = vpop.permute.xlu0 %1761
        %1763 = vrot.lane.b32.xlu0 %v1753, 57
        %v1764 = vpop.permute.xlu0 %1763
        %1765 = vrot.lane.b32.xlu0 %v1754, 57
        %v1766 = vpop.permute.xlu0 %1765
        %vm1767 = vcmask 465920
        %v1768 = vsel %vm1767, %v1760, %v1762
        %v1769 = vsel %vm1767, %v1762, %v1764
        %v1770 = vsel %vm1767, %v1764, %v1766
        %1774 = vst [vmem:[#allocation5 + $0x1f8] sm:$0xff] %v1768
        %1775 = vst [vmem:[#allocation5 + $0x200] sm:$0xff] %v1769
        %1776 = vst.msk [vmem:[#allocation5 + $0x208] sm:$0xff] %vm592, %v1770
        %v1777 = vld [vmem:[#allocation3] sm:$0xff]
        %v1778 = vld [vmem:[#allocation3 + $0x8] sm:$0xff]
        %v1779 = vld [vmem:[#allocation3 + $0x10] sm:$0xff]
        %v1780 = vld [vmem:[#allocation3 + $0x18] sm:$0xff]
        %1785 = vrot.lane.b32.xlu0 %v1777, 56
        %v1786 = vpop.permute.xlu0 %1785
        %1787 = vrot.lane.b32.xlu0 %v1778, 56
        %v1788 = vpop.permute.xlu0 %1787
        %1789 = vrot.lane.b32.xlu0 %v1779, 56
        %v1790 = vpop.permute.xlu0 %1789
        %1791 = vrot.lane.b32.xlu0 %v1780, 56
        %v1792 = vpop.permute.xlu0 %1791
        %vm1793 = vcmask 457728
        %v1794 = vsel %vm1793, %v1786, %v1788
        %v1795 = vsel %vm1793, %v1788, %v1790
        %v1796 = vsel %vm1793, %v1790, %v1792
        %1800 = vst [vmem:[#allocation5 + $0x210] sm:$0xff] %v1794
        %1801 = vst [vmem:[#allocation5 + $0x218] sm:$0xff] %v1795
        %1802 = vst.msk [vmem:[#allocation5 + $0x220] sm:$0xff] %vm592, %v1796
        %v1803 = vld [vmem:[#allocation3] sm:$0xff]
        %v1804 = vld [vmem:[#allocation3 + $0x8] sm:$0xff]
        %v1805 = vld [vmem:[#allocation3 + $0x10] sm:$0xff]
        %v1806 = vld [vmem:[#allocation3 + $0x18] sm:$0xff]
        %1811 = vrot.lane.b32.xlu0 %v1803, 55
        %v1812 = vpop.permute.xlu0 %1811
        %1813 = vrot.lane.b32.xlu0 %v1804, 55
        %v1814 = vpop.permute.xlu0 %1813
        %1815 = vrot.lane.b32.xlu0 %v1805, 55
        %v1816 = vpop.permute.xlu0 %1815
        %1817 = vrot.lane.b32.xlu0 %v1806, 55
        %v1818 = vpop.permute.xlu0 %1817
        %v1819 = vsel %vm731, %v1812, %v1814
        %v1820 = vsel %vm731, %v1814, %v1816
        %v1821 = vsel %vm731, %v1816, %v1818
        %1825 = vst [vmem:[#allocation5 + $0x228] sm:$0xff] %v1819
        %1826 = vst [vmem:[#allocation5 + $0x230] sm:$0xff] %v1820
        %1827 = vst.msk [vmem:[#allocation5 + $0x238] sm:$0xff] %vm592, %v1821
        %v1828 = vld [vmem:[#allocation3] sm:$0xff]
        %v1829 = vld [vmem:[#allocation3 + $0x8] sm:$0xff]
        %v1830 = vld [vmem:[#allocation3 + $0x10] sm:$0xff]
        %v1831 = vld [vmem:[#allocation3 + $0x18] sm:$0xff]
        %1836 = vrot.lane.b32.xlu0 %v1828, 54
        %v1837 = vpop.permute.xlu0 %1836
        %1838 = vrot.lane.b32.xlu0 %v1829, 54
        %v1839 = vpop.permute.xlu0 %1838
        %1840 = vrot.lane.b32.xlu0 %v1830, 54
        %v1841 = vpop.permute.xlu0 %1840
        %1842 = vrot.lane.b32.xlu0 %v1831, 54
        %v1843 = vpop.permute.xlu0 %1842
        %v1844 = vsel %vm782, %v1837, %v1839
        %v1845 = vsel %vm782, %v1839, %v1841
        %v1846 = vsel %vm782, %v1841, %v1843
        %1850 = vst [vmem:[#allocation5 + $0x240] sm:$0xff] %v1844
        %1851 = vst [vmem:[#allocation5 + $0x248] sm:$0xff] %v1845
        %1852 = vst.msk [vmem:[#allocation5 + $0x250] sm:$0xff] %vm592, %v1846
        %v1853 = vld [vmem:[#allocation3] sm:$0xff]
        %v1854 = vld [vmem:[#allocation3 + $0x8] sm:$0xff]
        %v1855 = vld [vmem:[#allocation3 + $0x10] sm:$0xff]
        %v1856 = vld [vmem:[#allocation3 + $0x18] sm:$0xff]
        %1861 = vrot.lane.b32.xlu0 %v1853, 53
        %v1862 = vpop.permute.xlu0 %1861
        %1863 = vrot.lane.b32.xlu0 %v1854, 53
        %v1864 = vpop.permute.xlu0 %1863
        %1865 = vrot.lane.b32.xlu0 %v1855, 53
        %v1866 = vpop.permute.xlu0 %1865
        %1867 = vrot.lane.b32.xlu0 %v1856, 53
        %v1868 = vpop.permute.xlu0 %1867
        %v1869 = vsel %vm833, %v1862, %v1864
        %v1870 = vsel %vm833, %v1864, %v1866
        %v1871 = vsel %vm833, %v1866, %v1868
        %1875 = vst [vmem:[#allocation5 + $0x258] sm:$0xff] %v1869
        %1876 = vst [vmem:[#allocation5 + $0x260] sm:$0xff] %v1870
        %1877 = vst.msk [vmem:[#allocation5 + $0x268] sm:$0xff] %vm592, %v1871
        %v1878 = vld [vmem:[#allocation3] sm:$0xff]
        %v1879 = vld [vmem:[#allocation3 + $0x8] sm:$0xff]
        %v1880 = vld [vmem:[#allocation3 + $0x10] sm:$0xff]
        %v1881 = vld [vmem:[#allocation3 + $0x18] sm:$0xff]
        %1886 = vrot.lane.b32.xlu0 %v1878, 52
        %v1887 = vpop.permute.xlu0 %1886
        %1888 = vrot.lane.b32.xlu0 %v1879, 52
        %v1889 = vpop.permute.xlu0 %1888
        %1890 = vrot.lane.b32.xlu0 %v1880, 52
        %v1891 = vpop.permute.xlu0 %1890
        %1892 = vrot.lane.b32.xlu0 %v1881, 52
        %v1893 = vpop.permute.xlu0 %1892
        %vm1894 = vcmask 424960
        %v1895 = vsel %vm1894, %v1887, %v1889
        %v1896 = vsel %vm1894, %v1889, %v1891
        %v1897 = vsel %vm1894, %v1891, %v1893
        %1901 = vst [vmem:[#allocation5 + $0x270] sm:$0xff] %v1895
        %1902 = vst [vmem:[#allocation5 + $0x278] sm:$0xff] %v1896
        %1903 = vst.msk [vmem:[#allocation5 + $0x280] sm:$0xff] %vm592, %v1897
        %v1904 = vld [vmem:[#allocation3] sm:$0xff]
        %v1905 = vld [vmem:[#allocation3 + $0x8] sm:$0xff]
        %v1906 = vld [vmem:[#allocation3 + $0x10] sm:$0xff]
        %v1907 = vld [vmem:[#allocation3 + $0x18] sm:$0xff]
        %1912 = vrot.lane.b32.xlu0 %v1904, 51
        %v1913 = vpop.permute.xlu0 %1912
        %1914 = vrot.lane.b32.xlu0 %v1905, 51
        %v1915 = vpop.permute.xlu0 %1914
        %1916 = vrot.lane.b32.xlu0 %v1906, 51
        %v1917 = vpop.permute.xlu0 %1916
        %1918 = vrot.lane.b32.xlu0 %v1907, 51
        %v1919 = vpop.permute.xlu0 %1918
        %vm1920 = vcmask 416768
        %v1921 = vsel %vm1920, %v1913, %v1915
        %v1922 = vsel %vm1920, %v1915, %v1917
        %v1923 = vsel %vm1920, %v1917, %v1919
        %1927 = vst [vmem:[#allocation5 + $0x288] sm:$0xff] %v1921
        %1928 = vst [vmem:[#allocation5 + $0x290] sm:$0xff] %v1922
        %1929 = vst.msk [vmem:[#allocation5 + $0x298] sm:$0xff] %vm592, %v1923
        %v1930 = vld [vmem:[#allocation3] sm:$0xff]
        %v1931 = vld [vmem:[#allocation3 + $0x8] sm:$0xff]
        %v1932 = vld [vmem:[#allocation3 + $0x10] sm:$0xff]
        %v1933 = vld [vmem:[#allocation3 + $0x18] sm:$0xff]
        %1938 = vrot.lane.b32.xlu0 %v1930, 35
        %v1939 = vpop.permute.xlu0 %1938
        %1940 = vrot.lane.b32.xlu0 %v1931, 35
        %v1941 = vpop.permute.xlu0 %1940
        %1942 = vrot.lane.b32.xlu0 %v1932, 35
        %v1943 = vpop.permute.xlu0 %1942
        %1944 = vrot.lane.b32.xlu0 %v1933, 35
        %v1945 = vpop.permute.xlu0 %1944
        %vm1946 = vcmask 285696
        %v1947 = vsel %vm1946, %v1939, %v1941
        %v1948 = vsel %vm1946, %v1941, %v1943
        %v1949 = vsel %vm1946, %v1943, %v1945
        %1953 = vst [vmem:[#allocation5 + $0x2a0] sm:$0xff] %v1947
        %1954 = vst [vmem:[#allocation5 + $0x2a8] sm:$0xff] %v1948
        %1955 = vst.msk [vmem:[#allocation5 + $0x2b0] sm:$0xff] %vm592, %v1949
        %v1956 = vld [vmem:[#allocation3] sm:$0xff]
        %v1957 = vld [vmem:[#allocation3 + $0x8] sm:$0xff]
        %v1958 = vld [vmem:[#allocation3 + $0x10] sm:$0xff]
        %v1959 = vld [vmem:[#allocation3 + $0x18] sm:$0xff]
        %1964 = vrot.lane.b32.xlu0 %v1956, 34
        %v1965 = vpop.permute.xlu0 %1964
        %1966 = vrot.lane.b32.xlu0 %v1957, 34
        %v1967 = vpop.permute.xlu0 %1966
        %1968 = vrot.lane.b32.xlu0 %v1958, 34
        %v1969 = vpop.permute.xlu0 %1968
        %1970 = vrot.lane.b32.xlu0 %v1959, 34
        %v1971 = vpop.permute.xlu0 %1970
        %vm1972 = vcmask 277504
        %v1973 = vsel %vm1972, %v1965, %v1967
        %v1974 = vsel %vm1972, %v1967, %v1969
        %v1975 = vsel %vm1972, %v1969, %v1971
        %1979 = vst [vmem:[#allocation5 + $0x2b8] sm:$0xff] %v1973
        %1980 = vst [vmem:[#allocation5 + $0x2c0] sm:$0xff] %v1974
        %1981 = vst.msk [vmem:[#allocation5 + $0x2c8] sm:$0xff] %vm592, %v1975
        %v1982 = vld [vmem:[#allocation3] sm:$0xff]
        %v1983 = vld [vmem:[#allocation3 + $0x8] sm:$0xff]
        %v1984 = vld [vmem:[#allocation3 + $0x10] sm:$0xff]
        %v1985 = vld [vmem:[#allocation3 + $0x18] sm:$0xff]
        %1990 = vrot.lane.b32.xlu0 %v1982, 33
        %v1991 = vpop.permute.xlu0 %1990
        %1992 = vrot.lane.b32.xlu0 %v1983, 33
        %v1993 = vpop.permute.xlu0 %1992
        %1994 = vrot.lane.b32.xlu0 %v1984, 33
        %v1995 = vpop.permute.xlu0 %1994
        %1996 = vrot.lane.b32.xlu0 %v1985, 33
        %v1997 = vpop.permute.xlu0 %1996
        %v1998 = vsel %vm884, %v1991, %v1993
        %v1999 = vsel %vm884, %v1993, %v1995
        %v2000 = vsel %vm884, %v1995, %v1997
        %2004 = vst [vmem:[#allocation5 + $0x2d0] sm:$0xff] %v1998
        %2005 = vst [vmem:[#allocation5 + $0x2d8] sm:$0xff] %v1999
        %2006 = vst.msk [vmem:[#allocation5 + $0x2e0] sm:$0xff] %vm592, %v2000
        %v2007 = vld [vmem:[#allocation3] sm:$0xff]
        %v2008 = vld [vmem:[#allocation3 + $0x8] sm:$0xff]
        %v2009 = vld [vmem:[#allocation3 + $0x10] sm:$0xff]
        %v2010 = vld [vmem:[#allocation3 + $0x18] sm:$0xff]
        %2015 = vrot.lane.b32.xlu0 %v2007, 32
        %v2016 = vpop.permute.xlu0 %2015
        %2017 = vrot.lane.b32.xlu0 %v2008, 32
        %v2018 = vpop.permute.xlu0 %2017
        %2019 = vrot.lane.b32.xlu0 %v2009, 32
        %v2020 = vpop.permute.xlu0 %2019
        %2021 = vrot.lane.b32.xlu0 %v2010, 32
        %v2022 = vpop.permute.xlu0 %2021
        %v2023 = vsel %vm935, %v2016, %v2018
        %v2024 = vsel %vm935, %v2018, %v2020
        %v2025 = vsel %vm935, %v2020, %v2022
        %2029 = vst [vmem:[#allocation5 + $0x2e8] sm:$0xff] %v2023
        %2030 = vst [vmem:[#allocation5 + $0x2f0] sm:$0xff] %v2024
        %2031 = vst.msk [vmem:[#allocation5 + $0x2f8] sm:$0xff] %vm592, %v2025
        %v2032 = vld [vmem:[#allocation3] sm:$0xff]
        %v2033 = vld [vmem:[#allocation3 + $0x8] sm:$0xff]
        %v2034 = vld [vmem:[#allocation3 + $0x10] sm:$0xff]
        %v2035 = vld [vmem:[#allocation3 + $0x18] sm:$0xff]
        %2040 = vrot.lane.b32.xlu0 %v2032, 31
        %v2041 = vpop.permute.xlu0 %2040
        %2042 = vrot.lane.b32.xlu0 %v2033, 31
        %v2043 = vpop.permute.xlu0 %2042
        %2044 = vrot.lane.b32.xlu0 %v2034, 31
        %v2045 = vpop.permute.xlu0 %2044
        %2046 = vrot.lane.b32.xlu0 %v2035, 31
        %v2047 = vpop.permute.xlu0 %2046
        %v2048 = vsel %vm986, %v2041, %v2043
        %v2049 = vsel %vm986, %v2043, %v2045
        %v2050 = vsel %vm986, %v2045, %v2047
        %2054 = vst [vmem:[#allocation5 + $0x300] sm:$0xff] %v2048
        %2055 = vst [vmem:[#allocation5 + $0x308] sm:$0xff] %v2049
        %2056 = vst.msk [vmem:[#allocation5 + $0x310] sm:$0xff] %vm592, %v2050
        %v2057 = vld [vmem:[#allocation3] sm:$0xff]
        %v2058 = vld [vmem:[#allocation3 + $0x8] sm:$0xff]
        %v2059 = vld [vmem:[#allocation3 + $0x10] sm:$0xff]
        %v2060 = vld [vmem:[#allocation3 + $0x18] sm:$0xff]
        %2065 = vrot.lane.b32.xlu0 %v2057, 30
        %v2066 = vpop.permute.xlu0 %2065
        %2067 = vrot.lane.b32.xlu0 %v2058, 30
        %v2068 = vpop.permute.xlu0 %2067
        %2069 = vrot.lane.b32.xlu0 %v2059, 30
        %v2070 = vpop.permute.xlu0 %2069
        %2071 = vrot.lane.b32.xlu0 %v2060, 30
        %v2072 = vpop.permute.xlu0 %2071
        %vm2073 = vcmask 244736
        %v2074 = vsel %vm2073, %v2066, %v2068
        %v2075 = vsel %vm2073, %v2068, %v2070
        %v2076 = vsel %vm2073, %v2070, %v2072
        %2080 = vst [vmem:[#allocation5 + $0x318] sm:$0xff] %v2074
        %2081 = vst [vmem:[#allocation5 + $0x320] sm:$0xff] %v2075
        %2082 = vst.msk [vmem:[#allocation5 + $0x328] sm:$0xff] %vm592, %v2076
        %v2083 = vld [vmem:[#allocation3] sm:$0xff]
        %v2084 = vld [vmem:[#allocation3 + $0x8] sm:$0xff]
        %v2085 = vld [vmem:[#allocation3 + $0x10] sm:$0xff]
        %v2086 = vld [vmem:[#allocation3 + $0x18] sm:$0xff]
        %2091 = vrot.lane.b32.xlu0 %v2083, 29
        %v2092 = vpop.permute.xlu0 %2091
        %2093 = vrot.lane.b32.xlu0 %v2084, 29
        %v2094 = vpop.permute.xlu0 %2093
        %2095 = vrot.lane.b32.xlu0 %v2085, 29
        %v2096 = vpop.permute.xlu0 %2095
        %2097 = vrot.lane.b32.xlu0 %v2086, 29
        %v2098 = vpop.permute.xlu0 %2097
        %vm2099 = vcmask 236544
        %v2100 = vsel %vm2099, %v2092, %v2094
        %v2101 = vsel %vm2099, %v2094, %v2096
        %v2102 = vsel %vm2099, %v2096, %v2098
        %2106 = vst [vmem:[#allocation5 + $0x330] sm:$0xff] %v2100
        %2107 = vst [vmem:[#allocation5 + $0x338] sm:$0xff] %v2101
        %2108 = vst.msk [vmem:[#allocation5 + $0x340] sm:$0xff] %vm592, %v2102
        %v2109 = vld [vmem:[#allocation3] sm:$0xff]
        %v2110 = vld [vmem:[#allocation3 + $0x8] sm:$0xff]
        %v2111 = vld [vmem:[#allocation3 + $0x10] sm:$0xff]
        %v2112 = vld [vmem:[#allocation3 + $0x18] sm:$0xff]
        %2117 = vrot.lane.b32.xlu0 %v2109, 13
        %v2118 = vpop.permute.xlu0 %2117
        %2119 = vrot.lane.b32.xlu0 %v2110, 13
        %v2120 = vpop.permute.xlu0 %2119
        %2121 = vrot.lane.b32.xlu0 %v2111, 13
        %v2122 = vpop.permute.xlu0 %2121
        %2123 = vrot.lane.b32.xlu0 %v2112, 13
        %v2124 = vpop.permute.xlu0 %2123
        %v2125 = vsel %vm478, %v2118, %v2120
        %v2126 = vsel %vm478, %v2120, %v2122
        %v2127 = vsel %vm478, %v2122, %v2124
        %2131 = vst [vmem:[#allocation5 + $0x348] sm:$0xff] %v2125
        %2132 = vst [vmem:[#allocation5 + $0x350] sm:$0xff] %v2126
        %2133 = vst.msk [vmem:[#allocation5 + $0x358] sm:$0xff] %vm592, %v2127
        %v2134 = vld [vmem:[#allocation3] sm:$0xff]
        %v2135 = vld [vmem:[#allocation3 + $0x8] sm:$0xff]
        %v2136 = vld [vmem:[#allocation3 + $0x10] sm:$0xff]
        %v2137 = vld [vmem:[#allocation3 + $0x18] sm:$0xff]
        %2142 = vrot.lane.b32.xlu0 %v2134, 12
        %v2143 = vpop.permute.xlu0 %2142
        %2144 = vrot.lane.b32.xlu0 %v2135, 12
        %v2145 = vpop.permute.xlu0 %2144
        %2146 = vrot.lane.b32.xlu0 %v2136, 12
        %v2147 = vpop.permute.xlu0 %2146
        %2148 = vrot.lane.b32.xlu0 %v2137, 12
        %v2149 = vpop.permute.xlu0 %2148
        %vm2150 = vcmask 97280
        %v2151 = vsel %vm2150, %v2143, %v2145
        %v2152 = vsel %vm2150, %v2145, %v2147
        %v2153 = vsel %vm2150, %v2147, %v2149
        %2157 = vst [vmem:[#allocation5 + $0x360] sm:$0xff] %v2151
        %2158 = vst [vmem:[#allocation5 + $0x368] sm:$0xff] %v2152
        %2159 = vst.msk [vmem:[#allocation5 + $0x370] sm:$0xff] %vm592, %v2153
        %v2160 = vld [vmem:[#allocation3] sm:$0xff]
        %v2161 = vld [vmem:[#allocation3 + $0x8] sm:$0xff]
        %v2162 = vld [vmem:[#allocation3 + $0x10] sm:$0xff]
        %v2163 = vld [vmem:[#allocation3 + $0x18] sm:$0xff]
        %2168 = vrot.lane.b32.xlu0 %v2160, 11
        %v2169 = vpop.permute.xlu0 %2168
        %2170 = vrot.lane.b32.xlu0 %v2161, 11
        %v2171 = vpop.permute.xlu0 %2170
        %2172 = vrot.lane.b32.xlu0 %v2162, 11
        %v2173 = vpop.permute.xlu0 %2172
        %2174 = vrot.lane.b32.xlu0 %v2163, 11
        %v2175 = vpop.permute.xlu0 %2174
        %vm2176 = vcmask 89088
        %v2177 = vsel %vm2176, %v2169, %v2171
        %v2178 = vsel %vm2176, %v2171, %v2173
        %v2179 = vsel %vm2176, %v2173, %v2175
        %2183 = vst [vmem:[#allocation5 + $0x378] sm:$0xff] %v2177
        %2184 = vst [vmem:[#allocation5 + $0x380] sm:$0xff] %v2178
        %2185 = vst.msk [vmem:[#allocation5 + $0x388] sm:$0xff] %vm592, %v2179
        %v2186 = vld [vmem:[#allocation3] sm:$0xff]
        %v2187 = vld [vmem:[#allocation3 + $0x8] sm:$0xff]
        %v2188 = vld [vmem:[#allocation3 + $0x10] sm:$0xff]
        %v2189 = vld [vmem:[#allocation3 + $0x18] sm:$0xff]
        %2194 = vrot.lane.b32.xlu0 %v2186, 10
        %v2195 = vpop.permute.xlu0 %2194
        %2196 = vrot.lane.b32.xlu0 %v2187, 10
        %v2197 = vpop.permute.xlu0 %2196
        %2198 = vrot.lane.b32.xlu0 %v2188, 10
        %v2199 = vpop.permute.xlu0 %2198
        %2200 = vrot.lane.b32.xlu0 %v2189, 10
        %v2201 = vpop.permute.xlu0 %2200
        %vm2202 = vcmask 80896
        %v2203 = vsel %vm2202, %v2195, %v2197
        %v2204 = vsel %vm2202, %v2197, %v2199
        %v2205 = vsel %vm2202, %v2199, %v2201
        %2209 = vst [vmem:[#allocation5 + $0x390] sm:$0xff] %v2203
        %2210 = vst [vmem:[#allocation5 + $0x398] sm:$0xff] %v2204
        %2211 = vst.msk [vmem:[#allocation5 + $0x3a0] sm:$0xff] %vm592, %v2205
        %v2212 = vld [vmem:[#allocation3] sm:$0xff]
        %v2213 = vld [vmem:[#allocation3 + $0x8] sm:$0xff]
        %v2214 = vld [vmem:[#allocation3 + $0x10] sm:$0xff]
        %v2215 = vld [vmem:[#allocation3 + $0x18] sm:$0xff]
        %2220 = vrot.lane.b32.xlu0 %v2212, 9
        %v2221 = vpop.permute.xlu0 %2220
        %2222 = vrot.lane.b32.xlu0 %v2213, 9
        %v2223 = vpop.permute.xlu0 %2222
        %2224 = vrot.lane.b32.xlu0 %v2214, 9
        %v2225 = vpop.permute.xlu0 %2224
        %2226 = vrot.lane.b32.xlu0 %v2215, 9
        %v2227 = vpop.permute.xlu0 %2226
        %v2228 = vsel %vm419, %v2221, %v2223
        %v2229 = vsel %vm419, %v2223, %v2225
        %v2230 = vsel %vm419, %v2225, %v2227
        %2234 = vst [vmem:[#allocation5 + $0x3a8] sm:$0xff] %v2228
        %2235 = vst [vmem:[#allocation5 + $0x3b0] sm:$0xff] %v2229
        %2236 = vst.msk [vmem:[#allocation5 + $0x3b8] sm:$0xff] %vm592, %v2230
        %v2237 = vld [vmem:[#allocation3] sm:$0xff]
        %v2238 = vld [vmem:[#allocation3 + $0x8] sm:$0xff]
        %v2239 = vld [vmem:[#allocation3 + $0x10] sm:$0xff]
        %v2240 = vld [vmem:[#allocation3 + $0x18] sm:$0xff]
        %2245 = vrot.lane.b32.xlu0 %v2237, 8
        %v2246 = vpop.permute.xlu0 %2245
        %2247 = vrot.lane.b32.xlu0 %v2238, 8
        %v2248 = vpop.permute.xlu0 %2247
        %2249 = vrot.lane.b32.xlu0 %v2239, 8
        %v2250 = vpop.permute.xlu0 %2249
        %2251 = vrot.lane.b32.xlu0 %v2240, 8
        %v2252 = vpop.permute.xlu0 %2251
        %vm2253 = vcmask 64512
        %v2254 = vsel %vm2253, %v2246, %v2248
        %v2255 = vsel %vm2253, %v2248, %v2250
        %v2256 = vsel %vm2253, %v2250, %v2252
        %2260 = vst [vmem:[#allocation5 + $0x3c0] sm:$0xff] %v2254
        %2261 = vst [vmem:[#allocation5 + $0x3c8] sm:$0xff] %v2255
        %2262 = vst.msk [vmem:[#allocation5 + $0x3d0] sm:$0xff] %vm592, %v2256
        %v2263 = vld [vmem:[#allocation3] sm:$0xff]
        %v2264 = vld [vmem:[#allocation3 + $0x8] sm:$0xff]
        %v2265 = vld [vmem:[#allocation3 + $0x10] sm:$0xff]
        %v2266 = vld [vmem:[#allocation3 + $0x18] sm:$0xff]
        %2271 = vrot.lane.b32.xlu0 %v2263, 7
        %v2272 = vpop.permute.xlu0 %2271
        %2273 = vrot.lane.b32.xlu0 %v2264, 7
        %v2274 = vpop.permute.xlu0 %2273
        %2275 = vrot.lane.b32.xlu0 %v2265, 7
        %v2276 = vpop.permute.xlu0 %2275
        %2277 = vrot.lane.b32.xlu0 %v2266, 7
        %v2278 = vpop.permute.xlu0 %2277
        %vm2279 = vcmask 56320
        %v2280 = vsel %vm2279, %v2272, %v2274
        %v2281 = vsel %vm2279, %v2274, %v2276
        %v2282 = vsel %vm2279, %v2276, %v2278
        %2286 = vst [vmem:[#allocation5 + $0x3d8] sm:$0xff] %v2280
        %2287 = vst [vmem:[#allocation5 + $0x3e0] sm:$0xff] %v2281
        %2288 = vst.msk [vmem:[#allocation5 + $0x3e8] sm:$0xff] %vm592, %v2282
        %v2289 = vld [vmem:[#allocation3 + $0x8] sm:$0xff]
        %v2290 = vld [vmem:[#allocation3 + $0x10] sm:$0xff]
        %v2291 = vld [vmem:[#allocation3 + $0x18] sm:$0xff]
        %2295 = vrot.lane.b32.xlu0 %v2289, 119
        %v2296 = vpop.permute.xlu0 %2295
        %2297 = vrot.lane.b32.xlu0 %v2290, 119
        %v2298 = vpop.permute.xlu0 %2297
        %2299 = vrot.lane.b32.xlu0 %v2291, 119
        %v2300 = vpop.permute.xlu0 %2299
        %v2301 = vsel %vm1371, %v2296, %v2298
        %v2302 = vsel %vm1371, %v2298, %v2300
        %2306 = vst [vmem:[#allocation5 + $0x3f0] sm:$0xff] %v2301
        %2307 = vst [vmem:[#allocation5 + $0x3f8] sm:$0xff] %v2302
        %2308 = vst.msk [vmem:[#allocation5 + $0x400] sm:$0xff] %vm592, %v2300
        %v2309 = vld [vmem:[#allocation3 + $0x8] sm:$0xff]
        %v2310 = vld [vmem:[#allocation3 + $0x10] sm:$0xff]
        %v2311 = vld [vmem:[#allocation3 + $0x18] sm:$0xff]
        %2315 = vrot.lane.b32.xlu0 %v2309, 118
        %v2316 = vpop.permute.xlu0 %2315
        %2317 = vrot.lane.b32.xlu0 %v2310, 118
        %v2318 = vpop.permute.xlu0 %2317
        %2319 = vrot.lane.b32.xlu0 %v2311, 118
        %v2320 = vpop.permute.xlu0 %2319
        %v2321 = vsel %vm1392, %v2316, %v2318
        %v2322 = vsel %vm1392, %v2318, %v2320
        %2326 = vst [vmem:[#allocation5 + $0x408] sm:$0xff] %v2321
        %2327 = vst [vmem:[#allocation5 + $0x410] sm:$0xff] %v2322
        %2328 = vst.msk [vmem:[#allocation5 + $0x418] sm:$0xff] %vm592, %v2320
        %v2329 = vld [vmem:[#allocation3 + $0x8] sm:$0xff]
        %v2330 = vld [vmem:[#allocation3 + $0x10] sm:$0xff]
        %v2331 = vld [vmem:[#allocation3 + $0x18] sm:$0xff]
        %2335 = vrot.lane.b32.xlu0 %v2329, 117
        %v2336 = vpop.permute.xlu0 %2335
        %2337 = vrot.lane.b32.xlu0 %v2330, 117
        %v2338 = vpop.permute.xlu0 %2337
        %2339 = vrot.lane.b32.xlu0 %v2331, 117
        %v2340 = vpop.permute.xlu0 %2339
        %v2341 = vsel %vm1413, %v2336, %v2338
        %v2342 = vsel %vm1413, %v2338, %v2340
        %2346 = vst [vmem:[#allocation5 + $0x420] sm:$0xff] %v2341
        %2347 = vst [vmem:[#allocation5 + $0x428] sm:$0xff] %v2342
        %2348 = vst.msk [vmem:[#allocation5 + $0x430] sm:$0xff] %vm592, %v2340
        %v2349 = vld [vmem:[#allocation3 + $0x8] sm:$0xff]
        %v2350 = vld [vmem:[#allocation3 + $0x10] sm:$0xff]
        %v2351 = vld [vmem:[#allocation3 + $0x18] sm:$0xff]
        %2355 = vrot.lane.b32.xlu0 %v2349, 116
        %v2356 = vpop.permute.xlu0 %2355
        %2357 = vrot.lane.b32.xlu0 %v2350, 116
        %v2358 = vpop.permute.xlu0 %2357
        %2359 = vrot.lane.b32.xlu0 %v2351, 116
        %v2360 = vpop.permute.xlu0 %2359
        %v2361 = vsel %vm377, %v2356, %v2358
        %v2362 = vsel %vm377, %v2358, %v2360
        %2366 = vst [vmem:[#allocation5 + $0x438] sm:$0xff] %v2361
        %2367 = vst [vmem:[#allocation5 + $0x440] sm:$0xff] %v2362
        %2368 = vst.msk [vmem:[#allocation5 + $0x448] sm:$0xff] %vm592, %v2360
        %v2369 = vld [vmem:[#allocation3 + $0x8] sm:$0xff]
        %v2370 = vld [vmem:[#allocation3 + $0x10] sm:$0xff]
        %v2371 = vld [vmem:[#allocation3 + $0x18] sm:$0xff]
        %2375 = vrot.lane.b32.xlu0 %v2369, 115
        %v2376 = vpop.permute.xlu0 %2375
        %2377 = vrot.lane.b32.xlu0 %v2370, 115
        %v2378 = vpop.permute.xlu0 %2377
        %2379 = vrot.lane.b32.xlu0 %v2371, 115
        %v2380 = vpop.permute.xlu0 %2379
        %vm2381 = vcmask 941056
        %v2382 = vsel %vm2381, %v2376, %v2378
        %v2383 = vsel %vm2381, %v2378, %v2380
        %2387 = vst [vmem:[#allocation5 + $0x450] sm:$0xff] %v2382
        %2388 = vst [vmem:[#allocation5 + $0x458] sm:$0xff] %v2383
        %2389 = vst.msk [vmem:[#allocation5 + $0x460] sm:$0xff] %vm592, %v2380
        %v2390 = vld [vmem:[#allocation3 + $0x8] sm:$0xff]
        %v2391 = vld [vmem:[#allocation3 + $0x10] sm:$0xff]
        %v2392 = vld [vmem:[#allocation3 + $0x18] sm:$0xff]
        %2396 = vrot.lane.b32.xlu0 %v2390, 114
        %v2397 = vpop.permute.xlu0 %2396
        %2398 = vrot.lane.b32.xlu0 %v2391, 114
        %v2399 = vpop.permute.xlu0 %2398
        %2400 = vrot.lane.b32.xlu0 %v2392, 114
        %v2401 = vpop.permute.xlu0 %2400
        %vm2402 = vcmask 932864
        %v2403 = vsel %vm2402, %v2397, %v2399
        %v2404 = vsel %vm2402, %v2399, %v2401
        %2408 = vst [vmem:[#allocation5 + $0x468] sm:$0xff] %v2403
        %2409 = vst [vmem:[#allocation5 + $0x470] sm:$0xff] %v2404
        %2410 = vst.msk [vmem:[#allocation5 + $0x478] sm:$0xff] %vm592, %v2401
        %v2411 = vld [vmem:[#allocation3 + $0x8] sm:$0xff]
        %v2412 = vld [vmem:[#allocation3 + $0x10] sm:$0xff]
        %v2413 = vld [vmem:[#allocation3 + $0x18] sm:$0xff]
        %2417 = vrot.lane.b32.xlu0 %v2411, 113
        %v2418 = vpop.permute.xlu0 %2417
        %2419 = vrot.lane.b32.xlu0 %v2412, 113
        %v2420 = vpop.permute.xlu0 %2419
        %2421 = vrot.lane.b32.xlu0 %v2413, 113
        %v2422 = vpop.permute.xlu0 %2421
        %vm2423 = vcmask 924672
        %v2424 = vsel %vm2423, %v2418, %v2420
        %v2425 = vsel %vm2423, %v2420, %v2422
        %2429 = vst [vmem:[#allocation5 + $0x480] sm:$0xff] %v2424
        %2430 = vst [vmem:[#allocation5 + $0x488] sm:$0xff] %v2425
        %2431 = vst.msk [vmem:[#allocation5 + $0x490] sm:$0xff] %vm592, %v2422
        %v2432 = vld [vmem:[#allocation12] sm:$0xff]
        %v2433 = vld [vmem:[#allocation12 + $0x8] sm:$0xff]
        %v2434 = vld [vmem:[#allocation12 + $0x10] sm:$0xff]
        %v2435 = vld [vmem:[#allocation12 + $0x18] sm:$0xff]
        %v2436 = vld [vmem:[#allocation5] sm:$0xff]
        %v2437 = vld [vmem:[#allocation5 + $0x8] sm:$0xff]
        %v2438 = vld [vmem:[#allocation5 + $0x10] sm:$0xff]
        %v2439 = vld [vmem:[#allocation5 + $0x18] sm:$0xff]
        %v2440 = vld [vmem:[#allocation5 + $0x20] sm:$0xff]
        %v2441 = vld [vmem:[#allocation5 + $0x28] sm:$0xff]
        %v2442 = vld [vmem:[#allocation5 + $0x30] sm:$0xff]
        %v2443 = vld [vmem:[#allocation5 + $0x38] sm:$0xff]
        %v2444 = vld [vmem:[#allocation5 + $0x40] sm:$0xff]
        %v2445 = vld [vmem:[#allocation5 + $0x48] sm:$0xff]
        %v2446 = vld [vmem:[#allocation5 + $0x50] sm:$0xff]
        %v2447 = vld [vmem:[#allocation5 + $0x58] sm:$0xff]
        %v2448 = vld [vmem:[#allocation5 + $0x60] sm:$0xff]
        %v2449 = vld [vmem:[#allocation5 + $0x68] sm:$0xff]
        %v2450 = vld [vmem:[#allocation5 + $0x70] sm:$0xff]
        %v2451 = vld [vmem:[#allocation5 + $0x78] sm:$0xff]
        %v2452 = vld [vmem:[#allocation5 + $0x80] sm:$0xff]
        %v2453 = vld [vmem:[#allocation5 + $0x88] sm:$0xff]
        %v2454 = vld [vmem:[#allocation5 + $0x90] sm:$0xff]
        %v2455 = vld [vmem:[#allocation5 + $0x98] sm:$0xff]
        %v2456 = vld [vmem:[#allocation5 + $0xa0] sm:$0xff]
        %v2457 = vld [vmem:[#allocation5 + $0xa8] sm:$0xff]
        %v2458 = vld [vmem:[#allocation5 + $0xb0] sm:$0xff]
        %v2459 = vld [vmem:[#allocation5 + $0xb8] sm:$0xff]
        %v2460 = vld [vmem:[#allocation5 + $0xc0] sm:$0xff]
        %v2461 = vld [vmem:[#allocation5 + $0xc8] sm:$0xff]
        %v2462 = vld [vmem:[#allocation5 + $0xd0] sm:$0xff]
        %v2463 = vld [vmem:[#allocation5 + $0xd8] sm:$0xff]
        %v2464 = vld [vmem:[#allocation5 + $0xe0] sm:$0xff]
        %v2465 = vld [vmem:[#allocation5 + $0xe8] sm:$0xff]
        %v2466 = vld [vmem:[#allocation5 + $0xf0] sm:$0xff]
        %v2467 = vld [vmem:[#allocation5 + $0xf8] sm:$0xff]
        %v2468 = vld [vmem:[#allocation5 + $0x100] sm:$0xff]
        %v2469 = vld [vmem:[#allocation5 + $0x108] sm:$0xff]
        %v2470 = vld [vmem:[#allocation5 + $0x110] sm:$0xff]
        %v2471 = vld [vmem:[#allocation5 + $0x118] sm:$0xff]
        %v2472 = vld [vmem:[#allocation5 + $0x120] sm:$0xff]
        %v2473 = vld [vmem:[#allocation5 + $0x128] sm:$0xff]
        %v2474 = vld [vmem:[#allocation5 + $0x130] sm:$0xff]
        %v2475 = vld [vmem:[#allocation5 + $0x138] sm:$0xff]
        %v2476 = vld [vmem:[#allocation5 + $0x140] sm:$0xff]
        %v2477 = vld [vmem:[#allocation5 + $0x148] sm:$0xff]
        %v2478 = vld [vmem:[#allocation5 + $0x150] sm:$0xff]
        %v2479 = vld [vmem:[#allocation5 + $0x158] sm:$0xff]
        %v2480 = vld [vmem:[#allocation5 + $0x160] sm:$0xff]
        %v2481 = vld [vmem:[#allocation5 + $0x168] sm:$0xff]
        %v2482 = vld [vmem:[#allocation5 + $0x170] sm:$0xff]
        %v2483 = vld [vmem:[#allocation5 + $0x178] sm:$0xff]
        %v2484 = vld [vmem:[#allocation5 + $0x180] sm:$0xff]
        %v2485 = vld [vmem:[#allocation5 + $0x188] sm:$0xff]
        %v2486 = vld [vmem:[#allocation5 + $0x190] sm:$0xff]
        %v2487 = vld [vmem:[#allocation5 + $0x198] sm:$0xff]
        %v2488 = vld [vmem:[#allocation5 + $0x1a0] sm:$0xff]
        %v2489 = vld [vmem:[#allocation5 + $0x1a8] sm:$0xff]
        %v2490 = vld [vmem:[#allocation5 + $0x1b0] sm:$0xff]
        %v2491 = vld [vmem:[#allocation5 + $0x1b8] sm:$0xff]
        %v2492 = vld [vmem:[#allocation5 + $0x1c0] sm:$0xff]
        %v2493 = vld [vmem:[#allocation5 + $0x1c8] sm:$0xff]
        %v2494 = vld [vmem:[#allocation5 + $0x1d0] sm:$0xff]
        %v2495 = vld [vmem:[#allocation5 + $0x1d8] sm:$0xff]
        %v2496 = vld [vmem:[#allocation5 + $0x1e0] sm:$0xff]
        %v2497 = vld [vmem:[#allocation5 + $0x1e8] sm:$0xff]
        %v2498 = vld [vmem:[#allocation5 + $0x1f0] sm:$0xff]
        %v2499 = vld [vmem:[#allocation5 + $0x1f8] sm:$0xff]
        %v2500 = vld [vmem:[#allocation5 + $0x200] sm:$0xff]
        %v2501 = vld [vmem:[#allocation5 + $0x208] sm:$0xff]
        %v2502 = vld [vmem:[#allocation5 + $0x210] sm:$0xff]
        %v2503 = vld [vmem:[#allocation5 + $0x218] sm:$0xff]
        %v2504 = vld [vmem:[#allocation5 + $0x220] sm:$0xff]
        %v2505 = vld [vmem:[#allocation5 + $0x228] sm:$0xff]
        %v2506 = vld [vmem:[#allocation5 + $0x230] sm:$0xff]
        %v2507 = vld [vmem:[#allocation5 + $0x238] sm:$0xff]
        %v2508 = vld [vmem:[#allocation5 + $0x240] sm:$0xff]
        %v2509 = vld [vmem:[#allocation5 + $0x248] sm:$0xff]
        %v2510 = vld [vmem:[#allocation5 + $0x250] sm:$0xff]
        %v2511 = vld [vmem:[#allocation5 + $0x258] sm:$0xff]
        %v2512 = vld [vmem:[#allocation5 + $0x260] sm:$0xff]
        %v2513 = vld [vmem:[#allocation5 + $0x268] sm:$0xff]
        %v2514 = vld [vmem:[#allocation5 + $0x270] sm:$0xff]
        %v2515 = vld [vmem:[#allocation5 + $0x278] sm:$0xff]
        %v2516 = vld [vmem:[#allocation5 + $0x280] sm:$0xff]
        %v2517 = vld [vmem:[#allocation5 + $0x288] sm:$0xff]
        %v2518 = vld [vmem:[#allocation5 + $0x290] sm:$0xff]
        %v2519 = vld [vmem:[#allocation5 + $0x298] sm:$0xff]
        %v2520 = vld [vmem:[#allocation5 + $0x2a0] sm:$0xff]
        %v2521 = vld [vmem:[#allocation5 + $0x2a8] sm:$0xff]
        %v2522 = vld [vmem:[#allocation5 + $0x2b0] sm:$0xff]
        %v2523 = vld [vmem:[#allocation5 + $0x2b8] sm:$0xff]
        %v2524 = vld [vmem:[#allocation5 + $0x2c0] sm:$0xff]
        %v2525 = vld [vmem:[#allocation5 + $0x2c8] sm:$0xff]
        %v2526 = vld [vmem:[#allocation5 + $0x2d0] sm:$0xff]
        %v2527 = vld [vmem:[#allocation5 + $0x2d8] sm:$0xff]
        %v2528 = vld [vmem:[#allocation5 + $0x2e0] sm:$0xff]
        %v2529 = vld [vmem:[#allocation5 + $0x2e8] sm:$0xff]
        %v2530 = vld [vmem:[#allocation5 + $0x2f0] sm:$0xff]
        %v2531 = vld [vmem:[#allocation5 + $0x2f8] sm:$0xff]
        %v2532 = vld [vmem:[#allocation5 + $0x300] sm:$0xff]
        %v2533 = vld [vmem:[#allocation5 + $0x308] sm:$0xff]
        %v2534 = vld [vmem:[#allocation5 + $0x310] sm:$0xff]
        %v2535 = vld [vmem:[#allocation5 + $0x318] sm:$0xff]
        %v2536 = vld [vmem:[#allocation5 + $0x320] sm:$0xff]
        %v2537 = vld [vmem:[#allocation5 + $0x328] sm:$0xff]
        %v2538 = vld [vmem:[#allocation5 + $0x330] sm:$0xff]
        %v2539 = vld [vmem:[#allocation5 + $0x338] sm:$0xff]
        %v2540 = vld [vmem:[#allocation5 + $0x340] sm:$0xff]
        %v2541 = vld [vmem:[#allocation5 + $0x348] sm:$0xff]
        %v2542 = vld [vmem:[#allocation5 + $0x350] sm:$0xff]
        %v2543 = vld [vmem:[#allocation5 + $0x358] sm:$0xff]
        %v2544 = vld [vmem:[#allocation5 + $0x360] sm:$0xff]
        %v2545 = vld [vmem:[#allocation5 + $0x368] sm:$0xff]
        %v2546 = vld [vmem:[#allocation5 + $0x370] sm:$0xff]
        %v2547 = vld [vmem:[#allocation5 + $0x378] sm:$0xff]
        %v2548 = vld [vmem:[#allocation5 + $0x380] sm:$0xff]
        %v2549 = vld [vmem:[#allocation5 + $0x388] sm:$0xff]
        %v2550 = vld [vmem:[#allocation5 + $0x390] sm:$0xff]
        %v2551 = vld [vmem:[#allocation5 + $0x398] sm:$0xff]
        %v2552 = vld [vmem:[#allocation5 + $0x3a0] sm:$0xff]
        %v2553 = vld [vmem:[#allocation5 + $0x3a8] sm:$0xff]
        %v2554 = vld [vmem:[#allocation5 + $0x3b0] sm:$0xff]
        %v2555 = vld [vmem:[#allocation5 + $0x3b8] sm:$0xff]
        %v2556 = vld [vmem:[#allocation5 + $0x3c0] sm:$0xff]
        %v2557 = vld [vmem:[#allocation5 + $0x3c8] sm:$0xff]
        %v2558 = vld [vmem:[#allocation5 + $0x3d0] sm:$0xff]
        %v2559 = vld [vmem:[#allocation5 + $0x3d8] sm:$0xff]
        %v2560 = vld [vmem:[#allocation5 + $0x3e0] sm:$0xff]
        %v2561 = vld [vmem:[#allocation5 + $0x3e8] sm:$0xff]
        %v2562 = vld [vmem:[#allocation5 + $0x3f0] sm:$0xff]
        %v2563 = vld [vmem:[#allocation5 + $0x3f8] sm:$0xff]
        %v2564 = vld [vmem:[#allocation5 + $0x400] sm:$0xff]
        %v2565 = vld [vmem:[#allocation5 + $0x408] sm:$0xff]
        %v2566 = vld [vmem:[#allocation5 + $0x410] sm:$0xff]
        %v2567 = vld [vmem:[#allocation5 + $0x418] sm:$0xff]
        %v2568 = vld [vmem:[#allocation5 + $0x420] sm:$0xff]
        %v2569 = vld [vmem:[#allocation5 + $0x428] sm:$0xff]
        %v2570 = vld [vmem:[#allocation5 + $0x430] sm:$0xff]
        %v2571 = vld [vmem:[#allocation5 + $0x438] sm:$0xff]
        %v2572 = vld [vmem:[#allocation5 + $0x440] sm:$0xff]
        %v2573 = vld [vmem:[#allocation5 + $0x448] sm:$0xff]
        %v2574 = vld [vmem:[#allocation5 + $0x450] sm:$0xff]
        %v2575 = vld [vmem:[#allocation5 + $0x458] sm:$0xff]
        %v2576 = vld [vmem:[#allocation5 + $0x460] sm:$0xff]
        %v2577 = vld [vmem:[#allocation5 + $0x468] sm:$0xff]
        %v2578 = vld [vmem:[#allocation5 + $0x470] sm:$0xff]
        %v2579 = vld [vmem:[#allocation5 + $0x478] sm:$0xff]
        %v2580 = vld [vmem:[#allocation5 + $0x480] sm:$0xff]
        %v2581 = vld [vmem:[#allocation5 + $0x488] sm:$0xff]
        %v2582 = vld [vmem:[#allocation5 + $0x490] sm:$0xff]
        %v2583 = vld [vmem:[#allocation14] sm:$0xff]
        %2585 = vset.pattern.permute.xlu0 0
        %2586 = vperm.xlu0 %2585, %v2583
        %v2587 = vpop.permute.xlu0 %2586
        %v2590 = vsel %vm2253, %v2435, 0
        %2592 = vmatprep.subr.mxu0 %v2437
        %2593 = vmatpush1.msra.mxu0 %v2436
        %2594 = vmatprep.subr.mxu0 %v2440
        %2595 = vmatpush1.msra.mxu0 %v2439
        %2596 = vmatprep.subr.mxu0 %v2443
        %2597 = vmatpush1.msra.mxu0 %v2442
        %2598 = vmatprep.subr.mxu0 %v2446
        %2599 = vmatpush1.msra.mxu0 %v2445
        %2600 = vmatprep.subr.mxu0 %v2449
        %2601 = vmatpush1.msra.mxu0 %v2448
        %2602 = vmatprep.subr.mxu0 %v2452
        %2603 = vmatpush1.msra.mxu0 %v2451
        %2604 = vmatprep.subr.mxu0 %v2455
        %2605 = vmatpush1.msra.mxu0 %v2454
        %2606 = vmatprep.subr.mxu0 %v2458
        %2607 = vmatpush1.msra.mxu0 %v2457
        %2608 = vmatprep.subr.mxu0 %v2461
        %2609 = vmatpush1.msra.mxu0 %v2460
        %2610 = vmatprep.subr.mxu0 %v2464
        %2611 = vmatpush1.msra.mxu0 %v2463
        %2612 = vmatprep.subr.mxu0 %v2467
        %2613 = vmatpush1.msra.mxu0 %v2466
        %2614 = vmatprep.subr.mxu0 %v2470
        %2615 = vmatpush1.msra.mxu0 %v2469
        %2616 = vmatprep.subr.mxu0 %v2473
        %2617 = vmatpush1.msra.mxu0 %v2472
        %2618 = vmatprep.subr.mxu0 %v2476
        %2619 = vmatpush1.msra.mxu0 %v2475
        %2620 = vmatprep.subr.mxu0 %v2479
        %2621 = vmatpush1.msra.mxu0 %v2478
        %2622 = vmatprep.subr.mxu0 %v2482
        %2623 = vmatpush1.msra.mxu0 %v2481
        %2624 = vmatprep.subr.mxu0 %v2485
        %2625 = vmatpush1.msra.mxu0 %v2484
        %2626 = vmatprep.subr.mxu0 %v2488
        %2627 = vmatpush1.msra.mxu0 %v2487
        %2628 = vmatprep.subr.mxu0 %v2491
        %2629 = vmatpush1.msra.mxu0 %v2490
        %2630 = vmatprep.subr.mxu0 %v2494
        %2631 = vmatpush1.msra.mxu0 %v2493
        %2632 = vmatprep.subr.mxu0 %v2497
        %2633 = vmatpush1.msra.mxu0 %v2496
        %2634 = vmatprep.subr.mxu0 %v2500
        %2635 = vmatpush1.msra.mxu0 %v2499
        %2636 = vmatprep.subr.mxu0 %v2503
        %2637 = vmatpush1.msra.mxu0 %v2502
        %2638 = vmatprep.subr.mxu0 %v2506
        %2639 = vmatpush1.msra.mxu0 %v2505
        %2640 = vmatprep.subr.mxu0 %v2509
        %2641 = vmatpush1.msra.mxu0 %v2508
        %2642 = vmatprep.subr.mxu0 %v2512
        %2643 = vmatpush1.msra.mxu0 %v2511
        %2644 = vmatprep.subr.mxu0 %v2515
        %2645 = vmatpush1.msra.mxu0 %v2514
        %2646 = vmatprep.subr.mxu0 %v2518
        %2647 = vmatpush1.msra.mxu0 %v2517
        %2648 = vmatprep.subr.mxu0 %v2521
        %2649 = vmatpush1.msra.mxu0 %v2520
        %2650 = vmatprep.subr.mxu0 %v2524
        %2651 = vmatpush1.msra.mxu0 %v2523
        %2652 = vmatprep.subr.mxu0 %v2527
        %2653 = vmatpush1.msra.mxu0 %v2526
        %2654 = vmatprep.subr.mxu0 %v2530
        %2655 = vmatpush1.msra.mxu0 %v2529
        %2656 = vmatprep.mubr.f32.mxu0 %v2433
        %2657 = vmatmul.mubr.f32.gmra.mrb[0].mxu0 %v2432
        %v2658 = vpop.f32.mrb[0].mxu0
        %v2659 = vadd.f32 %v2587, %v2658
        %v2660 = vpop.f32.mrb[0].mxu0
        %v2661 = vadd.f32 %v2587, %v2660
        %2662 = vdwg.mxu0
        %2663 = vmatprep.subr.mxu0 %v2533
        %2664 = vmatpush1.msra.mxu0 %v2532
        %2665 = vmatprep.subr.mxu0 %v2536
        %2666 = vmatpush1.msra.mxu0 %v2535
        %2667 = vmatprep.subr.mxu0 %v2539
        %2668 = vmatpush1.msra.mxu0 %v2538
        %2669 = vmatprep.subr.mxu0 %v2542
        %2670 = vmatpush1.msra.mxu0 %v2541
        %2671 = vmatprep.subr.mxu0 %v2545
        %2672 = vmatpush1.msra.mxu0 %v2544
        %2673 = vmatprep.subr.mxu0 %v2548
        %2674 = vmatpush1.msra.mxu0 %v2547
        %2675 = vmatprep.subr.mxu0 %v2551
        %2676 = vmatpush1.msra.mxu0 %v2550
        %2677 = vmatprep.subr.mxu0 %v2554
        %2678 = vmatpush1.msra.mxu0 %v2553
        %2679 = vmatprep.subr.mxu0 %v2557
        %2680 = vmatpush1.msra.mxu0 %v2556
        %2681 = vmatprep.subr.mxu0 %v2560
        %2682 = vmatpush1.msra.mxu0 %v2559
        %2683 = vmatprep.subr.mxu0 %v2563
        %2684 = vmatpush1.msra.mxu0 %v2562
        %2685 = vmatprep.subr.mxu0 %v2566
        %2686 = vmatpush1.msra.mxu0 %v2565
        %2687 = vmatprep.subr.mxu0 %v2569
        %2688 = vmatpush1.msra.mxu0 %v2568
        %2689 = vmatprep.subr.mxu0 %v2572
        %2690 = vmatpush1.msra.mxu0 %v2571
        %2691 = vmatprep.subr.mxu0 %v2575
        %2692 = vmatpush1.msra.mxu0 %v2574
        %2693 = vmatprep.subr.mxu0 %v2578
        %2694 = vmatpush1.msra.mxu0 %v2577
        %2695 = vmatprep.subr.mxu0 %v2581
        %2696 = vmatpush1.msra.mxu0 %v2580
        %2697 = vmatprep.subr.mxu0 0.0
        %2698 = vmatpush1.msra.mxu0 0.0
        %2699 = vmatprep.subr.mxu0 0.0
        %2700 = vmatpush1.msra.mxu0 0.0
        %2701 = vmatprep.subr.mxu0 0.0
        %2702 = vmatpush1.msra.mxu0 0.0
        %2703 = vmatprep.subr.mxu0 0.0
        %2704 = vmatpush1.msra.mxu0 0.0
        %2705 = vmatprep.subr.mxu0 0.0
        %2706 = vmatpush1.msra.mxu0 0.0
        %2707 = vmatprep.subr.mxu0 0.0
        %2708 = vmatpush1.msra.mxu0 0.0
        %2709 = vmatprep.subr.mxu0 0.0
        %2710 = vmatpush1.msra.mxu0 0.0
        %2711 = vmatprep.subr.mxu0 0.0
        %2712 = vmatpush1.msra.mxu0 0.0
        %2713 = vmatprep.subr.mxu0 0.0
        %2714 = vmatpush1.msra.mxu0 0.0
        %2715 = vmatprep.subr.mxu0 0.0
        %2716 = vmatpush1.msra.mxu0 0.0
        %2717 = vmatprep.subr.mxu0 0.0
        %2718 = vmatpush1.msra.mxu0 0.0
        %2719 = vmatprep.subr.mxu0 0.0
        %2720 = vmatpush1.msra.mxu0 0.0
        %2721 = vmatprep.subr.mxu0 0.0
        %2722 = vmatpush1.msra.mxu0 0.0
        %2723 = vmatprep.subr.mxu0 0.0
        %2724 = vmatpush1.msra.mxu0 0.0
        %2725 = vmatprep.subr.mxu0 0.0
        %2726 = vmatpush1.msra.mxu0 0.0
        %2727 = vmatprep.mubr.f32.mxu0 %v2590
        %2728 = vmatmul.mubr.f32.gmra.mrb[0].mxu0 %v2434
        %v2729 = vpop.f32.mrb[0].mxu0
        %v2730 = vadd.f32 %v2659, %v2729
        %v2731 = vpop.f32.mrb[0].mxu0
        %v2732 = vadd.f32 %v2661, %v2731
        %2733 = vdwg.mxu0
        %2734 = vmatprep.subr.mxu0 0.0
        %2735 = vmatpush1.msra.mxu0 %v2438
        %2736 = vmatprep.subr.mxu0 0.0
        %2737 = vmatpush1.msra.mxu0 %v2441
        %2738 = vmatprep.subr.mxu0 0.0
        %2739 = vmatpush1.msra.mxu0 %v2444
        %2740 = vmatprep.subr.mxu0 0.0
        %2741 = vmatpush1.msra.mxu0 %v2447
        %2742 = vmatprep.subr.mxu0 0.0
        %2743 = vmatpush1.msra.mxu0 %v2450
        %2744 = vmatprep.subr.mxu0 0.0
        %2745 = vmatpush1.msra.mxu0 %v2453
        %2746 = vmatprep.subr.mxu0 0.0
        %2747 = vmatpush1.msra.mxu0 %v2456
        %2748 = vmatprep.subr.mxu0 0.0
        %2749 = vmatpush1.msra.mxu0 %v2459
        %2750 = vmatprep.subr.mxu0 0.0
        %2751 = vmatpush1.msra.mxu0 %v2462
        %2752 = vmatprep.subr.mxu0 0.0
        %2753 = vmatpush1.msra.mxu0 %v2465
        %2754 = vmatprep.subr.mxu0 0.0
        %2755 = vmatpush1.msra.mxu0 %v2468
        %2756 = vmatprep.subr.mxu0 0.0
        %2757 = vmatpush1.msra.mxu0 %v2471
        %2758 = vmatprep.subr.mxu0 0.0
        %2759 = vmatpush1.msra.mxu0 %v2474
        %2760 = vmatprep.subr.mxu0 0.0
        %2761 = vmatpush1.msra.mxu0 %v2477
        %2762 = vmatprep.subr.mxu0 0.0
        %2763 = vmatpush1.msra.mxu0 %v2480
        %2764 = vmatprep.subr.mxu0 0.0
        %2765 = vmatpush1.msra.mxu0 %v2483
        %2766 = vmatprep.subr.mxu0 0.0
        %2767 = vmatpush1.msra.mxu0 %v2486
        %2768 = vmatprep.subr.mxu0 0.0
        %2769 = vmatpush1.msra.mxu0 %v2489
        %2770 = vmatprep.subr.mxu0 0.0
        %2771 = vmatpush1.msra.mxu0 %v2492
        %2772 = vmatprep.subr.mxu0 0.0
        %2773 = vmatpush1.msra.mxu0 %v2495
        %2774 = vmatprep.subr.mxu0 0.0
        %2775 = vmatpush1.msra.mxu0 %v2498
        %2776 = vmatprep.subr.mxu0 0.0
        %2777 = vmatpush1.msra.mxu0 %v2501
        %2778 = vmatprep.subr.mxu0 0.0
        %2779 = vmatpush1.msra.mxu0 %v2504
        %2780 = vmatprep.subr.mxu0 0.0
        %2781 = vmatpush1.msra.mxu0 %v2507
        %2782 = vmatprep.subr.mxu0 0.0
        %2783 = vmatpush1.msra.mxu0 %v2510
        %2784 = vmatprep.subr.mxu0 0.0
        %2785 = vmatpush1.msra.mxu0 %v2513
        %2786 = vmatprep.subr.mxu0 0.0
        %2787 = vmatpush1.msra.mxu0 %v2516
        %2788 = vmatprep.subr.mxu0 0.0
        %2789 = vmatpush1.msra.mxu0 %v2519
        %2790 = vmatprep.subr.mxu0 0.0
        %2791 = vmatpush1.msra.mxu0 %v2522
        %2792 = vmatprep.subr.mxu0 0.0
        %2793 = vmatpush1.msra.mxu0 %v2525
        %2794 = vmatprep.subr.mxu0 0.0
        %2795 = vmatpush1.msra.mxu0 %v2528
        %2796 = vmatprep.subr.mxu0 0.0
        %2797 = vmatpush1.msra.mxu0 %v2531
        %2798 = vmatprep.mubr.f32.mxu0 %v2433
        %2799 = vmatmul.mubr.f32.gmra.mrb[0].mxu0 %v2432
        %v2800 = vpop.f32.mrb[0].mxu0
        %v2801 = vadd.f32 %v2587, %v2800
        %v2802 = vpop.f32.mrb[0].mxu0
        %2803 = vdwg.mxu0
        %2804 = vmatprep.subr.mxu0 0.0
        %2805 = vmatpush1.msra.mxu0 %v2534
        %2806 = vmatprep.subr.mxu0 0.0
        %2807 = vmatpush1.msra.mxu0 %v2537
        %2808 = vmatprep.subr.mxu0 0.0
        %2809 = vmatpush1.msra.mxu0 %v2540
        %2810 = vmatprep.subr.mxu0 0.0
        %2811 = vmatpush1.msra.mxu0 %v2543
        %2812 = vmatprep.subr.mxu0 0.0
        %2813 = vmatpush1.msra.mxu0 %v2546
        %2814 = vmatprep.subr.mxu0 0.0
        %2815 = vmatpush1.msra.mxu0 %v2549
        %2816 = vmatprep.subr.mxu0 0.0
        %2817 = vmatpush1.msra.mxu0 %v2552
        %2818 = vmatprep.subr.mxu0 0.0
        %2819 = vmatpush1.msra.mxu0 %v2555
        %2820 = vmatprep.subr.mxu0 0.0
        %2821 = vmatpush1.msra.mxu0 %v2558
        %2822 = vmatprep.subr.mxu0 0.0
        %2823 = vmatpush1.msra.mxu0 %v2561
        %2824 = vmatprep.subr.mxu0 0.0
        %2825 = vmatpush1.msra.mxu0 %v2564
        %2826 = vmatprep.subr.mxu0 0.0
        %2827 = vmatpush1.msra.mxu0 %v2567
        %2828 = vmatprep.subr.mxu0 0.0
        %2829 = vmatpush1.msra.mxu0 %v2570
        %2830 = vmatprep.subr.mxu0 0.0
        %2831 = vmatpush1.msra.mxu0 %v2573
        %2832 = vmatprep.subr.mxu0 0.0
        %2833 = vmatpush1.msra.mxu0 %v2576
        %2834 = vmatprep.subr.mxu0 0.0
        %2835 = vmatpush1.msra.mxu0 %v2579
        %2836 = vmatprep.subr.mxu0 0.0
        %2837 = vmatpush1.msra.mxu0 %v2582
        %2838 = vmatprep.subr.mxu0 0.0
        %2839 = vmatpush1.msra.mxu0 0.0
        %2840 = vmatprep.subr.mxu0 0.0
        %2841 = vmatpush1.msra.mxu0 0.0
        %2842 = vmatprep.subr.mxu0 0.0
        %2843 = vmatpush1.msra.mxu0 0.0
        %2844 = vmatprep.subr.mxu0 0.0
        %2845 = vmatpush1.msra.mxu0 0.0
        %2846 = vmatprep.subr.mxu0 0.0
        %2847 = vmatpush1.msra.mxu0 0.0
        %2848 = vmatprep.subr.mxu0 0.0
        %2849 = vmatpush1.msra.mxu0 0.0
        %2850 = vmatprep.subr.mxu0 0.0
        %2851 = vmatpush1.msra.mxu0 0.0
        %2852 = vmatprep.subr.mxu0 0.0
        %2853 = vmatpush1.msra.mxu0 0.0
        %2854 = vmatprep.subr.mxu0 0.0
        %2855 = vmatpush1.msra.mxu0 0.0
        %2856 = vmatprep.subr.mxu0 0.0
        %2857 = vmatpush1.msra.mxu0 0.0
        %2858 = vmatprep.subr.mxu0 0.0
        %2859 = vmatpush1.msra.mxu0 0.0
        %2860 = vmatprep.subr.mxu0 0.0
        %2861 = vmatpush1.msra.mxu0 0.0
        %2862 = vmatprep.subr.mxu0 0.0
        %2863 = vmatpush1.msra.mxu0 0.0
        %2864 = vmatprep.subr.mxu0 0.0
        %2865 = vmatpush1.msra.mxu0 0.0
        %2866 = vmatprep.subr.mxu0 0.0
        %2867 = vmatpush1.msra.mxu0 0.0
        %2868 = vmatprep.mubr.f32.mxu0 %v2590
        %2869 = vmatmul.mubr.f32.gmra.mrb[0].mxu0 %v2434
        %v2870 = vpop.f32.mrb[0].mxu0
        %v2871 = vadd.f32 %v2801, %v2870
        %v2872 = vpop.f32.mrb[0].mxu0
        %2873 = vdwg.mxu0
        %v2874 = vxor.u32 %v2730, 2147483648
        %v2875 = vxor.u32 %v2732, 2147483648
        %v2876 = vxor.u32 %v2871, 2147483648
        %v2877 = vmul.f32 %v2874, 1.442695
        %v2878 = vpow.pop %v2877
        %v2879 = vmul.f32 %v2875, 1.442695
        %v2880 = vpow.pop %v2879
        %v2881 = vmul.f32 %v2876, 1.442695
        %v2882 = vpow.pop %v2881
        %v2883 = vadd.f32 %v2878, 1.0
        %v2884 = vadd.f32 %v2880, 1.0
        %v2885 = vadd.f32 %v2882, 1.0
        %v2886 = vrcp.pop %v2883
        %v2887 = vmul.f32 1.0, %v2886
        %v2888 = vrcp.pop %v2884
        %v2889 = vmul.f32 1.0, %v2888
        %v2890 = vrcp.pop %v2885
        %v2891 = vmul.f32 1.0, %v2890
        %v2892 = vld [vmem:[#allocation15] sm:$0xff]
        %v2893 = vld [vmem:[#allocation15 + $0x8] sm:$0xff]
        %2895 = vset.pattern.permute.xlu0 0
        %2896 = vperm.xlu0 %2895, %v2892
        %v2897 = vpop.permute.xlu0 %2896
        %2900 = vset.pattern.permute.xlu0 0
        %2901 = vperm.xlu0 %2900, %v2893
        %v2902 = vpop.permute.xlu0 %2901
        %v2904 = vlaneseq
        %v2905 = vshrl.u32 %v2904, 7
        %v2906 = vsub.s32 0, %v2905
        %v2907 = vrot.slane %v2887, %v2906
        %v2908 = vlaneseq
        %v2909 = vshrl.u32 %v2908, 7
        %v2910 = vsub.s32 0, %v2909
        %v2911 = vrot.slane %v2889, %v2910
        %v2912 = vlaneseq
        %v2913 = vshrl.u32 %v2912, 7
        %v2914 = vsub.s32 0, %v2913
        %v2915 = vrot.slane %v2891, %v2914
        %v2916 = vmul.f32 %v2897, %v2907
        %v2917 = vmul.f32 %v2897, %v2911
        %v2918 = vmul.f32 %v2897, %v2915
        %v2919 = vmul.f32 %v2902, %v2907
        %v2920 = vmul.f32 %v2902, %v2911
        %v2921 = vmul.f32 %v2902, %v2915
        %2922 = vset.pattern.permute.xlu0 1
        %2923 = vperm.xlu0 %2922, %v2892
        %v2924 = vpop.permute.xlu0 %2923
        %2926 = vset.pattern.permute.xlu0 1
        %2927 = vperm.xlu0 %2926, %v2893
        %v2928 = vpop.permute.xlu0 %2927
        %v2930 = vlaneseq
        %v2931 = vshrl.u32 %v2930, 7
        %v2932 = vsub.s32 1, %v2931
        %v2933 = vrot.slane %v2887, %v2932
        %v2934 = vlaneseq
        %v2935 = vshrl.u32 %v2934, 7
        %v2936 = vsub.s32 1, %v2935
        %v2937 = vrot.slane %v2889, %v2936
        %v2938 = vlaneseq
        %v2939 = vshrl.u32 %v2938, 7
        %v2940 = vsub.s32 1, %v2939
        %v2941 = vrot.slane %v2891, %v2940
        %v2942 = vmul.f32 %v2924, %v2933
        %v2943 = vmul.f32 %v2924, %v2937
        %v2944 = vmul.f32 %v2924, %v2941
        %v2945 = vmul.f32 %v2928, %v2933
        %v2946 = vmul.f32 %v2928, %v2937
        %v2947 = vmul.f32 %v2928, %v2941
        %v2948 = vadd.f32 %v2916, %v2942
        %v2949 = vadd.f32 %v2917, %v2943
        %v2950 = vadd.f32 %v2918, %v2944
        %v2951 = vadd.f32 %v2919, %v2945
        %v2952 = vadd.f32 %v2920, %v2946
        %v2953 = vadd.f32 %v2921, %v2947
        %v2954 = vld [vmem:[#allocation2] sm:$0xff]
        %v2955 = vld [vmem:[#allocation2 + $0x8] sm:$0xff]
        %v2956 = vld [vmem:[#allocation2 + $0x10] sm:$0xff]
        %v2957 = vld [vmem:[#allocation2 + $0x18] sm:$0xff]
        %v2958 = vld [vmem:[#allocation2 + $0x20] sm:$0xff]
        %v2959 = vld [vmem:[#allocation2 + $0x28] sm:$0xff]
        %v2960 = vld [vmem:[#allocation2 + $0x30] sm:$0xff]
        %v2961 = vld [vmem:[#allocation2 + $0x38] sm:$0xff]
        %2968 = vrot.lane.b32.xlu0 %v2948, 74
        %v2969 = vpop.permute.xlu0 %2968
        %2970 = vrot.lane.b32.xlu0 %v2949, 74
        %v2971 = vpop.permute.xlu0 %2970
        %2972 = vrot.lane.b32.xlu0 %v2950, 74
        %v2973 = vpop.permute.xlu0 %2972
        %2974 = vrot.lane.b32.xlu0 %v2951, 74
        %v2975 = vpop.permute.xlu0 %2974
        %2976 = vrot.lane.b32.xlu0 %v2952, 74
        %v2977 = vpop.permute.xlu0 %2976
        %2978 = vrot.lane.b32.xlu0 %v2953, 74
        %v2979 = vpop.permute.xlu0 %2978
        %v2980 = vsel %vm1262, %v2969, %v2971
        %v2981 = vsel %vm1262, %v2971, %v2973
        %v2982 = vsel %vm1262, %v2975, %v2977
        %v2983 = vsel %vm1262, %v2977, %v2979
        %v2992 = vmul.f32 %v2954, %v2969
        %v2993 = vmul.f32 %v2955, %v2980
        %v2994 = vmul.f32 %v2956, %v2981
        %v2995 = vmul.f32 %v2957, %v2973
        %v2996 = vmul.f32 %v2958, %v2975
        %v2997 = vmul.f32 %v2959, %v2982
        %v2998 = vmul.f32 %v2960, %v2983
        %v2999 = vmul.f32 %v2961, %v2979
        %3002 = vrot.lane.b32.xlu0 %v2992, 51
        %v3003 = vpop.permute.xlu0 %3002
        %3004 = vrot.lane.b32.xlu0 %v2996, 51
        %v3005 = vpop.permute.xlu0 %3004
        %3008 = vst.msk [vmem:[%s373] sm:$0xff] %vm1067, %v3003
        %3009 = vst.msk [vmem:[%s373 + $0x10] sm:$0xff] %vm1067, %v3005
        %3010 = vrot.lane.b32.xlu0 %v2992, 45
        %v3011 = vpop.permute.xlu0 %3010
        %3012 = vrot.lane.b32.xlu0 %v2996, 45
        %v3013 = vpop.permute.xlu0 %3012
        %vm3016 = vcmask 261248
        %3017 = vst.msk [vmem:[%s373] sm:$0xff] %vm3016, %v3011
        %3018 = vst.msk [vmem:[%s373 + $0x10] sm:$0xff] %vm3016, %v3013
        %3021 = vrot.lane.b32.xlu0 %v2992, 39
        %v3022 = vpop.permute.xlu0 %3021
        %3023 = vrot.lane.b32.xlu0 %v2993, 39
        %v3024 = vpop.permute.xlu0 %3023
        %3025 = vrot.lane.b32.xlu0 %v2996, 39
        %v3026 = vpop.permute.xlu0 %3025
        %3027 = vrot.lane.b32.xlu0 %v2997, 39
        %v3028 = vpop.permute.xlu0 %3027
        %vm3029 = vcmask 318464
        %v3030 = vsel %vm3029, %v3022, %v3024
        %v3031 = vsel %vm3029, %v3026, %v3028
        %vm3034 = vcmask 392448
        %3035 = vst.msk [vmem:[%s373] sm:$0xff] %vm3034, %v3030
        %3036 = vst.msk [vmem:[%s373 + $0x10] sm:$0xff] %vm3034, %v3031
        %3037 = vrot.lane.b32.xlu0 %v2993, 33
        %v3038 = vpop.permute.xlu0 %3037
        %3039 = vrot.lane.b32.xlu0 %v2997, 33
        %v3040 = vpop.permute.xlu0 %3039
        %vm3043 = vcmask 523648
        %3044 = vst.msk [vmem:[%s373] sm:$0xff] %vm3043, %v3038
        %3045 = vst.msk [vmem:[%s373 + $0x10] sm:$0xff] %vm3043, %v3040
        %3046 = vrot.lane.b32.xlu0 %v2993, 27
        %v3047 = vpop.permute.xlu0 %3046
        %3048 = vrot.lane.b32.xlu0 %v2997, 27
        %v3049 = vpop.permute.xlu0 %3048
        %vm3052 = vcmask 654848
        %3053 = vst.msk [vmem:[%s373] sm:$0xff] %vm3052, %v3047
        %3054 = vst.msk [vmem:[%s373 + $0x10] sm:$0xff] %vm3052, %v3049
        %3055 = vrot.lane.b32.xlu0 %v2993, 21
        %v3056 = vpop.permute.xlu0 %3055
        %3057 = vrot.lane.b32.xlu0 %v2997, 21
        %v3058 = vpop.permute.xlu0 %3057
        %vm3061 = vcmask 786048
        %3062 = vst.msk [vmem:[%s373] sm:$0xff] %vm3061, %v3056
        %3063 = vst.msk [vmem:[%s373 + $0x10] sm:$0xff] %vm3061, %v3058
        %3064 = vrot.lane.b32.xlu0 %v2993, 15
        %v3065 = vpop.permute.xlu0 %3064
        %3066 = vrot.lane.b32.xlu0 %v2997, 15
        %v3067 = vpop.permute.xlu0 %3066
        %vm3070 = vcmask 917248
        %3071 = vst.msk [vmem:[%s373] sm:$0xff] %vm3070, %v3065
        %3072 = vst.msk [vmem:[%s373 + $0x10] sm:$0xff] %vm3070, %v3067
        %3073 = vrot.lane.b32.xlu0 %v2993, 9
        %v3074 = vpop.permute.xlu0 %3073
        %3075 = vrot.lane.b32.xlu0 %v2997, 9
        %v3076 = vpop.permute.xlu0 %3075
        %vm3079 = vcmask 1048448
        %3080 = vst.msk [vmem:[%s373] sm:$0xff] %vm3079, %v3074
        %3081 = vst.msk [vmem:[%s373 + $0x10] sm:$0xff] %vm3079, %v3076
        %3084 = vrot.lane.b32.xlu0 %v2993, 3
        %v3085 = vpop.permute.xlu0 %3084
        %3086 = vrot.lane.b32.xlu0 %v2994, 3
        %v3087 = vpop.permute.xlu0 %3086
        %3088 = vrot.lane.b32.xlu0 %v2997, 3
        %v3089 = vpop.permute.xlu0 %3088
        %3090 = vrot.lane.b32.xlu0 %v2998, 3
        %v3091 = vpop.permute.xlu0 %3090
        %vm3092 = vcmask 23552
        %v3093 = vsel %vm3092, %v3085, %v3087
        %v3094 = vsel %vm3092, %v3089, %v3091
        %3097 = vst.msk [vmem:[%s373 + $0x8] sm:$0xff] %vm1067, %v3093
        %3098 = vst.msk [vmem:[%s373 + $0x18] sm:$0xff] %vm1067, %v3094
        %3099 = vrot.lane.b32.xlu0 %v2994, 125
        %v3100 = vpop.permute.xlu0 %3099
        %3101 = vrot.lane.b32.xlu0 %v2998, 125
        %v3102 = vpop.permute.xlu0 %3101
        %3105 = vst.msk [vmem:[%s373 + $0x8] sm:$0xff] %vm3016, %v3100
        %3106 = vst.msk [vmem:[%s373 + $0x18] sm:$0xff] %vm3016, %v3102
        %3107 = vrot.lane.b32.xlu0 %v2994, 119
        %v3108 = vpop.permute.xlu0 %3107
        %3109 = vrot.lane.b32.xlu0 %v2998, 119
        %v3110 = vpop.permute.xlu0 %3109
        %3113 = vst.msk [vmem:[%s373 + $0x8] sm:$0xff] %vm3034, %v3108
        %3114 = vst.msk [vmem:[%s373 + $0x18] sm:$0xff] %vm3034, %v3110
        %3115 = vrot.lane.b32.xlu0 %v2994, 113
        %v3116 = vpop.permute.xlu0 %3115
        %3117 = vrot.lane.b32.xlu0 %v2998, 113
        %v3118 = vpop.permute.xlu0 %3117
        %3121 = vst.msk [vmem:[%s373 + $0x8] sm:$0xff] %vm3043, %v3116
        %3122 = vst.msk [vmem:[%s373 + $0x18] sm:$0xff] %vm3043, %v3118
        %3123 = vrot.lane.b32.xlu0 %v2994, 107
        %v3124 = vpop.permute.xlu0 %3123
        %3125 = vrot.lane.b32.xlu0 %v2998, 107
        %v3126 = vpop.permute.xlu0 %3125
        %3129 = vst.msk [vmem:[%s373 + $0x8] sm:$0xff] %vm3052, %v3124
        %3130 = vst.msk [vmem:[%s373 + $0x18] sm:$0xff] %vm3052, %v3126
        %3131 = vrot.lane.b32.xlu0 %v2994, 101
        %v3132 = vpop.permute.xlu0 %3131
        %3133 = vrot.lane.b32.xlu0 %v2998, 101
        %v3134 = vpop.permute.xlu0 %3133
        %3137 = vst.msk [vmem:[%s373 + $0x8] sm:$0xff] %vm3061, %v3132
        %3138 = vst.msk [vmem:[%s373 + $0x18] sm:$0xff] %vm3061, %v3134
        %3141 = vrot.lane.b32.xlu0 %v2995, 95
        %v3142 = vpop.permute.xlu0 %3141
        %3143 = vrot.lane.b32.xlu0 %v2999, 95
        %v3144 = vpop.permute.xlu0 %3143
        %3147 = vst.msk [vmem:[%s373 + $0x8] sm:$0xff] %vm3070, %v3142
        %3148 = vst.msk [vmem:[%s373 + $0x18] sm:$0xff] %vm3070, %v3144
        %3149 = vrot.lane.b32.xlu0 %v2995, 89
        %v3150 = vpop.permute.xlu0 %3149
        %3151 = vrot.lane.b32.xlu0 %v2999, 89
        %v3152 = vpop.permute.xlu0 %3151
        %3155 = vst.msk [vmem:[%s373 + $0x8] sm:$0xff] %vm3079, %v3150
        %3156 = vst.msk [vmem:[%s373 + $0x18] sm:$0xff] %vm3079, %v3152
        %s3157 = sand.u32 %s187, 1
        %s3158 = scalar_lea.sflag [#allocation8], %s3157
        %s3159 = sand.u32 %s187, 1
        %s3160 = smul.addr %s3159, 32
        %s3161 = scalar_lea.vmem [#allocation18], %s3160
        // Predicated region
        $region77: #{tpu_custom_call.1} parent=47 // pred_check
          %p3162 = pneg %p197
        $region78: #{tpu_custom_call.1} parent=47 // pred_check_branch
          %3164 = sbr.rel (%p3162) target = $region80
        $region79: #{tpu_custom_call.1} parent=47 // pred_region
          %s3166 = ssub.s32 512, 512
          %3167 = vsyncadd %s3158, %s3166
          %s3168 = smul.addr %s27, 4
          %s3169 = smul.addr %s3168, 128
          %s3170 = scalar_lea.hbm %s7, %s3169
          %s3171 = sshll.u32 %s3161, 4
          %s3172 = int_to_ptr.vmem [resolvable:$true] %s3171
          %3177 = dma.vmem_to_hbm [thread:$0]  %s3172, 512, %s3170, %s3158, 256, 256, 16
        $region80: #{tpu_custom_call.1} parent=47 // pred_fallthru
          _
      $region48: #{tpu_custom_call.1} parent=5 // pred_fallthru
        _
      %p3178 = scmp.le.s32.totalorder 2, %s22
      // Predicated region
      $region81: #{tpu_custom_call.1} parent=5 // pred_check
        %p3179 = pneg %p3178
      $region82: #{tpu_custom_call.1} parent=5 // pred_check_branch
        %3181 = sbr.rel (%p3179) target = $region84
      $region83: #{tpu_custom_call.1} parent=5 // pred_region
        %s3182 = ssub.s32 %s22, 2
        // Predicated region
        $region85: #{tpu_custom_call.1} parent=83 // pred_check
          %p3183 = pneg %p203
        $region86: #{tpu_custom_call.1} parent=83 // pred_check_branch
          %3185 = sbr.rel (%p3183) target = $region88
        $region87: #{tpu_custom_call.1} parent=83 // pred_region
          %s3186 = sand.u32 %s188, 1
          %s3187 = scalar_lea.sflag [#allocation8], %s3186
          %s3188 = sand.u32 %s188, 1
          %s3189 = smul.addr %s3188, 32
          %s3190 = scalar_lea.vmem [#allocation18], %s3189
          %3191 = dma.done %s3187, 512
        $region88: #{tpu_custom_call.1} parent=83 // pred_fallthru
          _
      $region84: #{tpu_custom_call.1} parent=5 // pred_fallthru
        _
    $region6: #{tpu_custom_call.1} parent=1 // loop_footer
      %s26 = sadd.s32 1, %s22
    $region7: #{tpu_custom_call.1} parent=1 // loop_footer_branch
      %21 = sbr.rel target = $region3
    $region8: #{tpu_custom_call.1} parent=1 // loop_exit
      _
    %3192 = vsyncpa [#allocation7], 1
    %s3193 = scalar_lea.sflag [#allocation7], 1
    %3194 = vsyncpa %s3193, 1
    %3195 = vsyncpa [#allocation10], 1
    %3196 = vsyncpa [#allocation13], 1
    %3197 = vsyncpa [#allocation16], 1
    %3198 = vsyncpa [#allocation8], 1
    %s3199 = scalar_lea.sflag [#allocation8], 1
    %3200 = vsyncpa %s3199, 1

</llo_original>
